<compile_context>
chip_gen: v7x
topology: tpu7x:2x2x1
jax: 0.10.0
libtpu: 0.0.40
codegen_flags: <defaults>
</compile_context>

<pallas_src>
import functools

import jax
import jax.numpy as jnp
from jax import lax
from jax.experimental import pallas as pl
from jax.experimental.pallas import tpu as pltpu

BN_EPS = 1e-5
_VMEM_LIMIT = 48 * 1024 * 1024  # explicit headroom; safe on v5e/v6e/v7x
_VMEM = pl.BlockSpec(memory_space=pltpu.MemorySpace.VMEM)


# ----------------------------------------------------------------------------
# Tile selection helpers (exact divisors only -> no ragged blocks)
# ----------------------------------------------------------------------------

def _pick_tile(dim, candidates):
    for c in candidates:
        if c <= dim and dim % c == 0:
            return c
    return dim  # full-dim block (always legal)


_TM_CAND = (512, 256, 128, 64, 32, 16, 8)   # sublane dim: multiples of 8
_TN_CAND = (256, 128)                       # lane dim: multiples of 128
_TK_CAND = (512, 256, 128)                  # lane/sublane dim of x / w


# ----------------------------------------------------------------------------
# Pallas kernels
# ----------------------------------------------------------------------------

def _mm_kernel(x_ref, w_ref, b_ref, *refs, relu, n_k, with_stats):
    """Tiled matmul + bias (+ReLU) (+per-column sum / sum^2 for BatchNorm)."""
    if with_stats:
        o_ref, sum_ref, sq_ref, acc_ref = refs
    else:
        o_ref, acc_ref = refs
    i = pl.program_id(1)   # M-tile index
    k = pl.program_id(2)   # K-tile index (reduction, innermost)

    @pl.when(k == 0)
    def _():
        acc_ref[...] = jnp.zeros_like(acc_ref)

    acc_ref[...] += jnp.dot(x_ref[...], w_ref[...],
                            preferred_element_type=jnp.float32)

    @pl.when(k == n_k - 1)
    def _():
        y = acc_ref[...] + b_ref[...]
        if relu:
            y = jnp.maximum(y, 0.0)
        o_ref[...] = y.astype(o_ref.dtype)
        if with_stats:
            s0 = jnp.sum(y, axis=0, keepdims=True)
            s1 = jnp.sum(y * y, axis=0, keepdims=True)
            # stats blocks stay resident across the whole M/K sweep of this
            # N-tile (same block index), so accumulate in place.
            sum_ref[...] = jnp.where(i == 0, s0, sum_ref[...] + s0)
            sq_ref[...] = jnp.where(i == 0, s1, sq_ref[...] + s1)


def _bn_kernel(y_ref, sum_ref, sq_ref, o_ref, *, inv_m, eps):
    """Apply training-mode BatchNorm from precomputed column sums."""
    mean = sum_ref[...] * inv_m                       # (1, TN)
    var = sq_ref[...] * inv_m - mean * mean           # biased variance
    o_ref[...] = (y_ref[...] - mean) * lax.rsqrt(var + eps)


def _bottleneck_kernel(h_ref, wmu_ref, bmu_ref, wlv_ref, blv_ref, eps_ref,
                       mu_ref, lv_ref, z_ref):
    """AdaptiveAvgPool1d(1) + linear_mu + linear_logvar + reparameterize."""
    pooled = jnp.mean(h_ref[...], axis=1)                             # (B, C)
    pooled_b = pooled.astype(jnp.bfloat16)
    mu = jnp.dot(pooled_b, wmu_ref[...],
                 preferred_element_type=jnp.float32) + bmu_ref[...]
    lv = jnp.dot(pooled_b, wlv_ref[...],
                 preferred_element_type=jnp.float32) + blv_ref[...]
    mu_ref[...] = mu
    lv_ref[...] = lv
    z_ref[...] = eps_ref[...] * jnp.exp(0.5 * lv) + mu


# ----------------------------------------------------------------------------
# Kernel wrappers
# ----------------------------------------------------------------------------

def fused_matmul(x, w, b, *, relu=False, with_stats=False):
    """y = x @ w + b (+ReLU) (+column sum/sum^2).  x:(M,K), w:(K,N), b:(N,)."""
    M, K = x.shape
    _, N = w.shape
    TM = _pick_tile(M, _TM_CAND)
    TN = _pick_tile(N, _TN_CAND)
    TK = _pick_tile(K, _TK_CAND)
    n_i, n_j, n_k = M // TM, N // TN, K // TK

    xb = x.astype(jnp.bfloat16)
    wb = w.astype(jnp.bfloat16)
    b2 = b.reshape(1, N).astype(jnp.float32)

    if with_stats:
        out_shape = (jax.ShapeDtypeStruct((M, N), jnp.float32),
                     jax.ShapeDtypeStruct((1, N), jnp.float32),
                     jax.ShapeDtypeStruct((1, N), jnp.float32))
        out_specs = (pl.BlockSpec((TM, TN), lambda j, i, k: (i, j)),
                     pl.BlockSpec((1, TN), lambda j, i, k: (0, j)),
                     pl.BlockSpec((1, TN), lambda j, i, k: (0, j)))
        # stats reduce over the M grid axis -> it must be "arbitrary"
        dim_sem = ("parallel", "arbitrary", "arbitrary")
    else:
        out_shape = jax.ShapeDtypeStruct((M, N), jnp.float32)
        out_specs = pl.BlockSpec((TM, TN), lambda j, i, k: (i, j))
        dim_sem = ("parallel", "parallel", "arbitrary")

    kernel = functools.partial(_mm_kernel, relu=relu, n_k=n_k,
                               with_stats=with_stats)
    cost = pl.CostEstimate(
        flops=2 * M * N * K,
        transcendentals=0,
        bytes_accessed=M * K * 2 + K * N * 2 + M * N * 4)

    return pl.pallas_call(
        kernel,
        out_shape=out_shape,
        grid_spec=pltpu.PrefetchScalarGridSpec(
            num_scalar_prefetch=0,
            grid=(n_j, n_i, n_k),
            in_specs=[
                pl.BlockSpec((TM, TK), lambda j, i, k: (i, k)),
                pl.BlockSpec((TK, TN), lambda j, i, k: (k, j)),
                pl.BlockSpec((1, TN), lambda j, i, k: (0, j)),
            ],
            out_specs=out_specs,
            scratch_shapes=[pltpu.VMEM((TM, TN), jnp.float32)],
        ),
        compiler_params=pltpu.CompilerParams(
            dimension_semantics=dim_sem,
            vmem_limit_bytes=_VMEM_LIMIT),
        cost_estimate=cost,
    )(xb, wb, b2)


def bn_apply(y, s_sum, s_sq):
    """Tiled elementwise (y - mean) * rsqrt(var + eps) from column sums."""
    M, N = y.shape
    TM = _pick_tile(M, _TM_CAND)
    TN = _pick_tile(N, (512, 256, 128))
    kernel = functools.partial(_bn_kernel, inv_m=1.0 / float(M), eps=BN_EPS)
    return pl.pallas_call(
        kernel,
        out_shape=jax.ShapeDtypeStruct((M, N), jnp.float32),
        grid_spec=pltpu.PrefetchScalarGridSpec(
            num_scalar_prefetch=0,
            grid=(M // TM, N // TN),
            in_specs=[pl.BlockSpec((TM, TN), lambda i, j: (i, j)),
                      pl.BlockSpec((1, TN), lambda i, j: (0, j)),
                      pl.BlockSpec((1, TN), lambda i, j: (0, j))],
            out_specs=pl.BlockSpec((TM, TN), lambda i, j: (i, j))),
        compiler_params=pltpu.CompilerParams(
            dimension_semantics=("parallel", "parallel"),
            vmem_limit_bytes=_VMEM_LIMIT),
    )(y, s_sum, s_sq)


def bottleneck(h, lin_mu, lin_logvar, eps):
    """Fused pool + linear_mu + linear_logvar + reparameterize.  h:(B,L,C)."""
    B, _, C = h.shape
    w_mu, b_mu = lin_mu
    w_lv, b_lv = lin_logvar
    out_shape = (jax.ShapeDtypeStruct((B, C), jnp.float32),
                 jax.ShapeDtypeStruct((B, C), jnp.float32),
                 jax.ShapeDtypeStruct((B, C), jnp.float32))
    return pl.pallas_call(
        _bottleneck_kernel,
        out_shape=out_shape,
        in_specs=[_VMEM] * 6,
        out_specs=(_VMEM, _VMEM, _VMEM),
        compiler_params=pltpu.CompilerParams(vmem_limit_bytes=_VMEM_LIMIT),
    )(h.astype(jnp.float32),
      w_mu.T.astype(jnp.bfloat16), b_mu.reshape(1, C).astype(jnp.float32),
      w_lv.T.astype(jnp.bfloat16), b_lv.reshape(1, C).astype(jnp.float32),
      eps.astype(jnp.float32))


# ----------------------------------------------------------------------------
# Conv glue (channels-last layout, im2col feeding the tiled matmul)
# ----------------------------------------------------------------------------

def _im2col_nlc(x, K, stride, padding):
    """x:(B,L,C) channels-last -> (B*L_out, K*C), columns tap-major."""
    B, L, C = x.shape
    xp = jnp.pad(x, ((0, 0), (padding, padding), (0, 0)))
    L_out = (L + 2 * padding - K) // stride + 1
    cols = jnp.concatenate(
        [xp[:, k:k + stride * (L_out - 1) + 1:stride, :] for k in range(K)],
        axis=-1)                                       # (B, L_out, K*C)
    return cols.reshape(B * L_out, K * C), L_out


def conv1d_nlc(h, w, b, *, stride=1, padding=0, relu=False, bn=False):
    """PyTorch Conv1d, channels-last.  h:(B,L,Cin), w:(Cout,Cin,K), b:(Cout,)."""
    B, _, C_in = h.shape
    C_out, _, K = w.shape
    cols, L_out = _im2col_nlc(h, K, stride, padding)
    w_mat = jnp.transpose(w, (2, 1, 0)).reshape(K * C_in, C_out)
    if bn:
        y, s_sum, s_sq = fused_matmul(cols, w_mat, b, relu=relu,
                                      with_stats=True)
        y = bn_apply(y, s_sum, s_sq)
    else:
        y = fused_matmul(cols, w_mat, b, relu=relu, with_stats=False)
    return y.reshape(B, L_out, C_out)


def conv_transpose1d_nlc(h, w, b):
    """PyTorch ConvTranspose1d(Cin, Cout, 4, stride=2, padding=1) via a
    polyphase decomposition.  h:(B,L,Cin), w:(Cin,Cout,4), b:(Cout,).

      out[2m]   = x[m-1] . w[:,:,3] + x[m] . w[:,:,1] + b
      out[2m+1] = x[m]   . w[:,:,2] + x[m+1] . w[:,:,0] + b
    """
    B, L, C_in = h.shape
    _, C_out, K = w.shape
    assert K == 4
    hp = jnp.pad(h, ((0, 0), (1, 1), (0, 0)))                   # (B, L+2, Cin)
    # row r holds taps [x[r-1], x[r]] for r = 0..L
    cols = jnp.concatenate([hp[:, :L + 1, :], hp[:, 1:L + 2, :]], axis=-1)
    w_even = jnp.concatenate([w[:, :, 3], w[:, :, 1]], axis=0)  # (2Cin, Cout)
    w_odd = jnp.concatenate([w[:, :, 2], w[:, :, 0]], axis=0)   # (2Cin, Cout)
    w_cat = jnp.concatenate([w_even, w_odd], axis=1)            # (2Cin, 2Cout)
    b_cat = jnp.concatenate([b, b])
    y = fused_matmul(cols.reshape(B * (L + 1), 2 * C_in), w_cat, b_cat)
    y = y.reshape(B, L + 1, 2 * C_out)
    even = y[:, :L, :C_out]        # -> out[2m]
    odd = y[:, 1:, C_out:]         # -> out[2m+1]
    return jnp.stack([even, odd], axis=2).reshape(B, 2 * L, C_out)


def conv1x1_lanedense(h, w, b):
    """Final 1x1 conv with C_out zero-padded to a lane-dense width."""
    B, L, C_in = h.shape
    C_out = w.shape[0]
    n_pad = ((C_out + 127) // 128) * 128
    w_mat = jnp.transpose(w[:, :, 0], (1, 0))                   # (Cin, Cout)
    w_pad = jnp.zeros((C_in, n_pad), jnp.float32).at[:, :C_out].set(w_mat)
    b_pad = jnp.zeros((n_pad,), jnp.float32).at[:C_out].set(b)
    y = fused_matmul(h.reshape(B * L, C_in), w_pad, b_pad)
    return y[:, :C_out].reshape(B, L, C_out)


# ----------------------------------------------------------------------------
# Deterministic parameter init (PyTorch-style uniform, synthetic weights)
# ----------------------------------------------------------------------------

def _init_conv(key, c_out, c_in, k):
    k1, k2 = jax.random.split(key)
    bound = 1.0 / float(jnp.sqrt(c_in * k))
    w = jax.random.uniform(k1, (c_out, c_in, k), jnp.float32, -bound, bound)
    b = jax.random.uniform(k2, (c_out,), jnp.float32, -bound, bound)
    return w, b


def _init_convT(key, c_in, c_out, k):
    k1, k2 = jax.random.split(key)
    bound = 1.0 / float(jnp.sqrt(c_in * k))
    w = jax.random.uniform(k1, (c_in, c_out, k), jnp.float32, -bound, bound)
    b = jax.random.uniform(k2, (c_out,), jnp.float32, -bound, bound)
    return w, b


def _init_linear(key, f_out, f_in):
    k1, k2 = jax.random.split(key)
    bound = 1.0 / float(jnp.sqrt(f_in))
    w = jax.random.uniform(k1, (f_out, f_in), jnp.float32, -bound, bound)
    b = jax.random.uniform(k2, (f_out,), jnp.float32, -bound, bound)
    return w, b


def init_vaenet(key, in_dim, n_dim=64, n_layer=5):
    keys = iter(jax.random.split(key, 8 * n_layer + 8))
    params = {}
    cin, cout = in_dim, n_dim
    params["conv_00"] = _init_conv(next(keys), cout, cin, 3)
    params["down"] = []
    for _ in range(n_layer):
        cin, cout = cout, cout * 2
        params["down"].append({
            "conv_00": _init_conv(next(keys), cout, cin, 3),
            "conv_01": _init_conv(next(keys), cout, cout, 3),
            "transform": _init_conv(next(keys), cout, cout, 4),
        })
    params["linear_mu"] = _init_linear(next(keys), cout, cout)
    params["linear_logvar"] = _init_linear(next(keys), cout, cout)
    params["up"] = []
    for _ in range(n_layer):
        cin, cout = cout, cout // 2
        params["up"].append({
            "conv_00": _init_conv(next(keys), cout, cin, 3),
            "conv_01": _init_conv(next(keys), cout, cout, 3),
            "transform": _init_convT(next(keys), cout, cout, 4),
        })
    params["conv_01"] = _init_conv(next(keys), in_dim, cout, 1)
    return params


# ----------------------------------------------------------------------------
# VAENet forward (spec order: Conv -> ReLU -> BN inside every Block)
# ----------------------------------------------------------------------------

def vaenet_forward(params, x, eps_key):
    B, _, L = x.shape
    h = jnp.transpose(x, (0, 2, 1)).astype(jnp.float32)   # NCL -> NLC, once
    # ---- encode ----
    h = conv1d_nlc(h, *params["conv_00"], stride=1, padding=1)
    for blk in params["down"]:
        h = conv1d_nlc(h, *blk["conv_00"], stride=1, padding=1,
                       relu=True, bn=True)
        h = conv1d_nlc(h, *blk["conv_01"], stride=1, padding=1,
                       relu=True, bn=True)
        h = conv1d_nlc(h, *blk["transform"], stride=2, padding=1)
    h_len = h.shape[1]
    latent = h.shape[2]
    # ---- bottleneck: pool + mu/logvar linears + reparameterize (fused) ----
    eps = jax.random.normal(eps_key, (B, latent), jnp.float32)
    h_mu, h_logvar, z = bottleneck(h, params["linear_mu"],
                                   params["linear_logvar"], eps)
    # ---- decode ----
    # Upsample(size=h_len), nearest: broadcast the single latent row.
    h = jnp.broadcast_to(z[:, None, :], (B, h_len, latent))
    for blk in params["up"]:
        h = conv1d_nlc(h, *blk["conv_00"], stride=1, padding=1,
                       relu=True, bn=True)
        h = conv1d_nlc(h, *blk["conv_01"], stride=1, padding=1,
                       relu=True, bn=True)
        h = conv_transpose1d_nlc(h, *blk["transform"])
    x_hat = conv1x1_lanedense(h, *params["conv_01"])
    return jnp.transpose(x_hat, (0, 2, 1)), h_mu, h_logvar   # NLC -> NCL, once


# ----------------------------------------------------------------------------

if __name__ == "__main__":
    key = jax.random.PRNGKey(0)
    k_params, k_x, k_eps = jax.random.split(key, 3)

    # small but consistent config: Conv1d input is (batch, in_dim, length)
    in_dim, n_dim, n_layer = 4, 8, 2
    B, L = 2, 16

    params = init_vaenet(k_params, in_dim, n_dim=n_dim, n_layer=n_layer)
    x = jax.random.normal(k_x, (B, in_dim, L), jnp.float32)

    fwd = jax.jit(vaenet_forward)
    x_hat, h_mu, h_logvar = fwd(params, x, k_eps)
    jax.block_until_ready((x_hat, h_mu, h_logvar))

    latent = n_dim * (2 ** n_layer)
    assert x_hat.shape == (B, in_dim, L), x_hat.shape
    assert h_mu.shape == (B, latent), h_mu.shape
    assert h_logvar.shape == (B, latent), h_logvar.shape
    assert bool(jnp.all(jnp.isfinite(x_hat)))
    assert bool(jnp.all(jnp.isfinite(h_mu)))
    assert bool(jnp.all(jnp.isfinite(h_logvar)))
    print("KERNEL_OK")
</pallas_src>

<mosaic_0001>
module attributes {stable_mosaic.version = 11 : i64} {
  func.func @_mm_kernel(%arg0: i32, %arg1: i32, %arg2: i32, %arg3: memref<32x12xbf16, #tpu.memory_space<vmem>>, %arg4: memref<12x8xbf16, #tpu.memory_space<vmem>>, %arg5: memref<1x8xf32, #tpu.memory_space<vmem>>, %arg6: memref<32x8xf32, #tpu.memory_space<vmem>>, %arg7: memref<32x8xf32, #tpu.memory_space<vmem>>) attributes {dimension_semantics = [#tpu.dimension_semantics<parallel>, #tpu.dimension_semantics<parallel>, #tpu.dimension_semantics<arbitrary>], iteration_bounds = array<i64: 1, 1, 1>, scalar_prefetch = 0 : i64, scratch_operands = 1 : i64, tpu.core_type = #tpu.core_type<tc>, window_params = [{transform_indices = @transform_0, window_bounds = array<i64: 32, 12>}, {transform_indices = @transform_1, window_bounds = array<i64: 12, 8>}, {transform_indices = @transform_2, window_bounds = array<i64: 1, 8>}, {transform_indices = @transform_3, window_bounds = array<i64: 32, 8>}]} {
    %c0_i32 = arith.constant 0 : i32
    %0 = arith.cmpi eq, %arg2, %c0_i32 : i32
    %1 = arith.extui %0 : i1 to i32
    %c0_i32_0 = arith.constant 0 : i32
    %2 = arith.cmpi ne, %1, %c0_i32_0 : i32
    scf.if %2 {
      %cst_10 = arith.constant 0.000000e+00 : f32
      %12 = vector.broadcast %cst_10 : f32 to vector<32x8xf32>
      %c0_11 = arith.constant 0 : index
      %c0_12 = arith.constant 0 : index
      %13 = vector.load %arg7[%c0_11, %c0_12] : memref<32x8xf32, #tpu.memory_space<vmem>>, vector<32x8xf32>
      tpu.vector_store %arg7[%c0_11, %c0_12], %12 {strides = array<i32>} : memref<32x8xf32, #tpu.memory_space<vmem>>, vector<32x8xf32>,
    } else {
    }
    %c0 = arith.constant 0 : index
    %c0_1 = arith.constant 0 : index
    %3 = vector.load %arg7[%c0, %c0_1] : memref<32x8xf32, #tpu.memory_space<vmem>>, vector<32x8xf32>
    %c0_2 = arith.constant 0 : index
    %c0_3 = arith.constant 0 : index
    %4 = vector.load %arg3[%c0_2, %c0_3] : memref<32x12xbf16, #tpu.memory_space<vmem>>, vector<32x12xbf16>
    %c0_4 = arith.constant 0 : index
    %c0_5 = arith.constant 0 : index
    %5 = vector.load %arg4[%c0_4, %c0_5] : memref<12x8xbf16, #tpu.memory_space<vmem>>, vector<12x8xbf16>
    %cst = arith.constant dense<0.000000e+00> : vector<32x8xf32>
    %6 = tpu.matmul %4, %5, %cst {dimension_numbers = #tpu.dot_dimension_numbers<[1], [0], [0], [1], [0, 0, 1, 1], [], []>} : vector<32x12xbf16>, vector<12x8xbf16>, vector<32x8xf32> -> vector<32x8xf32>
    %7 = arith.addf %3, %6 : vector<32x8xf32>
    %c0_6 = arith.constant 0 : index
    %c0_7 = arith.constant 0 : index
    %8 = vector.load %arg7[%c0_6, %c0_7] : memref<32x8xf32, #tpu.memory_space<vmem>>, vector<32x8xf32>
    tpu.vector_store %arg7[%c0_6, %c0_7], %7 {strides = array<i32>} : memref<32x8xf32, #tpu.memory_space<vmem>>, vector<32x8xf32>,
    %c0_i32_8 = arith.constant 0 : i32
    %9 = arith.cmpi eq, %arg2, %c0_i32_8 : i32
    %10 = arith.extui %9 : i1 to i32
    %c0_i32_9 = arith.constant 0 : i32
    %11 = arith.cmpi ne, %10, %c0_i32_9 : i32
    scf.if %11 {
      %c0_10 = arith.constant 0 : index
      %c0_11 = arith.constant 0 : index
      %12 = vector.load %arg7[%c0_10, %c0_11] : memref<32x8xf32, #tpu.memory_space<vmem>>, vector<32x8xf32>
      %c0_12 = arith.constant 0 : index
      %c0_13 = arith.constant 0 : index
      %13 = vector.load %arg5[%c0_12, %c0_13] : memref<1x8xf32, #tpu.memory_space<vmem>>, vector<1x8xf32>
      %14 = vector.broadcast %13 : vector<1x8xf32> to vector<32x8xf32>
      %15 = arith.addf %12, %14 : vector<32x8xf32>
      %c0_14 = arith.constant 0 : index
      %c0_15 = arith.constant 0 : index
      %16 = vector.load %arg6[%c0_14, %c0_15] : memref<32x8xf32, #tpu.memory_space<vmem>>, vector<32x8xf32>
      tpu.vector_store %arg6[%c0_14, %c0_15], %15 {strides = array<i32>} : memref<32x8xf32, #tpu.memory_space<vmem>>, vector<32x8xf32>,
    } else {
    }
    return
  }
  func.func @transform_0(%arg0: i32, %arg1: i32, %arg2: i32) -> (i32, i32) {
    %c0_i32 = arith.constant 0 : i32
    return %arg1, %arg2 : i32, i32
  }
  func.func @transform_1(%arg0: i32, %arg1: i32, %arg2: i32) -> (i32, i32) {
    %c0_i32 = arith.constant 0 : i32
    return %arg2, %arg0 : i32, i32
  }
  func.func @transform_2(%arg0: i32, %arg1: i32, %arg2: i32) -> (i32, i32) {
    %c0_i32 = arith.constant 0 : i32
    %c0_i32_0 = arith.constant 0 : i32
    return %c0_i32, %arg0 : i32, i32
  }
  func.func @transform_3(%arg0: i32, %arg1: i32, %arg2: i32) -> (i32, i32) {
    %c0_i32 = arith.constant 0 : i32
    return %arg1, %arg0 : i32, i32
  }
}

module attributes {stable_mosaic.version = 11 : i64} {
  func.func @_bn_kernel(%arg0: i32, %arg1: i32, %arg2: memref<32x16xf32, #tpu.memory_space<vmem>>, %arg3: memref<1x16xf32, #tpu.memory_space<vmem>>, %arg4: memref<1x16xf32, #tpu.memory_space<vmem>>, %arg5: memref<32x16xf32, #tpu.memory_space<vmem>>) attributes {dimension_semantics = [#tpu.dimension_semantics<parallel>, #tpu.dimension_semantics<parallel>], iteration_bounds = array<i64: 1, 1>, scalar_prefetch = 0 : i64, scratch_operands = 0 : i64, tpu.core_type = #tpu.core_type<tc>, window_params = [{transform_indices = @transform_0, window_bounds = array<i64: 32, 16>}, {transform_indices = @transform_1, window_bounds = array<i64: 1, 16>}, {transform_indices = @transform_2, window_bounds = array<i64: 1, 16>}, {transform_indices = @transform_3, window_bounds = array<i64: 32, 16>}]} {
    %c0 = arith.constant 0 : index
    %c0_0 = arith.constant 0 : index
    %0 = vector.load %arg3[%c0, %c0_0] : memref<1x16xf32, #tpu.memory_space<vmem>>, vector<1x16xf32>
    %cst = arith.constant 3.125000e-02 : f32
    %1 = vector.broadcast %cst : f32 to vector<1x16xf32>
    %2 = arith.mulf %0, %1 : vector<1x16xf32>
    %c0_1 = arith.constant 0 : index
    %c0_2 = arith.constant 0 : index
    %3 = vector.load %arg4[%c0_1, %c0_2] : memref<1x16xf32, #tpu.memory_space<vmem>>, vector<1x16xf32>
    %cst_3 = arith.constant 3.125000e-02 : f32
    %4 = vector.broadcast %cst_3 : f32 to vector<1x16xf32>
    %5 = arith.mulf %3, %4 : vector<1x16xf32>
    %6 = arith.mulf %2, %2 : vector<1x16xf32>
    %7 = arith.subf %5, %6 : vector<1x16xf32>
    %c0_4 = arith.constant 0 : index
    %c0_5 = arith.constant 0 : index
    %8 = vector.load %arg2[%c0_4, %c0_5] : memref<32x16xf32, #tpu.memory_space<vmem>>, vector<32x16xf32>
    %9 = vector.broadcast %2 : vector<1x16xf32> to vector<32x16xf32>
    %10 = arith.subf %8, %9 : vector<32x16xf32>
    %cst_6 = arith.constant 9.99999974E-6 : f32
    %11 = vector.broadcast %cst_6 : f32 to vector<1x16xf32>
    %12 = arith.addf %7, %11 : vector<1x16xf32>
    %13 = math.rsqrt %12 : vector<1x16xf32>
    %14 = vector.broadcast %13 : vector<1x16xf32> to vector<32x16xf32>
    %15 = arith.mulf %10, %14 : vector<32x16xf32>
    %c0_7 = arith.constant 0 : index
    %c0_8 = arith.constant 0 : index
    %16 = vector.load %arg5[%c0_7, %c0_8] : memref<32x16xf32, #tpu.memory_space<vmem>>, vector<32x16xf32>
    tpu.vector_store %arg5[%c0_7, %c0_8], %15 {strides = array<i32>} : memref<32x16xf32, #tpu.memory_space<vmem>>, vector<32x16xf32>,
    return
  }
  func.func @transform_0(%arg0: i32, %arg1: i32) -> (i32, i32) {
    %c0_i32 = arith.constant 0 : i32
    return %arg0, %arg1 : i32, i32
  }
  func.func @transform_1(%arg0: i32, %arg1: i32) -> (i32, i32) {
    %c0_i32 = arith.constant 0 : i32
    %c0_i32_0 = arith.constant 0 : i32
    return %c0_i32, %arg1 : i32, i32
  }
  func.func @transform_2(%arg0: i32, %arg1: i32) -> (i32, i32) {
    %c0_i32 = arith.constant 0 : i32
    %c0_i32_0 = arith.constant 0 : i32
    return %c0_i32, %arg1 : i32, i32
  }
  func.func @transform_3(%arg0: i32, %arg1: i32) -> (i32, i32) {
    %c0_i32 = arith.constant 0 : i32
    return %arg0, %arg1 : i32, i32
  }
}

module attributes {stable_mosaic.version = 11 : i64} {
  func.func @_mm_kernel(%arg0: i32, %arg1: i32, %arg2: i32, %arg3: memref<32x24xbf16, #tpu.memory_space<vmem>>, %arg4: memref<24x16xbf16, #tpu.memory_space<vmem>>, %arg5: memref<1x16xf32, #tpu.memory_space<vmem>>, %arg6: memref<32x16xf32, #tpu.memory_space<vmem>>, %arg7: memref<1x16xf32, #tpu.memory_space<vmem>>, %arg8: memref<1x16xf32, #tpu.memory_space<vmem>>, %arg9: memref<32x16xf32, #tpu.memory_space<vmem>>) attributes {dimension_semantics = [#tpu.dimension_semantics<parallel>, #tpu.dimension_semantics<arbitrary>, #tpu.dimension_semantics<arbitrary>], iteration_bounds = array<i64: 1, 1, 1>, scalar_prefetch = 0 : i64, scratch_operands = 1 : i64, tpu.core_type = #tpu.core_type<tc>, window_params = [{transform_indices = @transform_0, window_bounds = array<i64: 32, 24>}, {transform_indices = @transform_1, window_bounds = array<i64: 24, 16>}, {transform_indices = @transform_2, window_bounds = array<i64: 1, 16>}, {transform_indices = @transform_3, window_bounds = array<i64: 32, 16>}, {transform_indices = @transform_4, window_bounds = array<i64: 1, 16>}, {transform_indices = @transform_5, window_bounds = array<i64: 1, 16>}]} {
    %c0_i32 = arith.constant 0 : i32
    %0 = arith.cmpi eq, %arg2, %c0_i32 : i32
    %1 = arith.extui %0 : i1 to i32
    %c0_i32_0 = arith.constant 0 : i32
    %2 = arith.cmpi ne, %1, %c0_i32_0 : i32
    scf.if %2 {
      %cst_10 = arith.constant 0.000000e+00 : f32
      %12 = vector.broadcast %cst_10 : f32 to vector<32x16xf32>
      %c0_11 = arith.constant 0 : index
      %c0_12 = arith.constant 0 : index
      %13 = vector.load %arg9[%c0_11, %c0_12] : memref<32x16xf32, #tpu.memory_space<vmem>>, vector<32x16xf32>
      tpu.vector_store %arg9[%c0_11, %c0_12], %12 {strides = array<i32>} : memref<32x16xf32, #tpu.memory_space<vmem>>, vector<32x16xf32>,
    } else {
    }
    %c0 = arith.constant 0 : index
    %c0_1 = arith.constant 0 : index
    %3 = vector.load %arg9[%c0, %c0_1] : memref<32x16xf32, #tpu.memory_space<vmem>>, vector<32x16xf32>
    %c0_2 = arith.constant 0 : index
    %c0_3 = arith.constant 0 : index
    %4 = vector.load %arg3[%c0_2, %c0_3] : memref<32x24xbf16, #tpu.memory_space<vmem>>, vector<32x24xbf16>
    %c0_4 = arith.constant 0 : index
    %c0_5 = arith.constant 0 : index
    %5 = vector.load %arg4[%c0_4, %c0_5] : memref<24x16xbf16, #tpu.memory_space<vmem>>, vector<24x16xbf16>
    %cst = arith.constant dense<0.000000e+00> : vector<32x16xf32>
    %6 = tpu.matmul %4, %5, %cst {dimension_numbers = #tpu.dot_dimension_numbers<[1], [0], [0], [1], [0, 0, 1, 1], [], []>} : vector<32x24xbf16>, vector<24x16xbf16>, vector<32x16xf32> -> vector<32x16xf32>
    %7 = arith.addf %3, %6 : vector<32x16xf32>
    %c0_6 = arith.constant 0 : index
    %c0_7 = arith.constant 0 : index
    %8 = vector.load %arg9[%c0_6, %c0_7] : memref<32x16xf32, #tpu.memory_space<vmem>>, vector<32x16xf32>
    tpu.vector_store %arg9[%c0_6, %c0_7], %7 {strides = array<i32>} : memref<32x16xf32, #tpu.memory_space<vmem>>, vector<32x16xf32>,
    %c0_i32_8 = arith.constant 0 : i32
    %9 = arith.cmpi eq, %arg2, %c0_i32_8 : i32
    %10 = arith.extui %9 : i1 to i32
    %c0_i32_9 = arith.constant 0 : i32
    %11 = arith.cmpi ne, %10, %c0_i32_9 : i32
    scf.if %11 {
      %c0_10 = arith.constant 0 : index
      %c0_11 = arith.constant 0 : index
      %12 = vector.load %arg9[%c0_10, %c0_11] : memref<32x16xf32, #tpu.memory_space<vmem>>, vector<32x16xf32>
      %c0_12 = arith.constant 0 : index
      %c0_13 = arith.constant 0 : index
      %13 = vector.load %arg5[%c0_12, %c0_13] : memref<1x16xf32, #tpu.memory_space<vmem>>, vector<1x16xf32>
      %14 = vector.broadcast %13 : vector<1x16xf32> to vector<32x16xf32>
      %15 = arith.addf %12, %14 : vector<32x16xf32>
      %cst_14 = arith.constant 0.000000e+00 : f32
      %16 = vector.broadcast %cst_14 : f32 to vector<32x16xf32>
      %17 = arith.maximumf %15, %16 : vector<32x16xf32>
      %c0_15 = arith.constant 0 : index
      %c0_16 = arith.constant 0 : index
      %18 = vector.load %arg6[%c0_15, %c0_16] : memref<32x16xf32, #tpu.memory_space<vmem>>, vector<32x16xf32>
      tpu.vector_store %arg6[%c0_15, %c0_16], %17 {strides = array<i32>} : memref<32x16xf32, #tpu.memory_space<vmem>>, vector<32x16xf32>,
      %cst_17 = arith.constant dense<0.000000e+00> : vector<16xf32>
      %19 = vector.multi_reduction <add>, %17, %cst_17 [0] : vector<32x16xf32> to vector<16xf32>
      %20 = vector.shape_cast %19 : vector<16xf32> to vector<1x16xf32>
      %21 = arith.mulf %17, %17 : vector<32x16xf32>
      %cst_18 = arith.constant dense<0.000000e+00> : vector<16xf32>
      %22 = vector.multi_reduction <add>, %21, %cst_18 [0] : vector<32x16xf32> to vector<16xf32>
      %23 = vector.shape_cast %22 : vector<16xf32> to vector<1x16xf32>
      %c0_i32_19 = arith.constant 0 : i32
      %24 = arith.cmpi eq, %arg1, %c0_i32_19 : i32
      %c0_20 = arith.constant 0 : index
      %c0_21 = arith.constant 0 : index
      %25 = vector.load %arg7[%c0_20, %c0_21] : memref<1x16xf32, #tpu.memory_space<vmem>>, vector<1x16xf32>
      %26 = arith.addf %25, %20 : vector<1x16xf32>
      %27 = arith.select %24, %20, %26 : vector<1x16xf32>
      %c0_22 = arith.constant 0 : index
      %c0_23 = arith.constant 0 : index
      %28 = vector.load %arg7[%c0_22, %c0_23] : memref<1x16xf32, #tpu.memory_space<vmem>>, vector<1x16xf32>
      tpu.vector_store %arg7[%c0_22, %c0_23], %27 {strides = array<i32>} : memref<1x16xf32, #tpu.memory_space<vmem>>, vector<1x16xf32>,
      %c0_i32_24 = arith.constant 0 : i32
      %29 = arith.cmpi eq, %arg1, %c0_i32_24 : i32
      %c0_25 = arith.constant 0 : index
      %c0_26 = arith.constant 0 : index
      %30 = vector.load %arg8[%c0_25, %c0_26] : memref<1x16xf32, #tpu.memory_space<vmem>>, vector<1x16xf32>
      %31 = arith.addf %30, %23 : vector<1x16xf32>
      %32 = arith.select %29, %23, %31 : vector<1x16xf32>
      %c0_27 = arith.constant 0 : index
      %c0_28 = arith.constant 0 : index
      %33 = vector.load %arg8[%c0_27, %c0_28] : memref<1x16xf32, #tpu.memory_space<vmem>>, vector<1x16xf32>
      tpu.vector_store %arg8[%c0_27, %c0_28], %32 {strides = array<i32>} : memref<1x16xf32, #tpu.memory_space<vmem>>, vector<1x16xf32>,
    } else {
    }
    return
  }
  func.func @transform_0(%arg0: i32, %arg1: i32, %arg2: i32) -> (i32, i32) {
    %c0_i32 = arith.constant 0 : i32
    return %arg1, %arg2 : i32, i32
  }
  func.func @transform_1(%arg0: i32, %arg1: i32, %arg2: i32) -> (i32, i32) {
    %c0_i32 = arith.constant 0 : i32
    return %arg2, %arg0 : i32, i32
  }
  func.func @transform_2(%arg0: i32, %arg1: i32, %arg2: i32) -> (i32, i32) {
    %c0_i32 = arith.constant 0 : i32
    %c0_i32_0 = arith.constant 0 : i32
    return %c0_i32, %arg0 : i32, i32
  }
  func.func @transform_3(%arg0: i32, %arg1: i32, %arg2: i32) -> (i32, i32) {
    %c0_i32 = arith.constant 0 : i32
    return %arg1, %arg0 : i32, i32
  }
  func.func @transform_4(%arg0: i32, %arg1: i32, %arg2: i32) -> (i32, i32) {
    %c0_i32 = arith.constant 0 : i32
    %c0_i32_0 = arith.constant 0 : i32
    return %c0_i32, %arg0 : i32, i32
  }
  func.func @transform_5(%arg0: i32, %arg1: i32, %arg2: i32) -> (i32, i32) {
    %c0_i32 = arith.constant 0 : i32
    %c0_i32_0 = arith.constant 0 : i32
    return %c0_i32, %arg0 : i32, i32
  }
}

module attributes {stable_mosaic.version = 11 : i64} {
  func.func @_mm_kernel(%arg0: i32, %arg1: i32, %arg2: i32, %arg3: memref<32x48xbf16, #tpu.memory_space<vmem>>, %arg4: memref<48x16xbf16, #tpu.memory_space<vmem>>, %arg5: memref<1x16xf32, #tpu.memory_space<vmem>>, %arg6: memref<32x16xf32, #tpu.memory_space<vmem>>, %arg7: memref<1x16xf32, #tpu.memory_space<vmem>>, %arg8: memref<1x16xf32, #tpu.memory_space<vmem>>, %arg9: memref<32x16xf32, #tpu.memory_space<vmem>>) attributes {dimension_semantics = [#tpu.dimension_semantics<parallel>, #tpu.dimension_semantics<arbitrary>, #tpu.dimension_semantics<arbitrary>], iteration_bounds = array<i64: 1, 1, 1>, scalar_prefetch = 0 : i64, scratch_operands = 1 : i64, tpu.core_type = #tpu.core_type<tc>, window_params = [{transform_indices = @transform_0, window_bounds = array<i64: 32, 48>}, {transform_indices = @transform_1, window_bounds = array<i64: 48, 16>}, {transform_indices = @transform_2, window_bounds = array<i64: 1, 16>}, {transform_indices = @transform_3, window_bounds = array<i64: 32, 16>}, {transform_indices = @transform_4, window_bounds = array<i64: 1, 16>}, {transform_indices = @transform_5, window_bounds = array<i64: 1, 16>}]} {
    %c0_i32 = arith.constant 0 : i32
    %0 = arith.cmpi eq, %arg2, %c0_i32 : i32
    %1 = arith.extui %0 : i1 to i32
    %c0_i32_0 = arith.constant 0 : i32
    %2 = arith.cmpi ne, %1, %c0_i32_0 : i32
    scf.if %2 {
      %cst_10 = arith.constant 0.000000e+00 : f32
      %12 = vector.broadcast %cst_10 : f32 to vector<32x16xf32>
      %c0_11 = arith.constant 0 : index
      %c0_12 = arith.constant 0 : index
      %13 = vector.load %arg9[%c0_11, %c0_12] : memref<32x16xf32, #tpu.memory_space<vmem>>, vector<32x16xf32>
      tpu.vector_store %arg9[%c0_11, %c0_12], %12 {strides = array<i32>} : memref<32x16xf32, #tpu.memory_space<vmem>>, vector<32x16xf32>,
    } else {
    }
    %c0 = arith.constant 0 : index
    %c0_1 = arith.constant 0 : index
    %3 = vector.load %arg9[%c0, %c0_1] : memref<32x16xf32, #tpu.memory_space<vmem>>, vector<32x16xf32>
    %c0_2 = arith.constant 0 : index
    %c0_3 = arith.constant 0 : index
    %4 = vector.load %arg3[%c0_2, %c0_3] : memref<32x48xbf16, #tpu.memory_space<vmem>>, vector<32x48xbf16>
    %c0_4 = arith.constant 0 : index
    %c0_5 = arith.constant 0 : index
    %5 = vector.load %arg4[%c0_4, %c0_5] : memref<48x16xbf16, #tpu.memory_space<vmem>>, vector<48x16xbf16>
    %cst = arith.constant dense<0.000000e+00> : vector<32x16xf32>
    %6 = tpu.matmul %4, %5, %cst {dimension_numbers = #tpu.dot_dimension_numbers<[1], [0], [0], [1], [0, 0, 1, 1], [], []>} : vector<32x48xbf16>, vector<48x16xbf16>, vector<32x16xf32> -> vector<32x16xf32>
    %7 = arith.addf %3, %6 : vector<32x16xf32>
    %c0_6 = arith.constant 0 : index
    %c0_7 = arith.constant 0 : index
    %8 = vector.load %arg9[%c0_6, %c0_7] : memref<32x16xf32, #tpu.memory_space<vmem>>, vector<32x16xf32>
    tpu.vector_store %arg9[%c0_6, %c0_7], %7 {strides = array<i32>} : memref<32x16xf32, #tpu.memory_space<vmem>>, vector<32x16xf32>,
    %c0_i32_8 = arith.constant 0 : i32
    %9 = arith.cmpi eq, %arg2, %c0_i32_8 : i32
    %10 = arith.extui %9 : i1 to i32
    %c0_i32_9 = arith.constant 0 : i32
    %11 = arith.cmpi ne, %10, %c0_i32_9 : i32
    scf.if %11 {
      %c0_10 = arith.constant 0 : index
      %c0_11 = arith.constant 0 : index
      %12 = vector.load %arg9[%c0_10, %c0_11] : memref<32x16xf32, #tpu.memory_space<vmem>>, vector<32x16xf32>
      %c0_12 = arith.constant 0 : index
      %c0_13 = arith.constant 0 : index
      %13 = vector.load %arg5[%c0_12, %c0_13] : memref<1x16xf32, #tpu.memory_space<vmem>>, vector<1x16xf32>
      %14 = vector.broadcast %13 : vector<1x16xf32> to vector<32x16xf32>
      %15 = arith.addf %12, %14 : vector<32x16xf32>
      %cst_14 = arith.constant 0.000000e+00 : f32
      %16 = vector.broadcast %cst_14 : f32 to vector<32x16xf32>
      %17 = arith.maximumf %15, %16 : vector<32x16xf32>
      %c0_15 = arith.constant 0 : index
      %c0_16 = arith.constant 0 : index
      %18 = vector.load %arg6[%c0_15, %c0_16] : memref<32x16xf32, #tpu.memory_space<vmem>>, vector<32x16xf32>
      tpu.vector_store %arg6[%c0_15, %c0_16], %17 {strides = array<i32>} : memref<32x16xf32, #tpu.memory_space<vmem>>, vector<32x16xf32>,
      %cst_17 = arith.constant dense<0.000000e+00> : vector<16xf32>
      %19 = vector.multi_reduction <add>, %17, %cst_17 [0] : vector<32x16xf32> to vector<16xf32>
      %20 = vector.shape_cast %19 : vector<16xf32> to vector<1x16xf32>
      %21 = arith.mulf %17, %17 : vector<32x16xf32>
      %cst_18 = arith.constant dense<0.000000e+00> : vector<16xf32>
      %22 = vector.multi_reduction <add>, %21, %cst_18 [0] : vector<32x16xf32> to vector<16xf32>
      %23 = vector.shape_cast %22 : vector<16xf32> to vector<1x16xf32>
      %c0_i32_19 = arith.constant 0 : i32
      %24 = arith.cmpi eq, %arg1, %c0_i32_19 : i32
      %c0_20 = arith.constant 0 : index
      %c0_21 = arith.constant 0 : index
      %25 = vector.load %arg7[%c0_20, %c0_21] : memref<1x16xf32, #tpu.memory_space<vmem>>, vector<1x16xf32>
      %26 = arith.addf %25, %20 : vector<1x16xf32>
      %27 = arith.select %24, %20, %26 : vector<1x16xf32>
      %c0_22 = arith.constant 0 : index
      %c0_23 = arith.constant 0 : index
      %28 = vector.load %arg7[%c0_22, %c0_23] : memref<1x16xf32, #tpu.memory_space<vmem>>, vector<1x16xf32>
      tpu.vector_store %arg7[%c0_22, %c0_23], %27 {strides = array<i32>} : memref<1x16xf32, #tpu.memory_space<vmem>>, vector<1x16xf32>,
      %c0_i32_24 = arith.constant 0 : i32
      %29 = arith.cmpi eq, %arg1, %c0_i32_24 : i32
      %c0_25 = arith.constant 0 : index
      %c0_26 = arith.constant 0 : index
      %30 = vector.load %arg8[%c0_25, %c0_26] : memref<1x16xf32, #tpu.memory_space<vmem>>, vector<1x16xf32>
      %31 = arith.addf %30, %23 : vector<1x16xf32>
      %32 = arith.select %29, %23, %31 : vector<1x16xf32>
      %c0_27 = arith.constant 0 : index
      %c0_28 = arith.constant 0 : index
      %33 = vector.load %arg8[%c0_27, %c0_28] : memref<1x16xf32, #tpu.memory_space<vmem>>, vector<1x16xf32>
      tpu.vector_store %arg8[%c0_27, %c0_28], %32 {strides = array<i32>} : memref<1x16xf32, #tpu.memory_space<vmem>>, vector<1x16xf32>,
    } else {
    }
    return
  }
  func.func @transform_0(%arg0: i32, %arg1: i32, %arg2: i32) -> (i32, i32) {
    %c0_i32 = arith.constant 0 : i32
    return %arg1, %arg2 : i32, i32
  }
  func.func @transform_1(%arg0: i32, %arg1: i32, %arg2: i32) -> (i32, i32) {
    %c0_i32 = arith.constant 0 : i32
    return %arg2, %arg0 : i32, i32
  }
  func.func @transform_2(%arg0: i32, %arg1: i32, %arg2: i32) -> (i32, i32) {
    %c0_i32 = arith.constant 0 : i32
    %c0_i32_0 = arith.constant 0 : i32
    return %c0_i32, %arg0 : i32, i32
  }
  func.func @transform_3(%arg0: i32, %arg1: i32, %arg2: i32) -> (i32, i32) {
    %c0_i32 = arith.constant 0 : i32
    return %arg1, %arg0 : i32, i32
  }
  func.func @transform_4(%arg0: i32, %arg1: i32, %arg2: i32) -> (i32, i32) {
    %c0_i32 = arith.constant 0 : i32
    %c0_i32_0 = arith.constant 0 : i32
    return %c0_i32, %arg0 : i32, i32
  }
  func.func @transform_5(%arg0: i32, %arg1: i32, %arg2: i32) -> (i32, i32) {
    %c0_i32 = arith.constant 0 : i32
    %c0_i32_0 = arith.constant 0 : i32
    return %c0_i32, %arg0 : i32, i32
  }
}

module attributes {stable_mosaic.version = 11 : i64} {
  func.func @_mm_kernel(%arg0: i32, %arg1: i32, %arg2: i32, %arg3: memref<16x64xbf16, #tpu.memory_space<vmem>>, %arg4: memref<64x16xbf16, #tpu.memory_space<vmem>>, %arg5: memref<1x16xf32, #tpu.memory_space<vmem>>, %arg6: memref<16x16xf32, #tpu.memory_space<vmem>>, %arg7: memref<16x16xf32, #tpu.memory_space<vmem>>) attributes {dimension_semantics = [#tpu.dimension_semantics<parallel>, #tpu.dimension_semantics<parallel>, #tpu.dimension_semantics<arbitrary>], iteration_bounds = array<i64: 1, 1, 1>, scalar_prefetch = 0 : i64, scratch_operands = 1 : i64, tpu.core_type = #tpu.core_type<tc>, window_params = [{transform_indices = @transform_0, window_bounds = array<i64: 16, 64>}, {transform_indices = @transform_1, window_bounds = array<i64: 64, 16>}, {transform_indices = @transform_2, window_bounds = array<i64: 1, 16>}, {transform_indices = @transform_3, window_bounds = array<i64: 16, 16>}]} {
    %c0_i32 = arith.constant 0 : i32
    %0 = arith.cmpi eq, %arg2, %c0_i32 : i32
    %1 = arith.extui %0 : i1 to i32
    %c0_i32_0 = arith.constant 0 : i32
    %2 = arith.cmpi ne, %1, %c0_i32_0 : i32
    scf.if %2 {
      %cst_10 = arith.constant 0.000000e+00 : f32
      %12 = vector.broadcast %cst_10 : f32 to vector<16x16xf32>
      %c0_11 = arith.constant 0 : index
      %c0_12 = arith.constant 0 : index
      %13 = vector.load %arg7[%c0_11, %c0_12] : memref<16x16xf32, #tpu.memory_space<vmem>>, vector<16x16xf32>
      tpu.vector_store %arg7[%c0_11, %c0_12], %12 {strides = array<i32>} : memref<16x16xf32, #tpu.memory_space<vmem>>, vector<16x16xf32>,
    } else {
    }
    %c0 = arith.constant 0 : index
    %c0_1 = arith.constant 0 : index
    %3 = vector.load %arg7[%c0, %c0_1] : memref<16x16xf32, #tpu.memory_space<vmem>>, vector<16x16xf32>
    %c0_2 = arith.constant 0 : index
    %c0_3 = arith.constant 0 : index
    %4 = vector.load %arg3[%c0_2, %c0_3] : memref<16x64xbf16, #tpu.memory_space<vmem>>, vector<16x64xbf16>
    %c0_4 = arith.constant 0 : index
    %c0_5 = arith.constant 0 : index
    %5 = vector.load %arg4[%c0_4, %c0_5] : memref<64x16xbf16, #tpu.memory_space<vmem>>, vector<64x16xbf16>
    %cst = arith.constant dense<0.000000e+00> : vector<16x16xf32>
    %6 = tpu.matmul %4, %5, %cst {dimension_numbers = #tpu.dot_dimension_numbers<[1], [0], [0], [1], [0, 0, 1, 1], [], []>} : vector<16x64xbf16>, vector<64x16xbf16>, vector<16x16xf32> -> vector<16x16xf32>
    %7 = arith.addf %3, %6 : vector<16x16xf32>
    %c0_6 = arith.constant 0 : index
    %c0_7 = arith.constant 0 : index
    %8 = vector.load %arg7[%c0_6, %c0_7] : memref<16x16xf32, #tpu.memory_space<vmem>>, vector<16x16xf32>
    tpu.vector_store %arg7[%c0_6, %c0_7], %7 {strides = array<i32>} : memref<16x16xf32, #tpu.memory_space<vmem>>, vector<16x16xf32>,
    %c0_i32_8 = arith.constant 0 : i32
    %9 = arith.cmpi eq, %arg2, %c0_i32_8 : i32
    %10 = arith.extui %9 : i1 to i32
    %c0_i32_9 = arith.constant 0 : i32
    %11 = arith.cmpi ne, %10, %c0_i32_9 : i32
    scf.if %11 {
      %c0_10 = arith.constant 0 : index
      %c0_11 = arith.constant 0 : index
      %12 = vector.load %arg7[%c0_10, %c0_11] : memref<16x16xf32, #tpu.memory_space<vmem>>, vector<16x16xf32>
      %c0_12 = arith.constant 0 : index
      %c0_13 = arith.constant 0 : index
      %13 = vector.load %arg5[%c0_12, %c0_13] : memref<1x16xf32, #tpu.memory_space<vmem>>, vector<1x16xf32>
      %14 = vector.broadcast %13 : vector<1x16xf32> to vector<16x16xf32>
      %15 = arith.addf %12, %14 : vector<16x16xf32>
      %c0_14 = arith.constant 0 : index
      %c0_15 = arith.constant 0 : index
      %16 = vector.load %arg6[%c0_14, %c0_15] : memref<16x16xf32, #tpu.memory_space<vmem>>, vector<16x16xf32>
      tpu.vector_store %arg6[%c0_14, %c0_15], %15 {strides = array<i32>} : memref<16x16xf32, #tpu.memory_space<vmem>>, vector<16x16xf32>,
    } else {
    }
    return
  }
  func.func @transform_0(%arg0: i32, %arg1: i32, %arg2: i32) -> (i32, i32) {
    %c0_i32 = arith.constant 0 : i32
    return %arg1, %arg2 : i32, i32
  }
  func.func @transform_1(%arg0: i32, %arg1: i32, %arg2: i32) -> (i32, i32) {
    %c0_i32 = arith.constant 0 : i32
    return %arg2, %arg0 : i32, i32
  }
  func.func @transform_2(%arg0: i32, %arg1: i32, %arg2: i32) -> (i32, i32) {
    %c0_i32 = arith.constant 0 : i32
    %c0_i32_0 = arith.constant 0 : i32
    return %c0_i32, %arg0 : i32, i32
  }
  func.func @transform_3(%arg0: i32, %arg1: i32, %arg2: i32) -> (i32, i32) {
    %c0_i32 = arith.constant 0 : i32
    return %arg1, %arg0 : i32, i32
  }
}

module attributes {stable_mosaic.version = 11 : i64} {
  func.func @_mm_kernel(%arg0: i32, %arg1: i32, %arg2: i32, %arg3: memref<16x48xbf16, #tpu.memory_space<vmem>>, %arg4: memref<48x32xbf16, #tpu.memory_space<vmem>>, %arg5: memref<1x32xf32, #tpu.memory_space<vmem>>, %arg6: memref<16x32xf32, #tpu.memory_space<vmem>>, %arg7: memref<1x32xf32, #tpu.memory_space<vmem>>, %arg8: memref<1x32xf32, #tpu.memory_space<vmem>>, %arg9: memref<16x32xf32, #tpu.memory_space<vmem>>) attributes {dimension_semantics = [#tpu.dimension_semantics<parallel>, #tpu.dimension_semantics<arbitrary>, #tpu.dimension_semantics<arbitrary>], iteration_bounds = array<i64: 1, 1, 1>, scalar_prefetch = 0 : i64, scratch_operands = 1 : i64, tpu.core_type = #tpu.core_type<tc>, window_params = [{transform_indices = @transform_0, window_bounds = array<i64: 16, 48>}, {transform_indices = @transform_1, window_bounds = array<i64: 48, 32>}, {transform_indices = @transform_2, window_bounds = array<i64: 1, 32>}, {transform_indices = @transform_3, window_bounds = array<i64: 16, 32>}, {transform_indices = @transform_4, window_bounds = array<i64: 1, 32>}, {transform_indices = @transform_5, window_bounds = array<i64: 1, 32>}]} {
    %c0_i32 = arith.constant 0 : i32
    %0 = arith.cmpi eq, %arg2, %c0_i32 : i32
    %1 = arith.extui %0 : i1 to i32
    %c0_i32_0 = arith.constant 0 : i32
    %2 = arith.cmpi ne, %1, %c0_i32_0 : i32
    scf.if %2 {
      %cst_10 = arith.constant 0.000000e+00 : f32
      %12 = vector.broadcast %cst_10 : f32 to vector<16x32xf32>
      %c0_11 = arith.constant 0 : index
      %c0_12 = arith.constant 0 : index
      %13 = vector.load %arg9[%c0_11, %c0_12] : memref<16x32xf32, #tpu.memory_space<vmem>>, vector<16x32xf32>
      tpu.vector_store %arg9[%c0_11, %c0_12], %12 {strides = array<i32>} : memref<16x32xf32, #tpu.memory_space<vmem>>, vector<16x32xf32>,
    } else {
    }
    %c0 = arith.constant 0 : index
    %c0_1 = arith.constant 0 : index
    %3 = vector.load %arg9[%c0, %c0_1] : memref<16x32xf32, #tpu.memory_space<vmem>>, vector<16x32xf32>
    %c0_2 = arith.constant 0 : index
    %c0_3 = arith.constant 0 : index
    %4 = vector.load %arg3[%c0_2, %c0_3] : memref<16x48xbf16, #tpu.memory_space<vmem>>, vector<16x48xbf16>
    %c0_4 = arith.constant 0 : index
    %c0_5 = arith.constant 0 : index
    %5 = vector.load %arg4[%c0_4, %c0_5] : memref<48x32xbf16, #tpu.memory_space<vmem>>, vector<48x32xbf16>
    %cst = arith.constant dense<0.000000e+00> : vector<16x32xf32>
    %6 = tpu.matmul %4, %5, %cst {dimension_numbers = #tpu.dot_dimension_numbers<[1], [0], [0], [1], [0, 0, 1, 1], [], []>} : vector<16x48xbf16>, vector<48x32xbf16>, vector<16x32xf32> -> vector<16x32xf32>
    %7 = arith.addf %3, %6 : vector<16x32xf32>
    %c0_6 = arith.constant 0 : index
    %c0_7 = arith.constant 0 : index
    %8 = vector.load %arg9[%c0_6, %c0_7] : memref<16x32xf32, #tpu.memory_space<vmem>>, vector<16x32xf32>
    tpu.vector_store %arg9[%c0_6, %c0_7], %7 {strides = array<i32>} : memref<16x32xf32, #tpu.memory_space<vmem>>, vector<16x32xf32>,
    %c0_i32_8 = arith.constant 0 : i32
    %9 = arith.cmpi eq, %arg2, %c0_i32_8 : i32
    %10 = arith.extui %9 : i1 to i32
    %c0_i32_9 = arith.constant 0 : i32
    %11 = arith.cmpi ne, %10, %c0_i32_9 : i32
    scf.if %11 {
      %c0_10 = arith.constant 0 : index
      %c0_11 = arith.constant 0 : index
      %12 = vector.load %arg9[%c0_10, %c0_11] : memref<16x32xf32, #tpu.memory_space<vmem>>, vector<16x32xf32>
      %c0_12 = arith.constant 0 : index
      %c0_13 = arith.constant 0 : index
      %13 = vector.load %arg5[%c0_12, %c0_13] : memref<1x32xf32, #tpu.memory_space<vmem>>, vector<1x32xf32>
      %14 = vector.broadcast %13 : vector<1x32xf32> to vector<16x32xf32>
      %15 = arith.addf %12, %14 : vector<16x32xf32>
      %cst_14 = arith.constant 0.000000e+00 : f32
      %16 = vector.broadcast %cst_14 : f32 to vector<16x32xf32>
      %17 = arith.maximumf %15, %16 : vector<16x32xf32>
      %c0_15 = arith.constant 0 : index
      %c0_16 = arith.constant 0 : index
      %18 = vector.load %arg6[%c0_15, %c0_16] : memref<16x32xf32, #tpu.memory_space<vmem>>, vector<16x32xf32>
      tpu.vector_store %arg6[%c0_15, %c0_16], %17 {strides = array<i32>} : memref<16x32xf32, #tpu.memory_space<vmem>>, vector<16x32xf32>,
      %cst_17 = arith.constant dense<0.000000e+00> : vector<32xf32>
      %19 = vector.multi_reduction <add>, %17, %cst_17 [0] : vector<16x32xf32> to vector<32xf32>
      %20 = vector.shape_cast %19 : vector<32xf32> to vector<1x32xf32>
      %21 = arith.mulf %17, %17 : vector<16x32xf32>
      %cst_18 = arith.constant dense<0.000000e+00> : vector<32xf32>
      %22 = vector.multi_reduction <add>, %21, %cst_18 [0] : vector<16x32xf32> to vector<32xf32>
      %23 = vector.shape_cast %22 : vector<32xf32> to vector<1x32xf32>
      %c0_i32_19 = arith.constant 0 : i32
      %24 = arith.cmpi eq, %arg1, %c0_i32_19 : i32
      %c0_20 = arith.constant 0 : index
      %c0_21 = arith.constant 0 : index
      %25 = vector.load %arg7[%c0_20, %c0_21] : memref<1x32xf32, #tpu.memory_space<vmem>>, vector<1x32xf32>
      %26 = arith.addf %25, %20 : vector<1x32xf32>
      %27 = arith.select %24, %20, %26 : vector<1x32xf32>
      %c0_22 = arith.constant 0 : index
      %c0_23 = arith.constant 0 : index
      %28 = vector.load %arg7[%c0_22, %c0_23] : memref<1x32xf32, #tpu.memory_space<vmem>>, vector<1x32xf32>
      tpu.vector_store %arg7[%c0_22, %c0_23], %27 {strides = array<i32>} : memref<1x32xf32, #tpu.memory_space<vmem>>, vector<1x32xf32>,
      %c0_i32_24 = arith.constant 0 : i32
      %29 = arith.cmpi eq, %arg1, %c0_i32_24 : i32
      %c0_25 = arith.constant 0 : index
      %c0_26 = arith.constant 0 : index
      %30 = vector.load %arg8[%c0_25, %c0_26] : memref<1x32xf32, #tpu.memory_space<vmem>>, vector<1x32xf32>
      %31 = arith.addf %30, %23 : vector<1x32xf32>
      %32 = arith.select %29, %23, %31 : vector<1x32xf32>
      %c0_27 = arith.constant 0 : index
      %c0_28 = arith.constant 0 : index
      %33 = vector.load %arg8[%c0_27, %c0_28] : memref<1x32xf32, #tpu.memory_space<vmem>>, vector<1x32xf32>
      tpu.vector_store %arg8[%c0_27, %c0_28], %32 {strides = array<i32>} : memref<1x32xf32, #tpu.memory_space<vmem>>, vector<1x32xf32>,
    } else {
    }
    return
  }
  func.func @transform_0(%arg0: i32, %arg1: i32, %arg2: i32) -> (i32, i32) {
    %c0_i32 = arith.constant 0 : i32
    return %arg1, %arg2 : i32, i32
  }
  func.func @transform_1(%arg0: i32, %arg1: i32, %arg2: i32) -> (i32, i32) {
    %c0_i32 = arith.constant 0 : i32
    return %arg2, %arg0 : i32, i32
  }
  func.func @transform_2(%arg0: i32, %arg1: i32, %arg2: i32) -> (i32, i32) {
    %c0_i32 = arith.constant 0 : i32
    %c0_i32_0 = arith.constant 0 : i32
    return %c0_i32, %arg0 : i32, i32
  }
  func.func @transform_3(%arg0: i32, %arg1: i32, %arg2: i32) -> (i32, i32) {
    %c0_i32 = arith.constant 0 : i32
    return %arg1, %arg0 : i32, i32
  }
  func.func @transform_4(%arg0: i32, %arg1: i32, %arg2: i32) -> (i32, i32) {
    %c0_i32 = arith.constant 0 : i32
    %c0_i32_0 = arith.constant 0 : i32
    return %c0_i32, %arg0 : i32, i32
  }
  func.func @transform_5(%arg0: i32, %arg1: i32, %arg2: i32) -> (i32, i32) {
    %c0_i32 = arith.constant 0 : i32
    %c0_i32_0 = arith.constant 0 : i32
    return %c0_i32, %arg0 : i32, i32
  }
}

module attributes {stable_mosaic.version = 11 : i64} {
  func.func @_bn_kernel(%arg0: i32, %arg1: i32, %arg2: memref<16x32xf32, #tpu.memory_space<vmem>>, %arg3: memref<1x32xf32, #tpu.memory_space<vmem>>, %arg4: memref<1x32xf32, #tpu.memory_space<vmem>>, %arg5: memref<16x32xf32, #tpu.memory_space<vmem>>) attributes {dimension_semantics = [#tpu.dimension_semantics<parallel>, #tpu.dimension_semantics<parallel>], iteration_bounds = array<i64: 1, 1>, scalar_prefetch = 0 : i64, scratch_operands = 0 : i64, tpu.core_type = #tpu.core_type<tc>, window_params = [{transform_indices = @transform_0, window_bounds = array<i64: 16, 32>}, {transform_indices = @transform_1, window_bounds = array<i64: 1, 32>}, {transform_indices = @transform_2, window_bounds = array<i64: 1, 32>}, {transform_indices = @transform_3, window_bounds = array<i64: 16, 32>}]} {
    %c0 = arith.constant 0 : index
    %c0_0 = arith.constant 0 : index
    %0 = vector.load %arg3[%c0, %c0_0] : memref<1x32xf32, #tpu.memory_space<vmem>>, vector<1x32xf32>
    %cst = arith.constant 6.250000e-02 : f32
    %1 = vector.broadcast %cst : f32 to vector<1x32xf32>
    %2 = arith.mulf %0, %1 : vector<1x32xf32>
    %c0_1 = arith.constant 0 : index
    %c0_2 = arith.constant 0 : index
    %3 = vector.load %arg4[%c0_1, %c0_2] : memref<1x32xf32, #tpu.memory_space<vmem>>, vector<1x32xf32>
    %cst_3 = arith.constant 6.250000e-02 : f32
    %4 = vector.broadcast %cst_3 : f32 to vector<1x32xf32>
    %5 = arith.mulf %3, %4 : vector<1x32xf32>
    %6 = arith.mulf %2, %2 : vector<1x32xf32>
    %7 = arith.subf %5, %6 : vector<1x32xf32>
    %c0_4 = arith.constant 0 : index
    %c0_5 = arith.constant 0 : index
    %8 = vector.load %arg2[%c0_4, %c0_5] : memref<16x32xf32, #tpu.memory_space<vmem>>, vector<16x32xf32>
    %9 = vector.broadcast %2 : vector<1x32xf32> to vector<16x32xf32>
    %10 = arith.subf %8, %9 : vector<16x32xf32>
    %cst_6 = arith.constant 9.99999974E-6 : f32
    %11 = vector.broadcast %cst_6 : f32 to vector<1x32xf32>
    %12 = arith.addf %7, %11 : vector<1x32xf32>
    %13 = math.rsqrt %12 : vector<1x32xf32>
    %14 = vector.broadcast %13 : vector<1x32xf32> to vector<16x32xf32>
    %15 = arith.mulf %10, %14 : vector<16x32xf32>
    %c0_7 = arith.constant 0 : index
    %c0_8 = arith.constant 0 : index
    %16 = vector.load %arg5[%c0_7, %c0_8] : memref<16x32xf32, #tpu.memory_space<vmem>>, vector<16x32xf32>
    tpu.vector_store %arg5[%c0_7, %c0_8], %15 {strides = array<i32>} : memref<16x32xf32, #tpu.memory_space<vmem>>, vector<16x32xf32>,
    return
  }
  func.func @transform_0(%arg0: i32, %arg1: i32) -> (i32, i32) {
    %c0_i32 = arith.constant 0 : i32
    return %arg0, %arg1 : i32, i32
  }
  func.func @transform_1(%arg0: i32, %arg1: i32) -> (i32, i32) {
    %c0_i32 = arith.constant 0 : i32
    %c0_i32_0 = arith.constant 0 : i32
    return %c0_i32, %arg1 : i32, i32
  }
  func.func @transform_2(%arg0: i32, %arg1: i32) -> (i32, i32) {
    %c0_i32 = arith.constant 0 : i32
    %c0_i32_0 = arith.constant 0 : i32
    return %c0_i32, %arg1 : i32, i32
  }
  func.func @transform_3(%arg0: i32, %arg1: i32) -> (i32, i32) {
    %c0_i32 = arith.constant 0 : i32
    return %arg0, %arg1 : i32, i32
  }
}

module attributes {stable_mosaic.version = 11 : i64} {
  func.func @_mm_kernel(%arg0: i32, %arg1: i32, %arg2: i32, %arg3: memref<16x96xbf16, #tpu.memory_space<vmem>>, %arg4: memref<96x32xbf16, #tpu.memory_space<vmem>>, %arg5: memref<1x32xf32, #tpu.memory_space<vmem>>, %arg6: memref<16x32xf32, #tpu.memory_space<vmem>>, %arg7: memref<1x32xf32, #tpu.memory_space<vmem>>, %arg8: memref<1x32xf32, #tpu.memory_space<vmem>>, %arg9: memref<16x32xf32, #tpu.memory_space<vmem>>) attributes {dimension_semantics = [#tpu.dimension_semantics<parallel>, #tpu.dimension_semantics<arbitrary>, #tpu.dimension_semantics<arbitrary>], iteration_bounds = array<i64: 1, 1, 1>, scalar_prefetch = 0 : i64, scratch_operands = 1 : i64, tpu.core_type = #tpu.core_type<tc>, window_params = [{transform_indices = @transform_0, window_bounds = array<i64: 16, 96>}, {transform_indices = @transform_1, window_bounds = array<i64: 96, 32>}, {transform_indices = @transform_2, window_bounds = array<i64: 1, 32>}, {transform_indices = @transform_3, window_bounds = array<i64: 16, 32>}, {transform_indices = @transform_4, window_bounds = array<i64: 1, 32>}, {transform_indices = @transform_5, window_bounds = array<i64: 1, 32>}]} {
    %c0_i32 = arith.constant 0 : i32
    %0 = arith.cmpi eq, %arg2, %c0_i32 : i32
    %1 = arith.extui %0 : i1 to i32
    %c0_i32_0 = arith.constant 0 : i32
    %2 = arith.cmpi ne, %1, %c0_i32_0 : i32
    scf.if %2 {
      %cst_10 = arith.constant 0.000000e+00 : f32
      %12 = vector.broadcast %cst_10 : f32 to vector<16x32xf32>
      %c0_11 = arith.constant 0 : index
      %c0_12 = arith.constant 0 : index
      %13 = vector.load %arg9[%c0_11, %c0_12] : memref<16x32xf32, #tpu.memory_space<vmem>>, vector<16x32xf32>
      tpu.vector_store %arg9[%c0_11, %c0_12], %12 {strides = array<i32>} : memref<16x32xf32, #tpu.memory_space<vmem>>, vector<16x32xf32>,
    } else {
    }
    %c0 = arith.constant 0 : index
    %c0_1 = arith.constant 0 : index
    %3 = vector.load %arg9[%c0, %c0_1] : memref<16x32xf32, #tpu.memory_space<vmem>>, vector<16x32xf32>
    %c0_2 = arith.constant 0 : index
    %c0_3 = arith.constant 0 : index
    %4 = vector.load %arg3[%c0_2, %c0_3] : memref<16x96xbf16, #tpu.memory_space<vmem>>, vector<16x96xbf16>
    %c0_4 = arith.constant 0 : index
    %c0_5 = arith.constant 0 : index
    %5 = vector.load %arg4[%c0_4, %c0_5] : memref<96x32xbf16, #tpu.memory_space<vmem>>, vector<96x32xbf16>
    %cst = arith.constant dense<0.000000e+00> : vector<16x32xf32>
    %6 = tpu.matmul %4, %5, %cst {dimension_numbers = #tpu.dot_dimension_numbers<[1], [0], [0], [1], [0, 0, 1, 1], [], []>} : vector<16x96xbf16>, vector<96x32xbf16>, vector<16x32xf32> -> vector<16x32xf32>
    %7 = arith.addf %3, %6 : vector<16x32xf32>
    %c0_6 = arith.constant 0 : index
    %c0_7 = arith.constant 0 : index
    %8 = vector.load %arg9[%c0_6, %c0_7] : memref<16x32xf32, #tpu.memory_space<vmem>>, vector<16x32xf32>
    tpu.vector_store %arg9[%c0_6, %c0_7], %7 {strides = array<i32>} : memref<16x32xf32, #tpu.memory_space<vmem>>, vector<16x32xf32>,
    %c0_i32_8 = arith.constant 0 : i32
    %9 = arith.cmpi eq, %arg2, %c0_i32_8 : i32
    %10 = arith.extui %9 : i1 to i32
    %c0_i32_9 = arith.constant 0 : i32
    %11 = arith.cmpi ne, %10, %c0_i32_9 : i32
    scf.if %11 {
      %c0_10 = arith.constant 0 : index
      %c0_11 = arith.constant 0 : index
      %12 = vector.load %arg9[%c0_10, %c0_11] : memref<16x32xf32, #tpu.memory_space<vmem>>, vector<16x32xf32>
      %c0_12 = arith.constant 0 : index
      %c0_13 = arith.constant 0 : index
      %13 = vector.load %arg5[%c0_12, %c0_13] : memref<1x32xf32, #tpu.memory_space<vmem>>, vector<1x32xf32>
      %14 = vector.broadcast %13 : vector<1x32xf32> to vector<16x32xf32>
      %15 = arith.addf %12, %14 : vector<16x32xf32>
      %cst_14 = arith.constant 0.000000e+00 : f32
      %16 = vector.broadcast %cst_14 : f32 to vector<16x32xf32>
      %17 = arith.maximumf %15, %16 : vector<16x32xf32>
      %c0_15 = arith.constant 0 : index
      %c0_16 = arith.constant 0 : index
      %18 = vector.load %arg6[%c0_15, %c0_16] : memref<16x32xf32, #tpu.memory_space<vmem>>, vector<16x32xf32>
      tpu.vector_store %arg6[%c0_15, %c0_16], %17 {strides = array<i32>} : memref<16x32xf32, #tpu.memory_space<vmem>>, vector<16x32xf32>,
      %cst_17 = arith.constant dense<0.000000e+00> : vector<32xf32>
      %19 = vector.multi_reduction <add>, %17, %cst_17 [0] : vector<16x32xf32> to vector<32xf32>
      %20 = vector.shape_cast %19 : vector<32xf32> to vector<1x32xf32>
      %21 = arith.mulf %17, %17 : vector<16x32xf32>
      %cst_18 = arith.constant dense<0.000000e+00> : vector<32xf32>
      %22 = vector.multi_reduction <add>, %21, %cst_18 [0] : vector<16x32xf32> to vector<32xf32>
      %23 = vector.shape_cast %22 : vector<32xf32> to vector<1x32xf32>
      %c0_i32_19 = arith.constant 0 : i32
      %24 = arith.cmpi eq, %arg1, %c0_i32_19 : i32
      %c0_20 = arith.constant 0 : index
      %c0_21 = arith.constant 0 : index
      %25 = vector.load %arg7[%c0_20, %c0_21] : memref<1x32xf32, #tpu.memory_space<vmem>>, vector<1x32xf32>
      %26 = arith.addf %25, %20 : vector<1x32xf32>
      %27 = arith.select %24, %20, %26 : vector<1x32xf32>
      %c0_22 = arith.constant 0 : index
      %c0_23 = arith.constant 0 : index
      %28 = vector.load %arg7[%c0_22, %c0_23] : memref<1x32xf32, #tpu.memory_space<vmem>>, vector<1x32xf32>
      tpu.vector_store %arg7[%c0_22, %c0_23], %27 {strides = array<i32>} : memref<1x32xf32, #tpu.memory_space<vmem>>, vector<1x32xf32>,
      %c0_i32_24 = arith.constant 0 : i32
      %29 = arith.cmpi eq, %arg1, %c0_i32_24 : i32
      %c0_25 = arith.constant 0 : index
      %c0_26 = arith.constant 0 : index
      %30 = vector.load %arg8[%c0_25, %c0_26] : memref<1x32xf32, #tpu.memory_space<vmem>>, vector<1x32xf32>
      %31 = arith.addf %30, %23 : vector<1x32xf32>
      %32 = arith.select %29, %23, %31 : vector<1x32xf32>
      %c0_27 = arith.constant 0 : index
      %c0_28 = arith.constant 0 : index
      %33 = vector.load %arg8[%c0_27, %c0_28] : memref<1x32xf32, #tpu.memory_space<vmem>>, vector<1x32xf32>
      tpu.vector_store %arg8[%c0_27, %c0_28], %32 {strides = array<i32>} : memref<1x32xf32, #tpu.memory_space<vmem>>, vector<1x32xf32>,
    } else {
    }
    return
  }
  func.func @transform_0(%arg0: i32, %arg1: i32, %arg2: i32) -> (i32, i32) {
    %c0_i32 = arith.constant 0 : i32
    return %arg1, %arg2 : i32, i32
  }
  func.func @transform_1(%arg0: i32, %arg1: i32, %arg2: i32) -> (i32, i32) {
    %c0_i32 = arith.constant 0 : i32
    return %arg2, %arg0 : i32, i32
  }
  func.func @transform_2(%arg0: i32, %arg1: i32, %arg2: i32) -> (i32, i32) {
    %c0_i32 = arith.constant 0 : i32
    %c0_i32_0 = arith.constant 0 : i32
    return %c0_i32, %arg0 : i32, i32
  }
  func.func @transform_3(%arg0: i32, %arg1: i32, %arg2: i32) -> (i32, i32) {
    %c0_i32 = arith.constant 0 : i32
    return %arg1, %arg0 : i32, i32
  }
  func.func @transform_4(%arg0: i32, %arg1: i32, %arg2: i32) -> (i32, i32) {
    %c0_i32 = arith.constant 0 : i32
    %c0_i32_0 = arith.constant 0 : i32
    return %c0_i32, %arg0 : i32, i32
  }
  func.func @transform_5(%arg0: i32, %arg1: i32, %arg2: i32) -> (i32, i32) {
    %c0_i32 = arith.constant 0 : i32
    %c0_i32_0 = arith.constant 0 : i32
    return %c0_i32, %arg0 : i32, i32
  }
}

module attributes {stable_mosaic.version = 11 : i64} {
  func.func @_mm_kernel(%arg0: i32, %arg1: i32, %arg2: i32, %arg3: memref<8x128xbf16, #tpu.memory_space<vmem>>, %arg4: memref<128x32xbf16, #tpu.memory_space<vmem>>, %arg5: memref<1x32xf32, #tpu.memory_space<vmem>>, %arg6: memref<8x32xf32, #tpu.memory_space<vmem>>, %arg7: memref<8x32xf32, #tpu.memory_space<vmem>>) attributes {dimension_semantics = [#tpu.dimension_semantics<parallel>, #tpu.dimension_semantics<parallel>, #tpu.dimension_semantics<arbitrary>], iteration_bounds = array<i64: 1, 1, 1>, scalar_prefetch = 0 : i64, scratch_operands = 1 : i64, tpu.core_type = #tpu.core_type<tc>, window_params = [{transform_indices = @transform_0, window_bounds = array<i64: 8, 128>}, {transform_indices = @transform_1, window_bounds = array<i64: 128, 32>}, {transform_indices = @transform_2, window_bounds = array<i64: 1, 32>}, {transform_indices = @transform_3, window_bounds = array<i64: 8, 32>}]} {
    %c0_i32 = arith.constant 0 : i32
    %0 = arith.cmpi eq, %arg2, %c0_i32 : i32
    %1 = arith.extui %0 : i1 to i32
    %c0_i32_0 = arith.constant 0 : i32
    %2 = arith.cmpi ne, %1, %c0_i32_0 : i32
    scf.if %2 {
      %cst_10 = arith.constant 0.000000e+00 : f32
      %12 = vector.broadcast %cst_10 : f32 to vector<8x32xf32>
      %c0_11 = arith.constant 0 : index
      %c0_12 = arith.constant 0 : index
      %13 = vector.load %arg7[%c0_11, %c0_12] : memref<8x32xf32, #tpu.memory_space<vmem>>, vector<8x32xf32>
      tpu.vector_store %arg7[%c0_11, %c0_12], %12 {strides = array<i32>} : memref<8x32xf32, #tpu.memory_space<vmem>>, vector<8x32xf32>,
    } else {
    }
    %c0 = arith.constant 0 : index
    %c0_1 = arith.constant 0 : index
    %3 = vector.load %arg7[%c0, %c0_1] : memref<8x32xf32, #tpu.memory_space<vmem>>, vector<8x32xf32>
    %c0_2 = arith.constant 0 : index
    %c0_3 = arith.constant 0 : index
    %4 = vector.load %arg3[%c0_2, %c0_3] : memref<8x128xbf16, #tpu.memory_space<vmem>>, vector<8x128xbf16>
    %c0_4 = arith.constant 0 : index
    %c0_5 = arith.constant 0 : index
    %5 = vector.load %arg4[%c0_4, %c0_5] : memref<128x32xbf16, #tpu.memory_space<vmem>>, vector<128x32xbf16>
    %cst = arith.constant dense<0.000000e+00> : vector<8x32xf32>
    %6 = tpu.matmul %4, %5, %cst {dimension_numbers = #tpu.dot_dimension_numbers<[1], [0], [0], [1], [0, 0, 1, 1], [], []>} : vector<8x128xbf16>, vector<128x32xbf16>, vector<8x32xf32> -> vector<8x32xf32>
    %7 = arith.addf %3, %6 : vector<8x32xf32>
    %c0_6 = arith.constant 0 : index
    %c0_7 = arith.constant 0 : index
    %8 = vector.load %arg7[%c0_6, %c0_7] : memref<8x32xf32, #tpu.memory_space<vmem>>, vector<8x32xf32>
    tpu.vector_store %arg7[%c0_6, %c0_7], %7 {strides = array<i32>} : memref<8x32xf32, #tpu.memory_space<vmem>>, vector<8x32xf32>,
    %c0_i32_8 = arith.constant 0 : i32
    %9 = arith.cmpi eq, %arg2, %c0_i32_8 : i32
    %10 = arith.extui %9 : i1 to i32
    %c0_i32_9 = arith.constant 0 : i32
    %11 = arith.cmpi ne, %10, %c0_i32_9 : i32
    scf.if %11 {
      %c0_10 = arith.constant 0 : index
      %c0_11 = arith.constant 0 : index
      %12 = vector.load %arg7[%c0_10, %c0_11] : memref<8x32xf32, #tpu.memory_space<vmem>>, vector<8x32xf32>
      %c0_12 = arith.constant 0 : index
      %c0_13 = arith.constant 0 : index
      %13 = vector.load %arg5[%c0_12, %c0_13] : memref<1x32xf32, #tpu.memory_space<vmem>>, vector<1x32xf32>
      %14 = vector.broadcast %13 : vector<1x32xf32> to vector<8x32xf32>
      %15 = arith.addf %12, %14 : vector<8x32xf32>
      %c0_14 = arith.constant 0 : index
      %c0_15 = arith.constant 0 : index
      %16 = vector.load %arg6[%c0_14, %c0_15] : memref<8x32xf32, #tpu.memory_space<vmem>>, vector<8x32xf32>
      tpu.vector_store %arg6[%c0_14, %c0_15], %15 {strides = array<i32>} : memref<8x32xf32, #tpu.memory_space<vmem>>, vector<8x32xf32>,
    } else {
    }
    return
  }
  func.func @transform_0(%arg0: i32, %arg1: i32, %arg2: i32) -> (i32, i32) {
    %c0_i32 = arith.constant 0 : i32
    return %arg1, %arg2 : i32, i32
  }
  func.func @transform_1(%arg0: i32, %arg1: i32, %arg2: i32) -> (i32, i32) {
    %c0_i32 = arith.constant 0 : i32
    return %arg2, %arg0 : i32, i32
  }
  func.func @transform_2(%arg0: i32, %arg1: i32, %arg2: i32) -> (i32, i32) {
    %c0_i32 = arith.constant 0 : i32
    %c0_i32_0 = arith.constant 0 : i32
    return %c0_i32, %arg0 : i32, i32
  }
  func.func @transform_3(%arg0: i32, %arg1: i32, %arg2: i32) -> (i32, i32) {
    %c0_i32 = arith.constant 0 : i32
    return %arg1, %arg0 : i32, i32
  }
}

module attributes {stable_mosaic.version = 11 : i64} {
  func.func @_bottleneck_kernel(%arg0: memref<2x4x32xf32, #tpu.memory_space<vmem>>, %arg1: memref<32x32xbf16, #tpu.memory_space<vmem>>, %arg2: memref<1x32xf32, #tpu.memory_space<vmem>>, %arg3: memref<32x32xbf16, #tpu.memory_space<vmem>>, %arg4: memref<1x32xf32, #tpu.memory_space<vmem>>, %arg5: memref<2x32xf32, #tpu.memory_space<vmem>>, %arg6: memref<2x32xf32, #tpu.memory_space<vmem>>, %arg7: memref<2x32xf32, #tpu.memory_space<vmem>>, %arg8: memref<2x32xf32, #tpu.memory_space<vmem>>) attributes {dimension_semantics = [], scalar_prefetch = 0 : i64, scratch_operands = 0 : i64, tpu.core_type = #tpu.core_type<tc>} {
    %c0 = arith.constant 0 : index
    %c0_0 = arith.constant 0 : index
    %c0_1 = arith.constant 0 : index
    %0 = vector.load %arg0[%c0, %c0_0, %c0_1] : memref<2x4x32xf32, #tpu.memory_space<vmem>>, vector<2x4x32xf32>
    %cst = arith.constant dense<0.000000e+00> : vector<2x32xf32>
    %1 = vector.multi_reduction <add>, %0, %cst [1] : vector<2x4x32xf32> to vector<2x32xf32>
    %cst_2 = arith.constant 4.000000e+00 : f32
    %2 = vector.broadcast %cst_2 : f32 to vector<2x32xf32>
    %3 = arith.divf %1, %2 : vector<2x32xf32>
    %4 = arith.truncf %3 : vector<2x32xf32> to vector<2x32xbf16>
    %c0_3 = arith.constant 0 : index
    %c0_4 = arith.constant 0 : index
    %5 = vector.load %arg1[%c0_3, %c0_4] : memref<32x32xbf16, #tpu.memory_space<vmem>>, vector<32x32xbf16>
    %cst_5 = arith.constant dense<0.000000e+00> : vector<2x32xf32>
    %6 = tpu.matmul %4, %5, %cst_5 {dimension_numbers = #tpu.dot_dimension_numbers<[1], [0], [0], [1], [0, 0, 1, 1], [], []>} : vector<2x32xbf16>, vector<32x32xbf16>, vector<2x32xf32> -> vector<2x32xf32>
    %c0_6 = arith.constant 0 : index
    %c0_7 = arith.constant 0 : index
    %7 = vector.load %arg2[%c0_6, %c0_7] : memref<1x32xf32, #tpu.memory_space<vmem>>, vector<1x32xf32>
    %8 = vector.broadcast %7 : vector<1x32xf32> to vector<2x32xf32>
    %9 = arith.addf %6, %8 : vector<2x32xf32>
    %c0_8 = arith.constant 0 : index
    %c0_9 = arith.constant 0 : index
    %10 = vector.load %arg3[%c0_8, %c0_9] : memref<32x32xbf16, #tpu.memory_space<vmem>>, vector<32x32xbf16>
    %cst_10 = arith.constant dense<0.000000e+00> : vector<2x32xf32>
    %11 = tpu.matmul %4, %10, %cst_10 {dimension_numbers = #tpu.dot_dimension_numbers<[1], [0], [0], [1], [0, 0, 1, 1], [], []>} : vector<2x32xbf16>, vector<32x32xbf16>, vector<2x32xf32> -> vector<2x32xf32>
    %c0_11 = arith.constant 0 : index
    %c0_12 = arith.constant 0 : index
    %12 = vector.load %arg4[%c0_11, %c0_12] : memref<1x32xf32, #tpu.memory_space<vmem>>, vector<1x32xf32>
    %13 = vector.broadcast %12 : vector<1x32xf32> to vector<2x32xf32>
    %14 = arith.addf %11, %13 : vector<2x32xf32>
    %c0_13 = arith.constant 0 : index
    %c0_14 = arith.constant 0 : index
    %15 = vector.load %arg6[%c0_13, %c0_14] : memref<2x32xf32, #tpu.memory_space<vmem>>, vector<2x32xf32>
    tpu.vector_store %arg6[%c0_13, %c0_14], %9 {strides = array<i32>} : memref<2x32xf32, #tpu.memory_space<vmem>>, vector<2x32xf32>,
    %c0_15 = arith.constant 0 : index
    %c0_16 = arith.constant 0 : index
    %16 = vector.load %arg7[%c0_15, %c0_16] : memref<2x32xf32, #tpu.memory_space<vmem>>, vector<2x32xf32>
    tpu.vector_store %arg7[%c0_15, %c0_16], %14 {strides = array<i32>} : memref<2x32xf32, #tpu.memory_space<vmem>>, vector<2x32xf32>,
    %c0_17 = arith.constant 0 : index
    %c0_18 = arith.constant 0 : index
    %17 = vector.load %arg5[%c0_17, %c0_18] : memref<2x32xf32, #tpu.memory_space<vmem>>, vector<2x32xf32>
    %cst_19 = arith.constant 5.000000e-01 : f32
    %18 = vector.broadcast %cst_19 : f32 to vector<2x32xf32>
    %19 = arith.mulf %18, %14 : vector<2x32xf32>
    %20 = math.exp %19 : vector<2x32xf32>
    %21 = arith.mulf %17, %20 : vector<2x32xf32>
    %22 = arith.addf %21, %9 : vector<2x32xf32>
    %c0_20 = arith.constant 0 : index
    %c0_21 = arith.constant 0 : index
    %23 = vector.load %arg8[%c0_20, %c0_21] : memref<2x32xf32, #tpu.memory_space<vmem>>, vector<2x32xf32>
    tpu.vector_store %arg8[%c0_20, %c0_21], %22 {strides = array<i32>} : memref<2x32xf32, #tpu.memory_space<vmem>>, vector<2x32xf32>,
    return
  }
}

module attributes {stable_mosaic.version = 11 : i64} {
  func.func @_mm_kernel(%arg0: i32, %arg1: i32, %arg2: i32, %arg3: memref<8x96xbf16, #tpu.memory_space<vmem>>, %arg4: memref<96x16xbf16, #tpu.memory_space<vmem>>, %arg5: memref<1x16xf32, #tpu.memory_space<vmem>>, %arg6: memref<8x16xf32, #tpu.memory_space<vmem>>, %arg7: memref<1x16xf32, #tpu.memory_space<vmem>>, %arg8: memref<1x16xf32, #tpu.memory_space<vmem>>, %arg9: memref<8x16xf32, #tpu.memory_space<vmem>>) attributes {dimension_semantics = [#tpu.dimension_semantics<parallel>, #tpu.dimension_semantics<arbitrary>, #tpu.dimension_semantics<arbitrary>], iteration_bounds = array<i64: 1, 1, 1>, scalar_prefetch = 0 : i64, scratch_operands = 1 : i64, tpu.core_type = #tpu.core_type<tc>, window_params = [{transform_indices = @transform_0, window_bounds = array<i64: 8, 96>}, {transform_indices = @transform_1, window_bounds = array<i64: 96, 16>}, {transform_indices = @transform_2, window_bounds = array<i64: 1, 16>}, {transform_indices = @transform_3, window_bounds = array<i64: 8, 16>}, {transform_indices = @transform_4, window_bounds = array<i64: 1, 16>}, {transform_indices = @transform_5, window_bounds = array<i64: 1, 16>}]} {
    %c0_i32 = arith.constant 0 : i32
    %0 = arith.cmpi eq, %arg2, %c0_i32 : i32
    %1 = arith.extui %0 : i1 to i32
    %c0_i32_0 = arith.constant 0 : i32
    %2 = arith.cmpi ne, %1, %c0_i32_0 : i32
    scf.if %2 {
      %cst_10 = arith.constant 0.000000e+00 : f32
      %12 = vector.broadcast %cst_10 : f32 to vector<8x16xf32>
      %c0_11 = arith.constant 0 : index
      %c0_12 = arith.constant 0 : index
      %13 = vector.load %arg9[%c0_11, %c0_12] : memref<8x16xf32, #tpu.memory_space<vmem>>, vector<8x16xf32>
      tpu.vector_store %arg9[%c0_11, %c0_12], %12 {strides = array<i32>} : memref<8x16xf32, #tpu.memory_space<vmem>>, vector<8x16xf32>,
    } else {
    }
    %c0 = arith.constant 0 : index
    %c0_1 = arith.constant 0 : index
    %3 = vector.load %arg9[%c0, %c0_1] : memref<8x16xf32, #tpu.memory_space<vmem>>, vector<8x16xf32>
    %c0_2 = arith.constant 0 : index
    %c0_3 = arith.constant 0 : index
    %4 = vector.load %arg3[%c0_2, %c0_3] : memref<8x96xbf16, #tpu.memory_space<vmem>>, vector<8x96xbf16>
    %c0_4 = arith.constant 0 : index
    %c0_5 = arith.constant 0 : index
    %5 = vector.load %arg4[%c0_4, %c0_5] : memref<96x16xbf16, #tpu.memory_space<vmem>>, vector<96x16xbf16>
    %cst = arith.constant dense<0.000000e+00> : vector<8x16xf32>
    %6 = tpu.matmul %4, %5, %cst {dimension_numbers = #tpu.dot_dimension_numbers<[1], [0], [0], [1], [0, 0, 1, 1], [], []>} : vector<8x96xbf16>, vector<96x16xbf16>, vector<8x16xf32> -> vector<8x16xf32>
    %7 = arith.addf %3, %6 : vector<8x16xf32>
    %c0_6 = arith.constant 0 : index
    %c0_7 = arith.constant 0 : index
    %8 = vector.load %arg9[%c0_6, %c0_7] : memref<8x16xf32, #tpu.memory_space<vmem>>, vector<8x16xf32>
    tpu.vector_store %arg9[%c0_6, %c0_7], %7 {strides = array<i32>} : memref<8x16xf32, #tpu.memory_space<vmem>>, vector<8x16xf32>,
    %c0_i32_8 = arith.constant 0 : i32
    %9 = arith.cmpi eq, %arg2, %c0_i32_8 : i32
    %10 = arith.extui %9 : i1 to i32
    %c0_i32_9 = arith.constant 0 : i32
    %11 = arith.cmpi ne, %10, %c0_i32_9 : i32
    scf.if %11 {
      %c0_10 = arith.constant 0 : index
      %c0_11 = arith.constant 0 : index
      %12 = vector.load %arg9[%c0_10, %c0_11] : memref<8x16xf32, #tpu.memory_space<vmem>>, vector<8x16xf32>
      %c0_12 = arith.constant 0 : index
      %c0_13 = arith.constant 0 : index
      %13 = vector.load %arg5[%c0_12, %c0_13] : memref<1x16xf32, #tpu.memory_space<vmem>>, vector<1x16xf32>
      %14 = vector.broadcast %13 : vector<1x16xf32> to vector<8x16xf32>
      %15 = arith.addf %12, %14 : vector<8x16xf32>
      %cst_14 = arith.constant 0.000000e+00 : f32
      %16 = vector.broadcast %cst_14 : f32 to vector<8x16xf32>
      %17 = arith.maximumf %15, %16 : vector<8x16xf32>
      %c0_15 = arith.constant 0 : index
      %c0_16 = arith.constant 0 : index
      %18 = vector.load %arg6[%c0_15, %c0_16] : memref<8x16xf32, #tpu.memory_space<vmem>>, vector<8x16xf32>
      tpu.vector_store %arg6[%c0_15, %c0_16], %17 {strides = array<i32>} : memref<8x16xf32, #tpu.memory_space<vmem>>, vector<8x16xf32>,
      %cst_17 = arith.constant dense<0.000000e+00> : vector<16xf32>
      %19 = vector.multi_reduction <add>, %17, %cst_17 [0] : vector<8x16xf32> to vector<16xf32>
      %20 = vector.shape_cast %19 : vector<16xf32> to vector<1x16xf32>
      %21 = arith.mulf %17, %17 : vector<8x16xf32>
      %cst_18 = arith.constant dense<0.000000e+00> : vector<16xf32>
      %22 = vector.multi_reduction <add>, %21, %cst_18 [0] : vector<8x16xf32> to vector<16xf32>
      %23 = vector.shape_cast %22 : vector<16xf32> to vector<1x16xf32>
      %c0_i32_19 = arith.constant 0 : i32
      %24 = arith.cmpi eq, %arg1, %c0_i32_19 : i32
      %c0_20 = arith.constant 0 : index
      %c0_21 = arith.constant 0 : index
      %25 = vector.load %arg7[%c0_20, %c0_21] : memref<1x16xf32, #tpu.memory_space<vmem>>, vector<1x16xf32>
      %26 = arith.addf %25, %20 : vector<1x16xf32>
      %27 = arith.select %24, %20, %26 : vector<1x16xf32>
      %c0_22 = arith.constant 0 : index
      %c0_23 = arith.constant 0 : index
      %28 = vector.load %arg7[%c0_22, %c0_23] : memref<1x16xf32, #tpu.memory_space<vmem>>, vector<1x16xf32>
      tpu.vector_store %arg7[%c0_22, %c0_23], %27 {strides = array<i32>} : memref<1x16xf32, #tpu.memory_space<vmem>>, vector<1x16xf32>,
      %c0_i32_24 = arith.constant 0 : i32
      %29 = arith.cmpi eq, %arg1, %c0_i32_24 : i32
      %c0_25 = arith.constant 0 : index
      %c0_26 = arith.constant 0 : index
      %30 = vector.load %arg8[%c0_25, %c0_26] : memref<1x16xf32, #tpu.memory_space<vmem>>, vector<1x16xf32>
      %31 = arith.addf %30, %23 : vector<1x16xf32>
      %32 = arith.select %29, %23, %31 : vector<1x16xf32>
      %c0_27 = arith.constant 0 : index
      %c0_28 = arith.constant 0 : index
      %33 = vector.load %arg8[%c0_27, %c0_28] : memref<1x16xf32, #tpu.memory_space<vmem>>, vector<1x16xf32>
      tpu.vector_store %arg8[%c0_27, %c0_28], %32 {strides = array<i32>} : memref<1x16xf32, #tpu.memory_space<vmem>>, vector<1x16xf32>,
    } else {
    }
    return
  }
  func.func @transform_0(%arg0: i32, %arg1: i32, %arg2: i32) -> (i32, i32) {
    %c0_i32 = arith.constant 0 : i32
    return %arg1, %arg2 : i32, i32
  }
  func.func @transform_1(%arg0: i32, %arg1: i32, %arg2: i32) -> (i32, i32) {
    %c0_i32 = arith.constant 0 : i32
    return %arg2, %arg0 : i32, i32
  }
  func.func @transform_2(%arg0: i32, %arg1: i32, %arg2: i32) -> (i32, i32) {
    %c0_i32 = arith.constant 0 : i32
    %c0_i32_0 = arith.constant 0 : i32
    return %c0_i32, %arg0 : i32, i32
  }
  func.func @transform_3(%arg0: i32, %arg1: i32, %arg2: i32) -> (i32, i32) {
    %c0_i32 = arith.constant 0 : i32
    return %arg1, %arg0 : i32, i32
  }
  func.func @transform_4(%arg0: i32, %arg1: i32, %arg2: i32) -> (i32, i32) {
    %c0_i32 = arith.constant 0 : i32
    %c0_i32_0 = arith.constant 0 : i32
    return %c0_i32, %arg0 : i32, i32
  }
  func.func @transform_5(%arg0: i32, %arg1: i32, %arg2: i32) -> (i32, i32) {
    %c0_i32 = arith.constant 0 : i32
    %c0_i32_0 = arith.constant 0 : i32
    return %c0_i32, %arg0 : i32, i32
  }
}

module attributes {stable_mosaic.version = 11 : i64} {
  func.func @_bn_kernel(%arg0: i32, %arg1: i32, %arg2: memref<8x16xf32, #tpu.memory_space<vmem>>, %arg3: memref<1x16xf32, #tpu.memory_space<vmem>>, %arg4: memref<1x16xf32, #tpu.memory_space<vmem>>, %arg5: memref<8x16xf32, #tpu.memory_space<vmem>>) attributes {dimension_semantics = [#tpu.dimension_semantics<parallel>, #tpu.dimension_semantics<parallel>], iteration_bounds = array<i64: 1, 1>, scalar_prefetch = 0 : i64, scratch_operands = 0 : i64, tpu.core_type = #tpu.core_type<tc>, window_params = [{transform_indices = @transform_0, window_bounds = array<i64: 8, 16>}, {transform_indices = @transform_1, window_bounds = array<i64: 1, 16>}, {transform_indices = @transform_2, window_bounds = array<i64: 1, 16>}, {transform_indices = @transform_3, window_bounds = array<i64: 8, 16>}]} {
    %c0 = arith.constant 0 : index
    %c0_0 = arith.constant 0 : index
    %0 = vector.load %arg3[%c0, %c0_0] : memref<1x16xf32, #tpu.memory_space<vmem>>, vector<1x16xf32>
    %cst = arith.constant 1.250000e-01 : f32
    %1 = vector.broadcast %cst : f32 to vector<1x16xf32>
    %2 = arith.mulf %0, %1 : vector<1x16xf32>
    %c0_1 = arith.constant 0 : index
    %c0_2 = arith.constant 0 : index
    %3 = vector.load %arg4[%c0_1, %c0_2] : memref<1x16xf32, #tpu.memory_space<vmem>>, vector<1x16xf32>
    %cst_3 = arith.constant 1.250000e-01 : f32
    %4 = vector.broadcast %cst_3 : f32 to vector<1x16xf32>
    %5 = arith.mulf %3, %4 : vector<1x16xf32>
    %6 = arith.mulf %2, %2 : vector<1x16xf32>
    %7 = arith.subf %5, %6 : vector<1x16xf32>
    %c0_4 = arith.constant 0 : index
    %c0_5 = arith.constant 0 : index
    %8 = vector.load %arg2[%c0_4, %c0_5] : memref<8x16xf32, #tpu.memory_space<vmem>>, vector<8x16xf32>
    %9 = vector.broadcast %2 : vector<1x16xf32> to vector<8x16xf32>
    %10 = arith.subf %8, %9 : vector<8x16xf32>
    %cst_6 = arith.constant 9.99999974E-6 : f32
    %11 = vector.broadcast %cst_6 : f32 to vector<1x16xf32>
    %12 = arith.addf %7, %11 : vector<1x16xf32>
    %13 = math.rsqrt %12 : vector<1x16xf32>
    %14 = vector.broadcast %13 : vector<1x16xf32> to vector<8x16xf32>
    %15 = arith.mulf %10, %14 : vector<8x16xf32>
    %c0_7 = arith.constant 0 : index
    %c0_8 = arith.constant 0 : index
    %16 = vector.load %arg5[%c0_7, %c0_8] : memref<8x16xf32, #tpu.memory_space<vmem>>, vector<8x16xf32>
    tpu.vector_store %arg5[%c0_7, %c0_8], %15 {strides = array<i32>} : memref<8x16xf32, #tpu.memory_space<vmem>>, vector<8x16xf32>,
    return
  }
  func.func @transform_0(%arg0: i32, %arg1: i32) -> (i32, i32) {
    %c0_i32 = arith.constant 0 : i32
    return %arg0, %arg1 : i32, i32
  }
  func.func @transform_1(%arg0: i32, %arg1: i32) -> (i32, i32) {
    %c0_i32 = arith.constant 0 : i32
    %c0_i32_0 = arith.constant 0 : i32
    return %c0_i32, %arg1 : i32, i32
  }
  func.func @transform_2(%arg0: i32, %arg1: i32) -> (i32, i32) {
    %c0_i32 = arith.constant 0 : i32
    %c0_i32_0 = arith.constant 0 : i32
    return %c0_i32, %arg1 : i32, i32
  }
  func.func @transform_3(%arg0: i32, %arg1: i32) -> (i32, i32) {
    %c0_i32 = arith.constant 0 : i32
    return %arg0, %arg1 : i32, i32
  }
}

module attributes {stable_mosaic.version = 11 : i64} {
  func.func @_mm_kernel(%arg0: i32, %arg1: i32, %arg2: i32, %arg3: memref<8x48xbf16, #tpu.memory_space<vmem>>, %arg4: memref<48x16xbf16, #tpu.memory_space<vmem>>, %arg5: memref<1x16xf32, #tpu.memory_space<vmem>>, %arg6: memref<8x16xf32, #tpu.memory_space<vmem>>, %arg7: memref<1x16xf32, #tpu.memory_space<vmem>>, %arg8: memref<1x16xf32, #tpu.memory_space<vmem>>, %arg9: memref<8x16xf32, #tpu.memory_space<vmem>>) attributes {dimension_semantics = [#tpu.dimension_semantics<parallel>, #tpu.dimension_semantics<arbitrary>, #tpu.dimension_semantics<arbitrary>], iteration_bounds = array<i64: 1, 1, 1>, scalar_prefetch = 0 : i64, scratch_operands = 1 : i64, tpu.core_type = #tpu.core_type<tc>, window_params = [{transform_indices = @transform_0, window_bounds = array<i64: 8, 48>}, {transform_indices = @transform_1, window_bounds = array<i64: 48, 16>}, {transform_indices = @transform_2, window_bounds = array<i64: 1, 16>}, {transform_indices = @transform_3, window_bounds = array<i64: 8, 16>}, {transform_indices = @transform_4, window_bounds = array<i64: 1, 16>}, {transform_indices = @transform_5, window_bounds = array<i64: 1, 16>}]} {
    %c0_i32 = arith.constant 0 : i32
    %0 = arith.cmpi eq, %arg2, %c0_i32 : i32
    %1 = arith.extui %0 : i1 to i32
    %c0_i32_0 = arith.constant 0 : i32
    %2 = arith.cmpi ne, %1, %c0_i32_0 : i32
    scf.if %2 {
      %cst_10 = arith.constant 0.000000e+00 : f32
      %12 = vector.broadcast %cst_10 : f32 to vector<8x16xf32>
      %c0_11 = arith.constant 0 : index
      %c0_12 = arith.constant 0 : index
      %13 = vector.load %arg9[%c0_11, %c0_12] : memref<8x16xf32, #tpu.memory_space<vmem>>, vector<8x16xf32>
      tpu.vector_store %arg9[%c0_11, %c0_12], %12 {strides = array<i32>} : memref<8x16xf32, #tpu.memory_space<vmem>>, vector<8x16xf32>,
    } else {
    }
    %c0 = arith.constant 0 : index
    %c0_1 = arith.constant 0 : index
    %3 = vector.load %arg9[%c0, %c0_1] : memref<8x16xf32, #tpu.memory_space<vmem>>, vector<8x16xf32>
    %c0_2 = arith.constant 0 : index
    %c0_3 = arith.constant 0 : index
    %4 = vector.load %arg3[%c0_2, %c0_3] : memref<8x48xbf16, #tpu.memory_space<vmem>>, vector<8x48xbf16>
    %c0_4 = arith.constant 0 : index
    %c0_5 = arith.constant 0 : index
    %5 = vector.load %arg4[%c0_4, %c0_5] : memref<48x16xbf16, #tpu.memory_space<vmem>>, vector<48x16xbf16>
    %cst = arith.constant dense<0.000000e+00> : vector<8x16xf32>
    %6 = tpu.matmul %4, %5, %cst {dimension_numbers = #tpu.dot_dimension_numbers<[1], [0], [0], [1], [0, 0, 1, 1], [], []>} : vector<8x48xbf16>, vector<48x16xbf16>, vector<8x16xf32> -> vector<8x16xf32>
    %7 = arith.addf %3, %6 : vector<8x16xf32>
    %c0_6 = arith.constant 0 : index
    %c0_7 = arith.constant 0 : index
    %8 = vector.load %arg9[%c0_6, %c0_7] : memref<8x16xf32, #tpu.memory_space<vmem>>, vector<8x16xf32>
    tpu.vector_store %arg9[%c0_6, %c0_7], %7 {strides = array<i32>} : memref<8x16xf32, #tpu.memory_space<vmem>>, vector<8x16xf32>,
    %c0_i32_8 = arith.constant 0 : i32
    %9 = arith.cmpi eq, %arg2, %c0_i32_8 : i32
    %10 = arith.extui %9 : i1 to i32
    %c0_i32_9 = arith.constant 0 : i32
    %11 = arith.cmpi ne, %10, %c0_i32_9 : i32
    scf.if %11 {
      %c0_10 = arith.constant 0 : index
      %c0_11 = arith.constant 0 : index
      %12 = vector.load %arg9[%c0_10, %c0_11] : memref<8x16xf32, #tpu.memory_space<vmem>>, vector<8x16xf32>
      %c0_12 = arith.constant 0 : index
      %c0_13 = arith.constant 0 : index
      %13 = vector.load %arg5[%c0_12, %c0_13] : memref<1x16xf32, #tpu.memory_space<vmem>>, vector<1x16xf32>
      %14 = vector.broadcast %13 : vector<1x16xf32> to vector<8x16xf32>
      %15 = arith.addf %12, %14 : vector<8x16xf32>
      %cst_14 = arith.constant 0.000000e+00 : f32
      %16 = vector.broadcast %cst_14 : f32 to vector<8x16xf32>
      %17 = arith.maximumf %15, %16 : vector<8x16xf32>
      %c0_15 = arith.constant 0 : index
      %c0_16 = arith.constant 0 : index
      %18 = vector.load %arg6[%c0_15, %c0_16] : memref<8x16xf32, #tpu.memory_space<vmem>>, vector<8x16xf32>
      tpu.vector_store %arg6[%c0_15, %c0_16], %17 {strides = array<i32>} : memref<8x16xf32, #tpu.memory_space<vmem>>, vector<8x16xf32>,
      %cst_17 = arith.constant dense<0.000000e+00> : vector<16xf32>
      %19 = vector.multi_reduction <add>, %17, %cst_17 [0] : vector<8x16xf32> to vector<16xf32>
      %20 = vector.shape_cast %19 : vector<16xf32> to vector<1x16xf32>
      %21 = arith.mulf %17, %17 : vector<8x16xf32>
      %cst_18 = arith.constant dense<0.000000e+00> : vector<16xf32>
      %22 = vector.multi_reduction <add>, %21, %cst_18 [0] : vector<8x16xf32> to vector<16xf32>
      %23 = vector.shape_cast %22 : vector<16xf32> to vector<1x16xf32>
      %c0_i32_19 = arith.constant 0 : i32
      %24 = arith.cmpi eq, %arg1, %c0_i32_19 : i32
      %c0_20 = arith.constant 0 : index
      %c0_21 = arith.constant 0 : index
      %25 = vector.load %arg7[%c0_20, %c0_21] : memref<1x16xf32, #tpu.memory_space<vmem>>, vector<1x16xf32>
      %26 = arith.addf %25, %20 : vector<1x16xf32>
      %27 = arith.select %24, %20, %26 : vector<1x16xf32>
      %c0_22 = arith.constant 0 : index
      %c0_23 = arith.constant 0 : index
      %28 = vector.load %arg7[%c0_22, %c0_23] : memref<1x16xf32, #tpu.memory_space<vmem>>, vector<1x16xf32>
      tpu.vector_store %arg7[%c0_22, %c0_23], %27 {strides = array<i32>} : memref<1x16xf32, #tpu.memory_space<vmem>>, vector<1x16xf32>,
      %c0_i32_24 = arith.constant 0 : i32
      %29 = arith.cmpi eq, %arg1, %c0_i32_24 : i32
      %c0_25 = arith.constant 0 : index
      %c0_26 = arith.constant 0 : index
      %30 = vector.load %arg8[%c0_25, %c0_26] : memref<1x16xf32, #tpu.memory_space<vmem>>, vector<1x16xf32>
      %31 = arith.addf %30, %23 : vector<1x16xf32>
      %32 = arith.select %29, %23, %31 : vector<1x16xf32>
      %c0_27 = arith.constant 0 : index
      %c0_28 = arith.constant 0 : index
      %33 = vector.load %arg8[%c0_27, %c0_28] : memref<1x16xf32, #tpu.memory_space<vmem>>, vector<1x16xf32>
      tpu.vector_store %arg8[%c0_27, %c0_28], %32 {strides = array<i32>} : memref<1x16xf32, #tpu.memory_space<vmem>>, vector<1x16xf32>,
    } else {
    }
    return
  }
  func.func @transform_0(%arg0: i32, %arg1: i32, %arg2: i32) -> (i32, i32) {
    %c0_i32 = arith.constant 0 : i32
    return %arg1, %arg2 : i32, i32
  }
  func.func @transform_1(%arg0: i32, %arg1: i32, %arg2: i32) -> (i32, i32) {
    %c0_i32 = arith.constant 0 : i32
    return %arg2, %arg0 : i32, i32
  }
  func.func @transform_2(%arg0: i32, %arg1: i32, %arg2: i32) -> (i32, i32) {
    %c0_i32 = arith.constant 0 : i32
    %c0_i32_0 = arith.constant 0 : i32
    return %c0_i32, %arg0 : i32, i32
  }
  func.func @transform_3(%arg0: i32, %arg1: i32, %arg2: i32) -> (i32, i32) {
    %c0_i32 = arith.constant 0 : i32
    return %arg1, %arg0 : i32, i32
  }
  func.func @transform_4(%arg0: i32, %arg1: i32, %arg2: i32) -> (i32, i32) {
    %c0_i32 = arith.constant 0 : i32
    %c0_i32_0 = arith.constant 0 : i32
    return %c0_i32, %arg0 : i32, i32
  }
  func.func @transform_5(%arg0: i32, %arg1: i32, %arg2: i32) -> (i32, i32) {
    %c0_i32 = arith.constant 0 : i32
    %c0_i32_0 = arith.constant 0 : i32
    return %c0_i32, %arg0 : i32, i32
  }
}

module attributes {stable_mosaic.version = 11 : i64} {
  func.func @_mm_kernel(%arg0: i32, %arg1: i32, %arg2: i32, %arg3: memref<10x32xbf16, #tpu.memory_space<vmem>>, %arg4: memref<32x32xbf16, #tpu.memory_space<vmem>>, %arg5: memref<1x32xf32, #tpu.memory_space<vmem>>, %arg6: memref<10x32xf32, #tpu.memory_space<vmem>>, %arg7: memref<10x32xf32, #tpu.memory_space<vmem>>) attributes {dimension_semantics = [#tpu.dimension_semantics<parallel>, #tpu.dimension_semantics<parallel>, #tpu.dimension_semantics<arbitrary>], iteration_bounds = array<i64: 1, 1, 1>, scalar_prefetch = 0 : i64, scratch_operands = 1 : i64, tpu.core_type = #tpu.core_type<tc>, window_params = [{transform_indices = @transform_0, window_bounds = array<i64: 10, 32>}, {transform_indices = @transform_1, window_bounds = array<i64: 32, 32>}, {transform_indices = @transform_2, window_bounds = array<i64: 1, 32>}, {transform_indices = @transform_3, window_bounds = array<i64: 10, 32>}]} {
    %c0_i32 = arith.constant 0 : i32
    %0 = arith.cmpi eq, %arg2, %c0_i32 : i32
    %1 = arith.extui %0 : i1 to i32
    %c0_i32_0 = arith.constant 0 : i32
    %2 = arith.cmpi ne, %1, %c0_i32_0 : i32
    scf.if %2 {
      %cst_10 = arith.constant 0.000000e+00 : f32
      %12 = vector.broadcast %cst_10 : f32 to vector<10x32xf32>
      %c0_11 = arith.constant 0 : index
      %c0_12 = arith.constant 0 : index
      %13 = vector.load %arg7[%c0_11, %c0_12] : memref<10x32xf32, #tpu.memory_space<vmem>>, vector<10x32xf32>
      tpu.vector_store %arg7[%c0_11, %c0_12], %12 {strides = array<i32>} : memref<10x32xf32, #tpu.memory_space<vmem>>, vector<10x32xf32>,
    } else {
    }
    %c0 = arith.constant 0 : index
    %c0_1 = arith.constant 0 : index
    %3 = vector.load %arg7[%c0, %c0_1] : memref<10x32xf32, #tpu.memory_space<vmem>>, vector<10x32xf32>
    %c0_2 = arith.constant 0 : index
    %c0_3 = arith.constant 0 : index
    %4 = vector.load %arg3[%c0_2, %c0_3] : memref<10x32xbf16, #tpu.memory_space<vmem>>, vector<10x32xbf16>
    %c0_4 = arith.constant 0 : index
    %c0_5 = arith.constant 0 : index
    %5 = vector.load %arg4[%c0_4, %c0_5] : memref<32x32xbf16, #tpu.memory_space<vmem>>, vector<32x32xbf16>
    %cst = arith.constant dense<0.000000e+00> : vector<10x32xf32>
    %6 = tpu.matmul %4, %5, %cst {dimension_numbers = #tpu.dot_dimension_numbers<[1], [0], [0], [1], [0, 0, 1, 1], [], []>} : vector<10x32xbf16>, vector<32x32xbf16>, vector<10x32xf32> -> vector<10x32xf32>
    %7 = arith.addf %3, %6 : vector<10x32xf32>
    %c0_6 = arith.constant 0 : index
    %c0_7 = arith.constant 0 : index
    %8 = vector.load %arg7[%c0_6, %c0_7] : memref<10x32xf32, #tpu.memory_space<vmem>>, vector<10x32xf32>
    tpu.vector_store %arg7[%c0_6, %c0_7], %7 {strides = array<i32>} : memref<10x32xf32, #tpu.memory_space<vmem>>, vector<10x32xf32>,
    %c0_i32_8 = arith.constant 0 : i32
    %9 = arith.cmpi eq, %arg2, %c0_i32_8 : i32
    %10 = arith.extui %9 : i1 to i32
    %c0_i32_9 = arith.constant 0 : i32
    %11 = arith.cmpi ne, %10, %c0_i32_9 : i32
    scf.if %11 {
      %c0_10 = arith.constant 0 : index
      %c0_11 = arith.constant 0 : index
      %12 = vector.load %arg7[%c0_10, %c0_11] : memref<10x32xf32, #tpu.memory_space<vmem>>, vector<10x32xf32>
      %c0_12 = arith.constant 0 : index
      %c0_13 = arith.constant 0 : index
      %13 = vector.load %arg5[%c0_12, %c0_13] : memref<1x32xf32, #tpu.memory_space<vmem>>, vector<1x32xf32>
      %14 = vector.broadcast %13 : vector<1x32xf32> to vector<10x32xf32>
      %15 = arith.addf %12, %14 : vector<10x32xf32>
      %c0_14 = arith.constant 0 : index
      %c0_15 = arith.constant 0 : index
      %16 = vector.load %arg6[%c0_14, %c0_15] : memref<10x32xf32, #tpu.memory_space<vmem>>, vector<10x32xf32>
      tpu.vector_store %arg6[%c0_14, %c0_15], %15 {strides = array<i32>} : memref<10x32xf32, #tpu.memory_space<vmem>>, vector<10x32xf32>,
    } else {
    }
    return
  }
  func.func @transform_0(%arg0: i32, %arg1: i32, %arg2: i32) -> (i32, i32) {
    %c0_i32 = arith.constant 0 : i32
    return %arg1, %arg2 : i32, i32
  }
  func.func @transform_1(%arg0: i32, %arg1: i32, %arg2: i32) -> (i32, i32) {
    %c0_i32 = arith.constant 0 : i32
    return %arg2, %arg0 : i32, i32
  }
  func.func @transform_2(%arg0: i32, %arg1: i32, %arg2: i32) -> (i32, i32) {
    %c0_i32 = arith.constant 0 : i32
    %c0_i32_0 = arith.constant 0 : i32
    return %c0_i32, %arg0 : i32, i32
  }
  func.func @transform_3(%arg0: i32, %arg1: i32, %arg2: i32) -> (i32, i32) {
    %c0_i32 = arith.constant 0 : i32
    return %arg1, %arg0 : i32, i32
  }
}

module attributes {stable_mosaic.version = 11 : i64} {
  func.func @_mm_kernel(%arg0: i32, %arg1: i32, %arg2: i32, %arg3: memref<16x48xbf16, #tpu.memory_space<vmem>>, %arg4: memref<48x8xbf16, #tpu.memory_space<vmem>>, %arg5: memref<1x8xf32, #tpu.memory_space<vmem>>, %arg6: memref<16x8xf32, #tpu.memory_space<vmem>>, %arg7: memref<1x8xf32, #tpu.memory_space<vmem>>, %arg8: memref<1x8xf32, #tpu.memory_space<vmem>>, %arg9: memref<16x8xf32, #tpu.memory_space<vmem>>) attributes {dimension_semantics = [#tpu.dimension_semantics<parallel>, #tpu.dimension_semantics<arbitrary>, #tpu.dimension_semantics<arbitrary>], iteration_bounds = array<i64: 1, 1, 1>, scalar_prefetch = 0 : i64, scratch_operands = 1 : i64, tpu.core_type = #tpu.core_type<tc>, window_params = [{transform_indices = @transform_0, window_bounds = array<i64: 16, 48>}, {transform_indices = @transform_1, window_bounds = array<i64: 48, 8>}, {transform_indices = @transform_2, window_bounds = array<i64: 1, 8>}, {transform_indices = @transform_3, window_bounds = array<i64: 16, 8>}, {transform_indices = @transform_4, window_bounds = array<i64: 1, 8>}, {transform_indices = @transform_5, window_bounds = array<i64: 1, 8>}]} {
    %c0_i32 = arith.constant 0 : i32
    %0 = arith.cmpi eq, %arg2, %c0_i32 : i32
    %1 = arith.extui %0 : i1 to i32
    %c0_i32_0 = arith.constant 0 : i32
    %2 = arith.cmpi ne, %1, %c0_i32_0 : i32
    scf.if %2 {
      %cst_10 = arith.constant 0.000000e+00 : f32
      %12 = vector.broadcast %cst_10 : f32 to vector<16x8xf32>
      %c0_11 = arith.constant 0 : index
      %c0_12 = arith.constant 0 : index
      %13 = vector.load %arg9[%c0_11, %c0_12] : memref<16x8xf32, #tpu.memory_space<vmem>>, vector<16x8xf32>
      tpu.vector_store %arg9[%c0_11, %c0_12], %12 {strides = array<i32>} : memref<16x8xf32, #tpu.memory_space<vmem>>, vector<16x8xf32>,
    } else {
    }
    %c0 = arith.constant 0 : index
    %c0_1 = arith.constant 0 : index
    %3 = vector.load %arg9[%c0, %c0_1] : memref<16x8xf32, #tpu.memory_space<vmem>>, vector<16x8xf32>
    %c0_2 = arith.constant 0 : index
    %c0_3 = arith.constant 0 : index
    %4 = vector.load %arg3[%c0_2, %c0_3] : memref<16x48xbf16, #tpu.memory_space<vmem>>, vector<16x48xbf16>
    %c0_4 = arith.constant 0 : index
    %c0_5 = arith.constant 0 : index
    %5 = vector.load %arg4[%c0_4, %c0_5] : memref<48x8xbf16, #tpu.memory_space<vmem>>, vector<48x8xbf16>
    %cst = arith.constant dense<0.000000e+00> : vector<16x8xf32>
    %6 = tpu.matmul %4, %5, %cst {dimension_numbers = #tpu.dot_dimension_numbers<[1], [0], [0], [1], [0, 0, 1, 1], [], []>} : vector<16x48xbf16>, vector<48x8xbf16>, vector<16x8xf32> -> vector<16x8xf32>
    %7 = arith.addf %3, %6 : vector<16x8xf32>
    %c0_6 = arith.constant 0 : index
    %c0_7 = arith.constant 0 : index
    %8 = vector.load %arg9[%c0_6, %c0_7] : memref<16x8xf32, #tpu.memory_space<vmem>>, vector<16x8xf32>
    tpu.vector_store %arg9[%c0_6, %c0_7], %7 {strides = array<i32>} : memref<16x8xf32, #tpu.memory_space<vmem>>, vector<16x8xf32>,
    %c0_i32_8 = arith.constant 0 : i32
    %9 = arith.cmpi eq, %arg2, %c0_i32_8 : i32
    %10 = arith.extui %9 : i1 to i32
    %c0_i32_9 = arith.constant 0 : i32
    %11 = arith.cmpi ne, %10, %c0_i32_9 : i32
    scf.if %11 {
      %c0_10 = arith.constant 0 : index
      %c0_11 = arith.constant 0 : index
      %12 = vector.load %arg9[%c0_10, %c0_11] : memref<16x8xf32, #tpu.memory_space<vmem>>, vector<16x8xf32>
      %c0_12 = arith.constant 0 : index
      %c0_13 = arith.constant 0 : index
      %13 = vector.load %arg5[%c0_12, %c0_13] : memref<1x8xf32, #tpu.memory_space<vmem>>, vector<1x8xf32>
      %14 = vector.broadcast %13 : vector<1x8xf32> to vector<16x8xf32>
      %15 = arith.addf %12, %14 : vector<16x8xf32>
      %cst_14 = arith.constant 0.000000e+00 : f32
      %16 = vector.broadcast %cst_14 : f32 to vector<16x8xf32>
      %17 = arith.maximumf %15, %16 : vector<16x8xf32>
      %c0_15 = arith.constant 0 : index
      %c0_16 = arith.constant 0 : index
      %18 = vector.load %arg6[%c0_15, %c0_16] : memref<16x8xf32, #tpu.memory_space<vmem>>, vector<16x8xf32>
      tpu.vector_store %arg6[%c0_15, %c0_16], %17 {strides = array<i32>} : memref<16x8xf32, #tpu.memory_space<vmem>>, vector<16x8xf32>,
      %cst_17 = arith.constant dense<0.000000e+00> : vector<8xf32>
      %19 = vector.multi_reduction <add>, %17, %cst_17 [0] : vector<16x8xf32> to vector<8xf32>
      %20 = vector.shape_cast %19 : vector<8xf32> to vector<1x8xf32>
      %21 = arith.mulf %17, %17 : vector<16x8xf32>
      %cst_18 = arith.constant dense<0.000000e+00> : vector<8xf32>
      %22 = vector.multi_reduction <add>, %21, %cst_18 [0] : vector<16x8xf32> to vector<8xf32>
      %23 = vector.shape_cast %22 : vector<8xf32> to vector<1x8xf32>
      %c0_i32_19 = arith.constant 0 : i32
      %24 = arith.cmpi eq, %arg1, %c0_i32_19 : i32
      %c0_20 = arith.constant 0 : index
      %c0_21 = arith.constant 0 : index
      %25 = vector.load %arg7[%c0_20, %c0_21] : memref<1x8xf32, #tpu.memory_space<vmem>>, vector<1x8xf32>
      %26 = arith.addf %25, %20 : vector<1x8xf32>
      %27 = arith.select %24, %20, %26 : vector<1x8xf32>
      %c0_22 = arith.constant 0 : index
      %c0_23 = arith.constant 0 : index
      %28 = vector.load %arg7[%c0_22, %c0_23] : memref<1x8xf32, #tpu.memory_space<vmem>>, vector<1x8xf32>
      tpu.vector_store %arg7[%c0_22, %c0_23], %27 {strides = array<i32>} : memref<1x8xf32, #tpu.memory_space<vmem>>, vector<1x8xf32>,
      %c0_i32_24 = arith.constant 0 : i32
      %29 = arith.cmpi eq, %arg1, %c0_i32_24 : i32
      %c0_25 = arith.constant 0 : index
      %c0_26 = arith.constant 0 : index
      %30 = vector.load %arg8[%c0_25, %c0_26] : memref<1x8xf32, #tpu.memory_space<vmem>>, vector<1x8xf32>
      %31 = arith.addf %30, %23 : vector<1x8xf32>
      %32 = arith.select %29, %23, %31 : vector<1x8xf32>
      %c0_27 = arith.constant 0 : index
      %c0_28 = arith.constant 0 : index
      %33 = vector.load %arg8[%c0_27, %c0_28] : memref<1x8xf32, #tpu.memory_space<vmem>>, vector<1x8xf32>
      tpu.vector_store %arg8[%c0_27, %c0_28], %32 {strides = array<i32>} : memref<1x8xf32, #tpu.memory_space<vmem>>, vector<1x8xf32>,
    } else {
    }
    return
  }
  func.func @transform_0(%arg0: i32, %arg1: i32, %arg2: i32) -> (i32, i32) {
    %c0_i32 = arith.constant 0 : i32
    return %arg1, %arg2 : i32, i32
  }
  func.func @transform_1(%arg0: i32, %arg1: i32, %arg2: i32) -> (i32, i32) {
    %c0_i32 = arith.constant 0 : i32
    return %arg2, %arg0 : i32, i32
  }
  func.func @transform_2(%arg0: i32, %arg1: i32, %arg2: i32) -> (i32, i32) {
    %c0_i32 = arith.constant 0 : i32
    %c0_i32_0 = arith.constant 0 : i32
    return %c0_i32, %arg0 : i32, i32
  }
  func.func @transform_3(%arg0: i32, %arg1: i32, %arg2: i32) -> (i32, i32) {
    %c0_i32 = arith.constant 0 : i32
    return %arg1, %arg0 : i32, i32
  }
  func.func @transform_4(%arg0: i32, %arg1: i32, %arg2: i32) -> (i32, i32) {
    %c0_i32 = arith.constant 0 : i32
    %c0_i32_0 = arith.constant 0 : i32
    return %c0_i32, %arg0 : i32, i32
  }
  func.func @transform_5(%arg0: i32, %arg1: i32, %arg2: i32) -> (i32, i32) {
    %c0_i32 = arith.constant 0 : i32
    %c0_i32_0 = arith.constant 0 : i32
    return %c0_i32, %arg0 : i32, i32
  }
}

module attributes {stable_mosaic.version = 11 : i64} {
  func.func @_bn_kernel(%arg0: i32, %arg1: i32, %arg2: memref<16x8xf32, #tpu.memory_space<vmem>>, %arg3: memref<1x8xf32, #tpu.memory_space<vmem>>, %arg4: memref<1x8xf32, #tpu.memory_space<vmem>>, %arg5: memref<16x8xf32, #tpu.memory_space<vmem>>) attributes {dimension_semantics = [#tpu.dimension_semantics<parallel>, #tpu.dimension_semantics<parallel>], iteration_bounds = array<i64: 1, 1>, scalar_prefetch = 0 : i64, scratch_operands = 0 : i64, tpu.core_type = #tpu.core_type<tc>, window_params = [{transform_indices = @transform_0, window_bounds = array<i64: 16, 8>}, {transform_indices = @transform_1, window_bounds = array<i64: 1, 8>}, {transform_indices = @transform_2, window_bounds = array<i64: 1, 8>}, {transform_indices = @transform_3, window_bounds = array<i64: 16, 8>}]} {
    %c0 = arith.constant 0 : index
    %c0_0 = arith.constant 0 : index
    %0 = vector.load %arg3[%c0, %c0_0] : memref<1x8xf32, #tpu.memory_space<vmem>>, vector<1x8xf32>
    %cst = arith.constant 6.250000e-02 : f32
    %1 = vector.broadcast %cst : f32 to vector<1x8xf32>
    %2 = arith.mulf %0, %1 : vector<1x8xf32>
    %c0_1 = arith.constant 0 : index
    %c0_2 = arith.constant 0 : index
    %3 = vector.load %arg4[%c0_1, %c0_2] : memref<1x8xf32, #tpu.memory_space<vmem>>, vector<1x8xf32>
    %cst_3 = arith.constant 6.250000e-02 : f32
    %4 = vector.broadcast %cst_3 : f32 to vector<1x8xf32>
    %5 = arith.mulf %3, %4 : vector<1x8xf32>
    %6 = arith.mulf %2, %2 : vector<1x8xf32>
    %7 = arith.subf %5, %6 : vector<1x8xf32>
    %c0_4 = arith.constant 0 : index
    %c0_5 = arith.constant 0 : index
    %8 = vector.load %arg2[%c0_4, %c0_5] : memref<16x8xf32, #tpu.memory_space<vmem>>, vector<16x8xf32>
    %9 = vector.broadcast %2 : vector<1x8xf32> to vector<16x8xf32>
    %10 = arith.subf %8, %9 : vector<16x8xf32>
    %cst_6 = arith.constant 9.99999974E-6 : f32
    %11 = vector.broadcast %cst_6 : f32 to vector<1x8xf32>
    %12 = arith.addf %7, %11 : vector<1x8xf32>
    %13 = math.rsqrt %12 : vector<1x8xf32>
    %14 = vector.broadcast %13 : vector<1x8xf32> to vector<16x8xf32>
    %15 = arith.mulf %10, %14 : vector<16x8xf32>
    %c0_7 = arith.constant 0 : index
    %c0_8 = arith.constant 0 : index
    %16 = vector.load %arg5[%c0_7, %c0_8] : memref<16x8xf32, #tpu.memory_space<vmem>>, vector<16x8xf32>
    tpu.vector_store %arg5[%c0_7, %c0_8], %15 {strides = array<i32>} : memref<16x8xf32, #tpu.memory_space<vmem>>, vector<16x8xf32>,
    return
  }
  func.func @transform_0(%arg0: i32, %arg1: i32) -> (i32, i32) {
    %c0_i32 = arith.constant 0 : i32
    return %arg0, %arg1 : i32, i32
  }
  func.func @transform_1(%arg0: i32, %arg1: i32) -> (i32, i32) {
    %c0_i32 = arith.constant 0 : i32
    %c0_i32_0 = arith.constant 0 : i32
    return %c0_i32, %arg1 : i32, i32
  }
  func.func @transform_2(%arg0: i32, %arg1: i32) -> (i32, i32) {
    %c0_i32 = arith.constant 0 : i32
    %c0_i32_0 = arith.constant 0 : i32
    return %c0_i32, %arg1 : i32, i32
  }
  func.func @transform_3(%arg0: i32, %arg1: i32) -> (i32, i32) {
    %c0_i32 = arith.constant 0 : i32
    return %arg0, %arg1 : i32, i32
  }
}

module attributes {stable_mosaic.version = 11 : i64} {
  func.func @_mm_kernel(%arg0: i32, %arg1: i32, %arg2: i32, %arg3: memref<16x24xbf16, #tpu.memory_space<vmem>>, %arg4: memref<24x8xbf16, #tpu.memory_space<vmem>>, %arg5: memref<1x8xf32, #tpu.memory_space<vmem>>, %arg6: memref<16x8xf32, #tpu.memory_space<vmem>>, %arg7: memref<1x8xf32, #tpu.memory_space<vmem>>, %arg8: memref<1x8xf32, #tpu.memory_space<vmem>>, %arg9: memref<16x8xf32, #tpu.memory_space<vmem>>) attributes {dimension_semantics = [#tpu.dimension_semantics<parallel>, #tpu.dimension_semantics<arbitrary>, #tpu.dimension_semantics<arbitrary>], iteration_bounds = array<i64: 1, 1, 1>, scalar_prefetch = 0 : i64, scratch_operands = 1 : i64, tpu.core_type = #tpu.core_type<tc>, window_params = [{transform_indices = @transform_0, window_bounds = array<i64: 16, 24>}, {transform_indices = @transform_1, window_bounds = array<i64: 24, 8>}, {transform_indices = @transform_2, window_bounds = array<i64: 1, 8>}, {transform_indices = @transform_3, window_bounds = array<i64: 16, 8>}, {transform_indices = @transform_4, window_bounds = array<i64: 1, 8>}, {transform_indices = @transform_5, window_bounds = array<i64: 1, 8>}]} {
    %c0_i32 = arith.constant 0 : i32
    %0 = arith.cmpi eq, %arg2, %c0_i32 : i32
    %1 = arith.extui %0 : i1 to i32
    %c0_i32_0 = arith.constant 0 : i32
    %2 = arith.cmpi ne, %1, %c0_i32_0 : i32
    scf.if %2 {
      %cst_10 = arith.constant 0.000000e+00 : f32
      %12 = vector.broadcast %cst_10 : f32 to vector<16x8xf32>
      %c0_11 = arith.constant 0 : index
      %c0_12 = arith.constant 0 : index
      %13 = vector.load %arg9[%c0_11, %c0_12] : memref<16x8xf32, #tpu.memory_space<vmem>>, vector<16x8xf32>
      tpu.vector_store %arg9[%c0_11, %c0_12], %12 {strides = array<i32>} : memref<16x8xf32, #tpu.memory_space<vmem>>, vector<16x8xf32>,
    } else {
    }
    %c0 = arith.constant 0 : index
    %c0_1 = arith.constant 0 : index
    %3 = vector.load %arg9[%c0, %c0_1] : memref<16x8xf32, #tpu.memory_space<vmem>>, vector<16x8xf32>
    %c0_2 = arith.constant 0 : index
    %c0_3 = arith.constant 0 : index
    %4 = vector.load %arg3[%c0_2, %c0_3] : memref<16x24xbf16, #tpu.memory_space<vmem>>, vector<16x24xbf16>
    %c0_4 = arith.constant 0 : index
    %c0_5 = arith.constant 0 : index
    %5 = vector.load %arg4[%c0_4, %c0_5] : memref<24x8xbf16, #tpu.memory_space<vmem>>, vector<24x8xbf16>
    %cst = arith.constant dense<0.000000e+00> : vector<16x8xf32>
    %6 = tpu.matmul %4, %5, %cst {dimension_numbers = #tpu.dot_dimension_numbers<[1], [0], [0], [1], [0, 0, 1, 1], [], []>} : vector<16x24xbf16>, vector<24x8xbf16>, vector<16x8xf32> -> vector<16x8xf32>
    %7 = arith.addf %3, %6 : vector<16x8xf32>
    %c0_6 = arith.constant 0 : index
    %c0_7 = arith.constant 0 : index
    %8 = vector.load %arg9[%c0_6, %c0_7] : memref<16x8xf32, #tpu.memory_space<vmem>>, vector<16x8xf32>
    tpu.vector_store %arg9[%c0_6, %c0_7], %7 {strides = array<i32>} : memref<16x8xf32, #tpu.memory_space<vmem>>, vector<16x8xf32>,
    %c0_i32_8 = arith.constant 0 : i32
    %9 = arith.cmpi eq, %arg2, %c0_i32_8 : i32
    %10 = arith.extui %9 : i1 to i32
    %c0_i32_9 = arith.constant 0 : i32
    %11 = arith.cmpi ne, %10, %c0_i32_9 : i32
    scf.if %11 {
      %c0_10 = arith.constant 0 : index
      %c0_11 = arith.constant 0 : index
      %12 = vector.load %arg9[%c0_10, %c0_11] : memref<16x8xf32, #tpu.memory_space<vmem>>, vector<16x8xf32>
      %c0_12 = arith.constant 0 : index
      %c0_13 = arith.constant 0 : index
      %13 = vector.load %arg5[%c0_12, %c0_13] : memref<1x8xf32, #tpu.memory_space<vmem>>, vector<1x8xf32>
      %14 = vector.broadcast %13 : vector<1x8xf32> to vector<16x8xf32>
      %15 = arith.addf %12, %14 : vector<16x8xf32>
      %cst_14 = arith.constant 0.000000e+00 : f32
      %16 = vector.broadcast %cst_14 : f32 to vector<16x8xf32>
      %17 = arith.maximumf %15, %16 : vector<16x8xf32>
      %c0_15 = arith.constant 0 : index
      %c0_16 = arith.constant 0 : index
      %18 = vector.load %arg6[%c0_15, %c0_16] : memref<16x8xf32, #tpu.memory_space<vmem>>, vector<16x8xf32>
      tpu.vector_store %arg6[%c0_15, %c0_16], %17 {strides = array<i32>} : memref<16x8xf32, #tpu.memory_space<vmem>>, vector<16x8xf32>,
      %cst_17 = arith.constant dense<0.000000e+00> : vector<8xf32>
      %19 = vector.multi_reduction <add>, %17, %cst_17 [0] : vector<16x8xf32> to vector<8xf32>
      %20 = vector.shape_cast %19 : vector<8xf32> to vector<1x8xf32>
      %21 = arith.mulf %17, %17 : vector<16x8xf32>
      %cst_18 = arith.constant dense<0.000000e+00> : vector<8xf32>
      %22 = vector.multi_reduction <add>, %21, %cst_18 [0] : vector<16x8xf32> to vector<8xf32>
      %23 = vector.shape_cast %22 : vector<8xf32> to vector<1x8xf32>
      %c0_i32_19 = arith.constant 0 : i32
      %24 = arith.cmpi eq, %arg1, %c0_i32_19 : i32
      %c0_20 = arith.constant 0 : index
      %c0_21 = arith.constant 0 : index
      %25 = vector.load %arg7[%c0_20, %c0_21] : memref<1x8xf32, #tpu.memory_space<vmem>>, vector<1x8xf32>
      %26 = arith.addf %25, %20 : vector<1x8xf32>
      %27 = arith.select %24, %20, %26 : vector<1x8xf32>
      %c0_22 = arith.constant 0 : index
      %c0_23 = arith.constant 0 : index
      %28 = vector.load %arg7[%c0_22, %c0_23] : memref<1x8xf32, #tpu.memory_space<vmem>>, vector<1x8xf32>
      tpu.vector_store %arg7[%c0_22, %c0_23], %27 {strides = array<i32>} : memref<1x8xf32, #tpu.memory_space<vmem>>, vector<1x8xf32>,
      %c0_i32_24 = arith.constant 0 : i32
      %29 = arith.cmpi eq, %arg1, %c0_i32_24 : i32
      %c0_25 = arith.constant 0 : index
      %c0_26 = arith.constant 0 : index
      %30 = vector.load %arg8[%c0_25, %c0_26] : memref<1x8xf32, #tpu.memory_space<vmem>>, vector<1x8xf32>
      %31 = arith.addf %30, %23 : vector<1x8xf32>
      %32 = arith.select %29, %23, %31 : vector<1x8xf32>
      %c0_27 = arith.constant 0 : index
      %c0_28 = arith.constant 0 : index
      %33 = vector.load %arg8[%c0_27, %c0_28] : memref<1x8xf32, #tpu.memory_space<vmem>>, vector<1x8xf32>
      tpu.vector_store %arg8[%c0_27, %c0_28], %32 {strides = array<i32>} : memref<1x8xf32, #tpu.memory_space<vmem>>, vector<1x8xf32>,
    } else {
    }
    return
  }
  func.func @transform_0(%arg0: i32, %arg1: i32, %arg2: i32) -> (i32, i32) {
    %c0_i32 = arith.constant 0 : i32
    return %arg1, %arg2 : i32, i32
  }
  func.func @transform_1(%arg0: i32, %arg1: i32, %arg2: i32) -> (i32, i32) {
    %c0_i32 = arith.constant 0 : i32
    return %arg2, %arg0 : i32, i32
  }
  func.func @transform_2(%arg0: i32, %arg1: i32, %arg2: i32) -> (i32, i32) {
    %c0_i32 = arith.constant 0 : i32
    %c0_i32_0 = arith.constant 0 : i32
    return %c0_i32, %arg0 : i32, i32
  }
  func.func @transform_3(%arg0: i32, %arg1: i32, %arg2: i32) -> (i32, i32) {
    %c0_i32 = arith.constant 0 : i32
    return %arg1, %arg0 : i32, i32
  }
  func.func @transform_4(%arg0: i32, %arg1: i32, %arg2: i32) -> (i32, i32) {
    %c0_i32 = arith.constant 0 : i32
    %c0_i32_0 = arith.constant 0 : i32
    return %c0_i32, %arg0 : i32, i32
  }
  func.func @transform_5(%arg0: i32, %arg1: i32, %arg2: i32) -> (i32, i32) {
    %c0_i32 = arith.constant 0 : i32
    %c0_i32_0 = arith.constant 0 : i32
    return %c0_i32, %arg0 : i32, i32
  }
}

module attributes {stable_mosaic.version = 11 : i64} {
  func.func @_mm_kernel(%arg0: i32, %arg1: i32, %arg2: i32, %arg3: memref<18x16xbf16, #tpu.memory_space<vmem>>, %arg4: memref<16x16xbf16, #tpu.memory_space<vmem>>, %arg5: memref<1x16xf32, #tpu.memory_space<vmem>>, %arg6: memref<18x16xf32, #tpu.memory_space<vmem>>, %arg7: memref<18x16xf32, #tpu.memory_space<vmem>>) attributes {dimension_semantics = [#tpu.dimension_semantics<parallel>, #tpu.dimension_semantics<parallel>, #tpu.dimension_semantics<arbitrary>], iteration_bounds = array<i64: 1, 1, 1>, scalar_prefetch = 0 : i64, scratch_operands = 1 : i64, tpu.core_type = #tpu.core_type<tc>, window_params = [{transform_indices = @transform_0, window_bounds = array<i64: 18, 16>}, {transform_indices = @transform_1, window_bounds = array<i64: 16, 16>}, {transform_indices = @transform_2, window_bounds = array<i64: 1, 16>}, {transform_indices = @transform_3, window_bounds = array<i64: 18, 16>}]} {
    %c0_i32 = arith.constant 0 : i32
    %0 = arith.cmpi eq, %arg2, %c0_i32 : i32
    %1 = arith.extui %0 : i1 to i32
    %c0_i32_0 = arith.constant 0 : i32
    %2 = arith.cmpi ne, %1, %c0_i32_0 : i32
    scf.if %2 {
      %cst_10 = arith.constant 0.000000e+00 : f32
      %12 = vector.broadcast %cst_10 : f32 to vector<18x16xf32>
      %c0_11 = arith.constant 0 : index
      %c0_12 = arith.constant 0 : index
      %13 = vector.load %arg7[%c0_11, %c0_12] : memref<18x16xf32, #tpu.memory_space<vmem>>, vector<18x16xf32>
      tpu.vector_store %arg7[%c0_11, %c0_12], %12 {strides = array<i32>} : memref<18x16xf32, #tpu.memory_space<vmem>>, vector<18x16xf32>,
    } else {
    }
    %c0 = arith.constant 0 : index
    %c0_1 = arith.constant 0 : index
    %3 = vector.load %arg7[%c0, %c0_1] : memref<18x16xf32, #tpu.memory_space<vmem>>, vector<18x16xf32>
    %c0_2 = arith.constant 0 : index
    %c0_3 = arith.constant 0 : index
    %4 = vector.load %arg3[%c0_2, %c0_3] : memref<18x16xbf16, #tpu.memory_space<vmem>>, vector<18x16xbf16>
    %c0_4 = arith.constant 0 : index
    %c0_5 = arith.constant 0 : index
    %5 = vector.load %arg4[%c0_4, %c0_5] : memref<16x16xbf16, #tpu.memory_space<vmem>>, vector<16x16xbf16>
    %cst = arith.constant dense<0.000000e+00> : vector<18x16xf32>
    %6 = tpu.matmul %4, %5, %cst {dimension_numbers = #tpu.dot_dimension_numbers<[1], [0], [0], [1], [0, 0, 1, 1], [], []>} : vector<18x16xbf16>, vector<16x16xbf16>, vector<18x16xf32> -> vector<18x16xf32>
    %7 = arith.addf %3, %6 : vector<18x16xf32>
    %c0_6 = arith.constant 0 : index
    %c0_7 = arith.constant 0 : index
    %8 = vector.load %arg7[%c0_6, %c0_7] : memref<18x16xf32, #tpu.memory_space<vmem>>, vector<18x16xf32>
    tpu.vector_store %arg7[%c0_6, %c0_7], %7 {strides = array<i32>} : memref<18x16xf32, #tpu.memory_space<vmem>>, vector<18x16xf32>,
    %c0_i32_8 = arith.constant 0 : i32
    %9 = arith.cmpi eq, %arg2, %c0_i32_8 : i32
    %10 = arith.extui %9 : i1 to i32
    %c0_i32_9 = arith.constant 0 : i32
    %11 = arith.cmpi ne, %10, %c0_i32_9 : i32
    scf.if %11 {
      %c0_10 = arith.constant 0 : index
      %c0_11 = arith.constant 0 : index
      %12 = vector.load %arg7[%c0_10, %c0_11] : memref<18x16xf32, #tpu.memory_space<vmem>>, vector<18x16xf32>
      %c0_12 = arith.constant 0 : index
      %c0_13 = arith.constant 0 : index
      %13 = vector.load %arg5[%c0_12, %c0_13] : memref<1x16xf32, #tpu.memory_space<vmem>>, vector<1x16xf32>
      %14 = vector.broadcast %13 : vector<1x16xf32> to vector<18x16xf32>
      %15 = arith.addf %12, %14 : vector<18x16xf32>
      %c0_14 = arith.constant 0 : index
      %c0_15 = arith.constant 0 : index
      %16 = vector.load %arg6[%c0_14, %c0_15] : memref<18x16xf32, #tpu.memory_space<vmem>>, vector<18x16xf32>
      tpu.vector_store %arg6[%c0_14, %c0_15], %15 {strides = array<i32>} : memref<18x16xf32, #tpu.memory_space<vmem>>, vector<18x16xf32>,
    } else {
    }
    return
  }
  func.func @transform_0(%arg0: i32, %arg1: i32, %arg2: i32) -> (i32, i32) {
    %c0_i32 = arith.constant 0 : i32
    return %arg1, %arg2 : i32, i32
  }
  func.func @transform_1(%arg0: i32, %arg1: i32, %arg2: i32) -> (i32, i32) {
    %c0_i32 = arith.constant 0 : i32
    return %arg2, %arg0 : i32, i32
  }
  func.func @transform_2(%arg0: i32, %arg1: i32, %arg2: i32) -> (i32, i32) {
    %c0_i32 = arith.constant 0 : i32
    %c0_i32_0 = arith.constant 0 : i32
    return %c0_i32, %arg0 : i32, i32
  }
  func.func @transform_3(%arg0: i32, %arg1: i32, %arg2: i32) -> (i32, i32) {
    %c0_i32 = arith.constant 0 : i32
    return %arg1, %arg0 : i32, i32
  }
}

module attributes {stable_mosaic.version = 11 : i64} {
  func.func @_mm_kernel(%arg0: i32, %arg1: i32, %arg2: i32, %arg3: memref<32x8xbf16, #tpu.memory_space<vmem>>, %arg4: memref<8x128xbf16, #tpu.memory_space<vmem>>, %arg5: memref<1x128xf32, #tpu.memory_space<vmem>>, %arg6: memref<32x128xf32, #tpu.memory_space<vmem>>, %arg7: memref<32x128xf32, #tpu.memory_space<vmem>>) attributes {dimension_semantics = [#tpu.dimension_semantics<parallel>, #tpu.dimension_semantics<parallel>, #tpu.dimension_semantics<arbitrary>], iteration_bounds = array<i64: 1, 1, 1>, scalar_prefetch = 0 : i64, scratch_operands = 1 : i64, tpu.core_type = #tpu.core_type<tc>, window_params = [{transform_indices = @transform_0, window_bounds = array<i64: 32, 8>}, {transform_indices = @transform_1, window_bounds = array<i64: 8, 128>}, {transform_indices = @transform_2, window_bounds = array<i64: 1, 128>}, {transform_indices = @transform_3, window_bounds = array<i64: 32, 128>}]} {
    %c0_i32 = arith.constant 0 : i32
    %0 = arith.cmpi eq, %arg2, %c0_i32 : i32
    %1 = arith.extui %0 : i1 to i32
    %c0_i32_0 = arith.constant 0 : i32
    %2 = arith.cmpi ne, %1, %c0_i32_0 : i32
    scf.if %2 {
      %cst_10 = arith.constant 0.000000e+00 : f32
      %12 = vector.broadcast %cst_10 : f32 to vector<32x128xf32>
      %c0_11 = arith.constant 0 : index
      %c0_12 = arith.constant 0 : index
      %13 = vector.load %arg7[%c0_11, %c0_12] : memref<32x128xf32, #tpu.memory_space<vmem>>, vector<32x128xf32>
      tpu.vector_store %arg7[%c0_11, %c0_12], %12 {strides = array<i32>} : memref<32x128xf32, #tpu.memory_space<vmem>>, vector<32x128xf32>,
    } else {
    }
    %c0 = arith.constant 0 : index
    %c0_1 = arith.constant 0 : index
    %3 = vector.load %arg7[%c0, %c0_1] : memref<32x128xf32, #tpu.memory_space<vmem>>, vector<32x128xf32>
    %c0_2 = arith.constant 0 : index
    %c0_3 = arith.constant 0 : index
    %4 = vector.load %arg3[%c0_2, %c0_3] : memref<32x8xbf16, #tpu.memory_space<vmem>>, vector<32x8xbf16>
    %c0_4 = arith.constant 0 : index
    %c0_5 = arith.constant 0 : index
    %5 = vector.load %arg4[%c0_4, %c0_5] : memref<8x128xbf16, #tpu.memory_space<vmem>>, vector<8x128xbf16>
    %cst = arith.constant dense<0.000000e+00> : vector<32x128xf32>
    %6 = tpu.matmul %4, %5, %cst {dimension_numbers = #tpu.dot_dimension_numbers<[1], [0], [0], [1], [0, 0, 1, 1], [], []>} : vector<32x8xbf16>, vector<8x128xbf16>, vector<32x128xf32> -> vector<32x128xf32>
    %7 = arith.addf %3, %6 : vector<32x128xf32>
    %c0_6 = arith.constant 0 : index
    %c0_7 = arith.constant 0 : index
    %8 = vector.load %arg7[%c0_6, %c0_7] : memref<32x128xf32, #tpu.memory_space<vmem>>, vector<32x128xf32>
    tpu.vector_store %arg7[%c0_6, %c0_7], %7 {strides = array<i32>} : memref<32x128xf32, #tpu.memory_space<vmem>>, vector<32x128xf32>,
    %c0_i32_8 = arith.constant 0 : i32
    %9 = arith.cmpi eq, %arg2, %c0_i32_8 : i32
    %10 = arith.extui %9 : i1 to i32
    %c0_i32_9 = arith.constant 0 : i32
    %11 = arith.cmpi ne, %10, %c0_i32_9 : i32
    scf.if %11 {
      %c0_10 = arith.constant 0 : index
      %c0_11 = arith.constant 0 : index
      %12 = vector.load %arg7[%c0_10, %c0_11] : memref<32x128xf32, #tpu.memory_space<vmem>>, vector<32x128xf32>
      %c0_12 = arith.constant 0 : index
      %c0_13 = arith.constant 0 : index
      %13 = vector.load %arg5[%c0_12, %c0_13] : memref<1x128xf32, #tpu.memory_space<vmem>>, vector<1x128xf32>
      %14 = vector.broadcast %13 : vector<1x128xf32> to vector<32x128xf32>
      %15 = arith.addf %12, %14 : vector<32x128xf32>
      %c0_14 = arith.constant 0 : index
      %c0_15 = arith.constant 0 : index
      %16 = vector.load %arg6[%c0_14, %c0_15] : memref<32x128xf32, #tpu.memory_space<vmem>>, vector<32x128xf32>
      tpu.vector_store %arg6[%c0_14, %c0_15], %15 {strides = array<i32>} : memref<32x128xf32, #tpu.memory_space<vmem>>, vector<32x128xf32>,
    } else {
    }
    return
  }
  func.func @transform_0(%arg0: i32, %arg1: i32, %arg2: i32) -> (i32, i32) {
    %c0_i32 = arith.constant 0 : i32
    return %arg1, %arg2 : i32, i32
  }
  func.func @transform_1(%arg0: i32, %arg1: i32, %arg2: i32) -> (i32, i32) {
    %c0_i32 = arith.constant 0 : i32
    return %arg2, %arg0 : i32, i32
  }
  func.func @transform_2(%arg0: i32, %arg1: i32, %arg2: i32) -> (i32, i32) {
    %c0_i32 = arith.constant 0 : i32
    %c0_i32_0 = arith.constant 0 : i32
    return %c0_i32, %arg0 : i32, i32
  }
  func.func @transform_3(%arg0: i32, %arg1: i32, %arg2: i32) -> (i32, i32) {
    %c0_i32 = arith.constant 0 : i32
    return %arg1, %arg0 : i32, i32
  }
}

</mosaic_0001>

<llo_original>
// kernel: vaenet_forward.23
$region0: #{vaenet_forward.23}
  #allocation0 [shape = 'u32[]', space=smem, size = 0x4, offset = 0x4, fixed_abs, tag = 'smem constant byte address 0x4 - core index']
  #allocation1 [shape = 'u32[144,128]{1,0:T(1,128)}', space=vmem, size = 0x12000, scoped, tag = 'internal scratch']
  #allocation2 [shape = 'f32[32,8]{1,0:T(8,128)}', space=vmem, size = 0x4000, scoped, tag = 'scratch operand']
  %s0 = inlined_call_operand.vmem [shape: bf16[32,12], index: 0, kind: input, shape index: {}]
  %s1 = inlined_call_operand.vmem [shape: bf16[12,8], index: 1, kind: input, shape index: {}]
  %s2 = inlined_call_operand.vmem [shape: f32[1,8], index: 2, kind: input, shape index: {}]
  %s3 = inlined_call_operand.vmem [shape: f32[32,8], index: 3, kind: output, shape index: {}]
  %s4 = sld [smem:[#allocation0]]
  $region30: #{vaenet_forward.23} parent=0
    _
  %s6 = ssub.s32 1, %s4
  %s7 = scalar_select 0, %s6, %s4
  // Predicated region
  $region2: #{vaenet_forward.23} parent=0 // pred_check
    _
  $region3: #{vaenet_forward.23} parent=0 // pred_check_branch
    %9 = sbr.rel (0) target = $region5
  $region4: #{vaenet_forward.23} parent=0 // pred_region
    _
  $region5: #{vaenet_forward.23} parent=0 // pred_fallthru
    _
  // Predicated region
  $region6: #{vaenet_forward.23} parent=0 // pred_check
    _
  $region7: #{vaenet_forward.23} parent=0 // pred_check_branch
    %11 = sbr.rel (0) target = $region9
  $region8: #{vaenet_forward.23} parent=0 // pred_region
    _
  $region9: #{vaenet_forward.23} parent=0 // pred_fallthru
    _
  // Predicated region
  $region10: #{vaenet_forward.23} parent=0 // pred_check
    _
  $region11: #{vaenet_forward.23} parent=0 // pred_check_branch
    %13 = sbr.rel (0) target = $region13
  $region12: #{vaenet_forward.23} parent=0 // pred_region
    _
  $region13: #{vaenet_forward.23} parent=0 // pred_fallthru
    _
  %p15 = scmp.eq.s32.totalorder 0, 0
  // Predicated region
  $region14: #{vaenet_forward.23} parent=0 // pred_check
    %p16 = pneg %p15
  $region15: #{vaenet_forward.23} parent=0 // pred_check_branch
    %18 = sbr.rel (%p16) target = $region17
  $region16: #{vaenet_forward.23} parent=0 // pred_region
    %vm19 = vcmask 64512
    %20 = vst.msk [vmem:[#allocation2] sm:$0xff] %vm19, 0.0
    %21 = vst.msk [vmem:[#allocation2 + $0x8] sm:$0xff] %vm19, 0.0
    %22 = vst.msk [vmem:[#allocation2 + $0x10] sm:$0xff] %vm19, 0.0
    %23 = vst.msk [vmem:[#allocation2 + $0x18] sm:$0xff] %vm19, 0.0
  $region17: #{vaenet_forward.23} parent=0 // pred_fallthru
    _
  %v24 = vld [vmem:[#allocation2] sm:$0xff]
  %v25 = vld [vmem:[#allocation2 + $0x8] sm:$0xff]
  %v26 = vld [vmem:[#allocation2 + $0x10] sm:$0xff]
  %v27 = vld [vmem:[#allocation2 + $0x18] sm:$0xff]
  %v28 = vld [vmem:[%s0] sm:$0xf]
  %v29 = vld [vmem:[%s0 + $0x4] sm:$0xf]
  %v30 = vld [vmem:[%s0 + $0x8] sm:$0xf]
  %v31 = vld [vmem:[%s0 + $0xc] sm:$0xf]
  %v32 = vld [vmem:[%s1] sm:$0xf]
  %v33 = vld [vmem:[%s1 + $0x4] sm:$0x3]
  %v38 = vunpack.c.l.b16 %v28
  %v39 = vunpack.c.l.b16 %v29
  %v40 = vunpack.c.l.b16 %v30
  %v41 = vunpack.c.l.b16 %v31
  %v42 = vpack.c.b16 %v39, %v38
  %v43 = vpack.c.b16 %v41, %v40
  %v46 = vunpack.c.l.b16 %v32
  %v47 = vunpack.c.l.b16 %v33
  %v48 = vpack.c.b16 %v47, %v46
  %vm49 = vcmask 97280
  %v51 = vsel %vm49, %v42, 0
  %v54 = vsel %vm49, %v43, 0
  %vm56 = vcmask 1045504
  %v58 = vsel %vm56, %v48, 0
  %60 = vmatprep.subr.bf16.mxu0 0
  %61 = vmatpush1.bf16.msra.mxu0 %v58
  %62 = vmatprep.subr.bf16.mxu0 0
  %63 = vmatpush1.bf16.msra.mxu0 0
  %64 = vmatprep.subr.bf16.mxu0 0
  %65 = vmatpush1.bf16.msra.mxu0 0
  %66 = vmatprep.subr.bf16.mxu0 0
  %67 = vmatpush1.bf16.msra.mxu0 0
  %68 = vmatprep.subr.bf16.mxu0 0
  %69 = vmatpush1.bf16.msra.mxu0 0
  %70 = vmatprep.subr.bf16.mxu0 0
  %71 = vmatpush1.bf16.msra.mxu0 0
  %72 = vmatprep.subr.bf16.mxu0 0
  %73 = vmatpush1.bf16.msra.mxu0 0
  %74 = vmatprep.subr.bf16.mxu0 0
  %75 = vmatpush1.bf16.msra.mxu0 0
  %76 = vmatprep.subr.bf16.mxu0 0
  %77 = vmatpush1.bf16.msra.mxu0 0
  %78 = vmatprep.subr.bf16.mxu0 0
  %79 = vmatpush1.bf16.msra.mxu0 0
  %80 = vmatprep.subr.bf16.mxu0 0
  %81 = vmatpush1.bf16.msra.mxu0 0
  %82 = vmatprep.subr.bf16.mxu0 0
  %83 = vmatpush1.bf16.msra.mxu0 0
  %84 = vmatprep.subr.bf16.mxu0 0
  %85 = vmatpush1.bf16.msra.mxu0 0
  %86 = vmatprep.subr.bf16.mxu0 0
  %87 = vmatpush1.bf16.msra.mxu0 0
  %88 = vmatprep.subr.bf16.mxu0 0
  %89 = vmatpush1.bf16.msra.mxu0 0
  %90 = vmatprep.subr.bf16.mxu0 0
  %91 = vmatpush1.bf16.msra.mxu0 0
  %92 = vmatprep.mubr.bf16.mxu0 0
  %93 = vmatmul.mubr.bf16.gmra.mrb[0].mxu0 %v51
  %v94 = vpop.f32.mrb[0].mxu0
  %v95 = vadd.f32 0.0, %v94
  %v96 = vpop.f32.mrb[0].mxu0
  %v97 = vpop.f32.mrb[0].mxu0
  %v98 = vadd.f32 0.0, %v97
  %v99 = vpop.f32.mrb[0].mxu0
  %100 = vmatprep.mubr.bf16.mxu0 0
  %101 = vmatmul.mubr.bf16.gmra.mrb[0].mxu0 %v54
  %v102 = vpop.f32.mrb[0].mxu0
  %v103 = vadd.f32 0.0, %v102
  %v104 = vpop.f32.mrb[0].mxu0
  %v105 = vpop.f32.mrb[0].mxu0
  %v106 = vadd.f32 0.0, %v105
  %v107 = vpop.f32.mrb[0].mxu0
  %108 = vdwg.mxu0
  %v109 = vadd.f32 %v24, %v95
  %v110 = vadd.f32 %v25, %v98
  %v111 = vadd.f32 %v26, %v103
  %v112 = vadd.f32 %v27, %v106
  %vm113 = vcmask 64512
  %114 = vst.msk [vmem:[#allocation2] sm:$0xff] %vm113, %v109
  %115 = vst.msk [vmem:[#allocation2 + $0x8] sm:$0xff] %vm113, %v110
  %116 = vst.msk [vmem:[#allocation2 + $0x10] sm:$0xff] %vm113, %v111
  %117 = vst.msk [vmem:[#allocation2 + $0x18] sm:$0xff] %vm113, %v112
  // Predicated region
  $region18: #{vaenet_forward.23} parent=0 // pred_check
    %p118 = pneg %p15
  $region19: #{vaenet_forward.23} parent=0 // pred_check_branch
    %120 = sbr.rel (%p118) target = $region21
  $region20: #{vaenet_forward.23} parent=0 // pred_region
    %v121 = vld [vmem:[#allocation2] sm:$0xff]
    %v122 = vld [vmem:[#allocation2 + $0x8] sm:$0xff]
    %v123 = vld [vmem:[#allocation2 + $0x10] sm:$0xff]
    %v124 = vld [vmem:[#allocation2 + $0x18] sm:$0xff]
    %v125 = vld [vmem:[%s2] sm:$0x1]
    %v127 = vlaneseq
    %v128 = vshrl.u32 %v127, 7
    %v129 = vsub.s32 0, %v128
    %v130 = vrot.slane %v125, %v129
    %v132 = vadd.f32 %v121, %v130
    %v133 = vadd.f32 %v122, %v130
    %v134 = vadd.f32 %v123, %v130
    %v135 = vadd.f32 %v124, %v130
    %136 = vst.msk [vmem:[%s3] sm:$0xff] %vm113, %v132
    %137 = vst.msk [vmem:[%s3 + $0x8] sm:$0xff] %vm113, %v133
    %138 = vst.msk [vmem:[%s3 + $0x10] sm:$0xff] %vm113, %v134
    %139 = vst.msk [vmem:[%s3 + $0x18] sm:$0xff] %vm113, %v135
  $region21: #{vaenet_forward.23} parent=0 // pred_fallthru
    _
  // Predicated region
  $region22: #{vaenet_forward.23} parent=0 // pred_check
    _
  $region23: #{vaenet_forward.23} parent=0 // pred_check_branch
    %141 = sbr.rel (0) target = $region25
  $region24: #{vaenet_forward.23} parent=0 // pred_region
    _
  $region25: #{vaenet_forward.23} parent=0 // pred_fallthru
    _
  // Predicated region
  $region26: #{vaenet_forward.23} parent=0 // pred_check
    _
  $region27: #{vaenet_forward.23} parent=0 // pred_check_branch
    %143 = sbr.rel (0) target = $region29
  $region28: #{vaenet_forward.23} parent=0 // pred_region
    _
  $region29: #{vaenet_forward.23} parent=0 // pred_fallthru
    _

// kernel: vaenet_forward.25
$region0: #{vaenet_forward.25}
  #allocation0 [shape = 'u32[]', space=smem, size = 0x4, offset = 0x4, fixed_abs, tag = 'smem constant byte address 0x4 - core index']
  #allocation1 [shape = 'u32[144,128]{1,0:T(1,128)}', space=vmem, size = 0x12000, scoped, tag = 'internal scratch']
  %s0 = inlined_call_operand.vmem [shape: f32[32,16], index: 0, kind: input, shape index: {}]
  %s1 = inlined_call_operand.vmem [shape: f32[1,16], index: 1, kind: input, shape index: {}]
  %s2 = inlined_call_operand.vmem [shape: f32[1,16], index: 2, kind: input, shape index: {}]
  %s3 = inlined_call_operand.vmem [shape: f32[32,16], index: 3, kind: output, shape index: {}]
  %s4 = sld [smem:[#allocation0]]
  $region22: #{vaenet_forward.25} parent=0
    _
  %s6 = ssub.s32 1, %s4
  %s7 = scalar_select 0, %s6, %s4
  // Predicated region
  $region2: #{vaenet_forward.25} parent=0 // pred_check
    _
  $region3: #{vaenet_forward.25} parent=0 // pred_check_branch
    %9 = sbr.rel (0) target = $region5
  $region4: #{vaenet_forward.25} parent=0 // pred_region
    _
  $region5: #{vaenet_forward.25} parent=0 // pred_fallthru
    _
  // Predicated region
  $region6: #{vaenet_forward.25} parent=0 // pred_check
    _
  $region7: #{vaenet_forward.25} parent=0 // pred_check_branch
    %11 = sbr.rel (0) target = $region9
  $region8: #{vaenet_forward.25} parent=0 // pred_region
    _
  $region9: #{vaenet_forward.25} parent=0 // pred_fallthru
    _
  // Predicated region
  $region10: #{vaenet_forward.25} parent=0 // pred_check
    _
  $region11: #{vaenet_forward.25} parent=0 // pred_check_branch
    %13 = sbr.rel (0) target = $region13
  $region12: #{vaenet_forward.25} parent=0 // pred_region
    _
  $region13: #{vaenet_forward.25} parent=0 // pred_fallthru
    _
  %v14 = vld [vmem:[%s1] sm:$0x1]
  %v15 = vmul.f32 %v14, 0.03125
  %v16 = vld [vmem:[%s2] sm:$0x1]
  %v17 = vmul.f32 %v16, 0.03125
  %v18 = vmul.f32 %v15, %v15
  %v19 = vsub.f32 %v17, %v18
  %v20 = vld [vmem:[%s0] sm:$0xff]
  %v21 = vld [vmem:[%s0 + $0x8] sm:$0xff]
  %v22 = vld [vmem:[%s0 + $0x10] sm:$0xff]
  %v23 = vld [vmem:[%s0 + $0x18] sm:$0xff]
  %v25 = vlaneseq
  %v26 = vshrl.u32 %v25, 7
  %v27 = vsub.s32 0, %v26
  %v28 = vrot.slane %v15, %v27
  %v30 = vsub.f32 %v20, %v28
  %v31 = vsub.f32 %v21, %v28
  %v32 = vsub.f32 %v22, %v28
  %v33 = vsub.f32 %v23, %v28
  %v34 = vadd.f32 %v19, 1e-05
  %v35 = vrsqrt.pop %v34
  %v37 = vlaneseq
  %v38 = vshrl.u32 %v37, 7
  %v39 = vsub.s32 0, %v38
  %v40 = vrot.slane %v35, %v39
  %v42 = vmul.f32 %v30, %v40
  %v43 = vmul.f32 %v31, %v40
  %v44 = vmul.f32 %v32, %v40
  %v45 = vmul.f32 %v33, %v40
  %vm46 = vcmask 130048
  %47 = vst.msk [vmem:[%s3] sm:$0xff] %vm46, %v42
  %48 = vst.msk [vmem:[%s3 + $0x8] sm:$0xff] %vm46, %v43
  %49 = vst.msk [vmem:[%s3 + $0x10] sm:$0xff] %vm46, %v44
  %50 = vst.msk [vmem:[%s3 + $0x18] sm:$0xff] %vm46, %v45
  // Predicated region
  $region14: #{vaenet_forward.25} parent=0 // pred_check
    _
  $region15: #{vaenet_forward.25} parent=0 // pred_check_branch
    %52 = sbr.rel (0) target = $region17
  $region16: #{vaenet_forward.25} parent=0 // pred_region
    _
  $region17: #{vaenet_forward.25} parent=0 // pred_fallthru
    _
  // Predicated region
  $region18: #{vaenet_forward.25} parent=0 // pred_check
    _
  $region19: #{vaenet_forward.25} parent=0 // pred_check_branch
    %54 = sbr.rel (0) target = $region21
  $region20: #{vaenet_forward.25} parent=0 // pred_region
    _
  $region21: #{vaenet_forward.25} parent=0 // pred_fallthru
    _

// kernel: vaenet_forward.24
$region0: #{vaenet_forward.24}
  #allocation0 [shape = 'u32[]', space=smem, size = 0x4, offset = 0x4, fixed_abs, tag = 'smem constant byte address 0x4 - core index']
  #allocation1 [shape = 'u32[144,128]{1,0:T(1,128)}', space=vmem, size = 0x12000, scoped, tag = 'internal scratch']
  #allocation2 [shape = 'f32[32,16]{1,0:T(8,128)}', space=vmem, size = 0x4000, scoped, tag = 'scratch operand']
  %s0 = inlined_call_operand.vmem [shape: bf16[32,24], index: 0, kind: input, shape index: {}]
  %s1 = inlined_call_operand.vmem [shape: bf16[24,16], index: 1, kind: input, shape index: {}]
  %s2 = inlined_call_operand.vmem [shape: f32[1,16], index: 2, kind: input, shape index: {}]
  %s3 = inlined_call_operand.vmem [shape: f32[32,16], index: 3, kind: output, shape index: {0}]
  %s4 = inlined_call_operand.vmem [shape: f32[1,16], index: 4, kind: output, shape index: {1}]
  %s5 = inlined_call_operand.vmem [shape: f32[1,16], index: 5, kind: output, shape index: {2}]
  %6 = xla_tuple %s3, %s4, %s5
  %s7 = sld [smem:[#allocation0]]
  $region46: #{vaenet_forward.24} parent=0
    _
  %s9 = ssub.s32 1, %s7
  %s10 = scalar_select 0, %s9, %s7
  // Predicated region
  $region2: #{vaenet_forward.24} parent=0 // pred_check
    _
  $region3: #{vaenet_forward.24} parent=0 // pred_check_branch
    %12 = sbr.rel (0) target = $region5
  $region4: #{vaenet_forward.24} parent=0 // pred_region
    _
  $region5: #{vaenet_forward.24} parent=0 // pred_fallthru
    _
  // Predicated region
  $region6: #{vaenet_forward.24} parent=0 // pred_check
    _
  $region7: #{vaenet_forward.24} parent=0 // pred_check_branch
    %14 = sbr.rel (0) target = $region9
  $region8: #{vaenet_forward.24} parent=0 // pred_region
    _
  $region9: #{vaenet_forward.24} parent=0 // pred_fallthru
    _
  // Predicated region
  $region10: #{vaenet_forward.24} parent=0 // pred_check
    _
  $region11: #{vaenet_forward.24} parent=0 // pred_check_branch
    %16 = sbr.rel (0) target = $region13
  $region12: #{vaenet_forward.24} parent=0 // pred_region
    _
  $region13: #{vaenet_forward.24} parent=0 // pred_fallthru
    _
  %p18 = scmp.eq.s32.totalorder 0, 0
  // Predicated region
  $region14: #{vaenet_forward.24} parent=0 // pred_check
    %p19 = pneg %p18
  $region15: #{vaenet_forward.24} parent=0 // pred_check_branch
    %21 = sbr.rel (%p19) target = $region17
  $region16: #{vaenet_forward.24} parent=0 // pred_region
    %vm22 = vcmask 130048
    %23 = vst.msk [vmem:[#allocation2] sm:$0xff] %vm22, 0.0
    %24 = vst.msk [vmem:[#allocation2 + $0x8] sm:$0xff] %vm22, 0.0
    %25 = vst.msk [vmem:[#allocation2 + $0x10] sm:$0xff] %vm22, 0.0
    %26 = vst.msk [vmem:[#allocation2 + $0x18] sm:$0xff] %vm22, 0.0
  $region17: #{vaenet_forward.24} parent=0 // pred_fallthru
    _
  %v27 = vld [vmem:[#allocation2] sm:$0xff]
  %v28 = vld [vmem:[#allocation2 + $0x8] sm:$0xff]
  %v29 = vld [vmem:[#allocation2 + $0x10] sm:$0xff]
  %v30 = vld [vmem:[#allocation2 + $0x18] sm:$0xff]
  %v31 = vld [vmem:[%s0] sm:$0xf]
  %v32 = vld [vmem:[%s0 + $0x4] sm:$0xf]
  %v33 = vld [vmem:[%s0 + $0x8] sm:$0xf]
  %v34 = vld [vmem:[%s0 + $0xc] sm:$0xf]
  %v35 = vld [vmem:[%s1] sm:$0xf]
  %v36 = vld [vmem:[%s1 + $0x4] sm:$0xf]
  %v37 = vld [vmem:[%s1 + $0x8] sm:$0xf]
  %v42 = vunpack.c.l.b16 %v31
  %v43 = vunpack.c.l.b16 %v32
  %v44 = vunpack.c.l.b16 %v33
  %v45 = vunpack.c.l.b16 %v34
  %v46 = vpack.c.b16 %v43, %v42
  %v47 = vpack.c.b16 %v45, %v44
  %v51 = vunpack.c.l.b16 %v35
  %v52 = vunpack.c.l.b16 %v36
  %v53 = vunpack.c.l.b16 %v37
  %v54 = vpack.c.b16 %v52, %v51
  %v55 = vpack.c.b16 %v53, %v53
  %vm57 = vcmask 195584
  %v59 = vsel %vm57, %v46, 0
  %v62 = vsel %vm57, %v47, 0
  %vm64 = vcmask 1043456
  %v66 = vsel %vm64, %v55, 0
  %68 = vmatprep.subr.bf16.mxu0 0
  %69 = vmatpush1.bf16.msra.mxu0 %v54
  %70 = vmatprep.subr.bf16.mxu0 0
  %71 = vmatpush1.bf16.msra.mxu0 %v66
  %72 = vmatprep.subr.bf16.mxu0 0
  %73 = vmatpush1.bf16.msra.mxu0 0
  %74 = vmatprep.subr.bf16.mxu0 0
  %75 = vmatpush1.bf16.msra.mxu0 0
  %76 = vmatprep.subr.bf16.mxu0 0
  %77 = vmatpush1.bf16.msra.mxu0 0
  %78 = vmatprep.subr.bf16.mxu0 0
  %79 = vmatpush1.bf16.msra.mxu0 0
  %80 = vmatprep.subr.bf16.mxu0 0
  %81 = vmatpush1.bf16.msra.mxu0 0
  %82 = vmatprep.subr.bf16.mxu0 0
  %83 = vmatpush1.bf16.msra.mxu0 0
  %84 = vmatprep.subr.bf16.mxu0 0
  %85 = vmatpush1.bf16.msra.mxu0 0
  %86 = vmatprep.subr.bf16.mxu0 0
  %87 = vmatpush1.bf16.msra.mxu0 0
  %88 = vmatprep.subr.bf16.mxu0 0
  %89 = vmatpush1.bf16.msra.mxu0 0
  %90 = vmatprep.subr.bf16.mxu0 0
  %91 = vmatpush1.bf16.msra.mxu0 0
  %92 = vmatprep.subr.bf16.mxu0 0
  %93 = vmatpush1.bf16.msra.mxu0 0
  %94 = vmatprep.subr.bf16.mxu0 0
  %95 = vmatpush1.bf16.msra.mxu0 0
  %96 = vmatprep.subr.bf16.mxu0 0
  %97 = vmatpush1.bf16.msra.mxu0 0
  %98 = vmatprep.subr.bf16.mxu0 0
  %99 = vmatpush1.bf16.msra.mxu0 0
  %100 = vmatprep.mubr.bf16.mxu0 0
  %101 = vmatmul.mubr.bf16.gmra.mrb[0].mxu0 %v59
  %v102 = vpop.f32.mrb[0].mxu0
  %v103 = vadd.f32 0.0, %v102
  %v104 = vpop.f32.mrb[0].mxu0
  %v105 = vpop.f32.mrb[0].mxu0
  %v106 = vadd.f32 0.0, %v105
  %v107 = vpop.f32.mrb[0].mxu0
  %108 = vmatprep.mubr.bf16.mxu0 0
  %109 = vmatmul.mubr.bf16.gmra.mrb[0].mxu0 %v62
  %v110 = vpop.f32.mrb[0].mxu0
  %v111 = vadd.f32 0.0, %v110
  %v112 = vpop.f32.mrb[0].mxu0
  %v113 = vpop.f32.mrb[0].mxu0
  %v114 = vadd.f32 0.0, %v113
  %v115 = vpop.f32.mrb[0].mxu0
  %116 = vdwg.mxu0
  %v117 = vadd.f32 %v27, %v103
  %v118 = vadd.f32 %v28, %v106
  %v119 = vadd.f32 %v29, %v111
  %v120 = vadd.f32 %v30, %v114
  %vm121 = vcmask 130048
  %122 = vst.msk [vmem:[#allocation2] sm:$0xff] %vm121, %v117
  %123 = vst.msk [vmem:[#allocation2 + $0x8] sm:$0xff] %vm121, %v118
  %124 = vst.msk [vmem:[#allocation2 + $0x10] sm:$0xff] %vm121, %v119
  %125 = vst.msk [vmem:[#allocation2 + $0x18] sm:$0xff] %vm121, %v120
  // Predicated region
  $region18: #{vaenet_forward.24} parent=0 // pred_check
    %p126 = pneg %p18
  $region19: #{vaenet_forward.24} parent=0 // pred_check_branch
    %128 = sbr.rel (%p126) target = $region21
  $region20: #{vaenet_forward.24} parent=0 // pred_region
    %v129 = vld [vmem:[#allocation2] sm:$0xff]
    %v130 = vld [vmem:[#allocation2 + $0x8] sm:$0xff]
    %v131 = vld [vmem:[#allocation2 + $0x10] sm:$0xff]
    %v132 = vld [vmem:[#allocation2 + $0x18] sm:$0xff]
    %v133 = vld [vmem:[%s2] sm:$0x1]
    %v135 = vlaneseq
    %v136 = vshrl.u32 %v135, 7
    %v137 = vsub.s32 0, %v136
    %v138 = vrot.slane %v133, %v137
    %v140 = vadd.f32 %v129, %v138
    %v141 = vadd.f32 %v130, %v138
    %v142 = vadd.f32 %v131, %v138
    %v143 = vadd.f32 %v132, %v138
    %v144 = vmax.f32 %v140, 0.0
    %v145 = vmax.f32 %v141, 0.0
    %v146 = vmax.f32 %v142, 0.0
    %v147 = vmax.f32 %v143, 0.0
    %148 = vst.msk [vmem:[%s3] sm:$0xff] %vm121, %v144
    %149 = vst.msk [vmem:[%s3 + $0x8] sm:$0xff] %vm121, %v145
    %150 = vst.msk [vmem:[%s3 + $0x10] sm:$0xff] %vm121, %v146
    %151 = vst.msk [vmem:[%s3 + $0x18] sm:$0xff] %vm121, %v147
    %v152 = vsel %vm121, %v144, 0.0
    %v153 = vsel %vm121, %v145, 0.0
    %v154 = vadd.f32 %v152, %v153
    %v155 = vsel %vm121, %v146, 0.0
    %v156 = vadd.f32 %v154, %v155
    %v157 = vsel %vm121, %v147, 0.0
    %v158 = vadd.f32 %v156, %v157
    %v159 = vrot.slane %v158, 4
    %v160 = vadd.f32 %v158, %v159
    %v161 = vrot.slane %v160, 2
    %v162 = vadd.f32 %v160, %v161
    %v163 = vrot.slane %v162, 1
    %v164 = vadd.f32 %v162, %v163
    %v165 = vmul.f32 %v144, %v144
    %v166 = vmul.f32 %v145, %v145
    %v167 = vmul.f32 %v146, %v146
    %v168 = vmul.f32 %v147, %v147
    %v169 = vsel %vm121, %v165, 0.0
    %v170 = vsel %vm121, %v166, 0.0
    %v171 = vadd.f32 %v169, %v170
    %v172 = vsel %vm121, %v167, 0.0
    %v173 = vadd.f32 %v171, %v172
    %v174 = vsel %vm121, %v168, 0.0
    %v175 = vadd.f32 %v173, %v174
    %v176 = vrot.slane %v175, 4
    %v177 = vadd.f32 %v175, %v176
    %v178 = vrot.slane %v177, 2
    %v179 = vadd.f32 %v177, %v178
    %v180 = vrot.slane %v179, 1
    %v181 = vadd.f32 %v179, %v180
    %p182 = scmp.eq.s32.totalorder 0, 0
    %v183 = vld [vmem:[%s4] sm:$0x1]
    %v184 = vadd.f32 %v183, %v164
    %s185 = scalar_select %p182, 1, 0
    %v186 = vstv %s185
    %vm187 = vcmp.eq.s32.totalorder %v186, 1
    %v188 = vsel %vm187, %v164, %v184
    %vm189 = vcmask 122880
    %190 = vst.msk [vmem:[%s4] sm:$0x1] %vm189, %v188
    %v191 = vld [vmem:[%s5] sm:$0x1]
    %v192 = vadd.f32 %v191, %v181
    %v193 = vsel %vm187, %v181, %v192
    %194 = vst.msk [vmem:[%s5] sm:$0x1] %vm189, %v193
  $region21: #{vaenet_forward.24} parent=0 // pred_fallthru
    _
  // Predicated region
  $region22: #{vaenet_forward.24} parent=0 // pred_check
    _
  $region23: #{vaenet_forward.24} parent=0 // pred_check_branch
    %196 = sbr.rel (0) target = $region25
  $region24: #{vaenet_forward.24} parent=0 // pred_region
    _
  $region25: #{vaenet_forward.24} parent=0 // pred_fallthru
    _
  // Predicated region
  $region26: #{vaenet_forward.24} parent=0 // pred_check
    _
  $region27: #{vaenet_forward.24} parent=0 // pred_check_branch
    %198 = sbr.rel (0) target = $region29
  $region28: #{vaenet_forward.24} parent=0 // pred_region
    _
  $region29: #{vaenet_forward.24} parent=0 // pred_fallthru
    _
  // Predicated region
  $region30: #{vaenet_forward.24} parent=0 // pred_check
    _
  $region31: #{vaenet_forward.24} parent=0 // pred_check_branch
    %200 = sbr.rel (0) target = $region33
  $region32: #{vaenet_forward.24} parent=0 // pred_region
    _
  $region33: #{vaenet_forward.24} parent=0 // pred_fallthru
    _
  // Predicated region
  $region34: #{vaenet_forward.24} parent=0 // pred_check
    _
  $region35: #{vaenet_forward.24} parent=0 // pred_check_branch
    %202 = sbr.rel (0) target = $region37
  $region36: #{vaenet_forward.24} parent=0 // pred_region
    _
  $region37: #{vaenet_forward.24} parent=0 // pred_fallthru
    _
  // Predicated region
  $region38: #{vaenet_forward.24} parent=0 // pred_check
    _
  $region39: #{vaenet_forward.24} parent=0 // pred_check_branch
    %204 = sbr.rel (0) target = $region41
  $region40: #{vaenet_forward.24} parent=0 // pred_region
    _
  $region41: #{vaenet_forward.24} parent=0 // pred_fallthru
    _
  // Predicated region
  $region42: #{vaenet_forward.24} parent=0 // pred_check
    _
  $region43: #{vaenet_forward.24} parent=0 // pred_check_branch
    %206 = sbr.rel (0) target = $region45
  $region44: #{vaenet_forward.24} parent=0 // pred_region
    _
  $region45: #{vaenet_forward.24} parent=0 // pred_fallthru
    _

// kernel: vaenet_forward.26
$region0: #{vaenet_forward.26}
  #allocation0 [shape = 'u32[]', space=smem, size = 0x4, offset = 0x4, fixed_abs, tag = 'smem constant byte address 0x4 - core index']
  #allocation1 [shape = 'u32[144,128]{1,0:T(1,128)}', space=vmem, size = 0x12000, scoped, tag = 'internal scratch']
  #allocation2 [shape = 'f32[32,16]{1,0:T(8,128)}', space=vmem, size = 0x4000, scoped, tag = 'scratch operand']
  %s0 = inlined_call_operand.vmem [shape: bf16[32,48], index: 0, kind: input, shape index: {}]
  %s1 = inlined_call_operand.vmem [shape: bf16[48,16], index: 1, kind: input, shape index: {}]
  %s2 = inlined_call_operand.vmem [shape: f32[1,16], index: 2, kind: input, shape index: {}]
  %s3 = inlined_call_operand.vmem [shape: f32[32,16], index: 3, kind: output, shape index: {0}]
  %s4 = inlined_call_operand.vmem [shape: f32[1,16], index: 4, kind: output, shape index: {1}]
  %s5 = inlined_call_operand.vmem [shape: f32[1,16], index: 5, kind: output, shape index: {2}]
  %6 = xla_tuple %s3, %s4, %s5
  %s7 = sld [smem:[#allocation0]]
  $region46: #{vaenet_forward.26} parent=0
    _
  %s9 = ssub.s32 1, %s7
  %s10 = scalar_select 0, %s9, %s7
  // Predicated region
  $region2: #{vaenet_forward.26} parent=0 // pred_check
    _
  $region3: #{vaenet_forward.26} parent=0 // pred_check_branch
    %12 = sbr.rel (0) target = $region5
  $region4: #{vaenet_forward.26} parent=0 // pred_region
    _
  $region5: #{vaenet_forward.26} parent=0 // pred_fallthru
    _
  // Predicated region
  $region6: #{vaenet_forward.26} parent=0 // pred_check
    _
  $region7: #{vaenet_forward.26} parent=0 // pred_check_branch
    %14 = sbr.rel (0) target = $region9
  $region8: #{vaenet_forward.26} parent=0 // pred_region
    _
  $region9: #{vaenet_forward.26} parent=0 // pred_fallthru
    _
  // Predicated region
  $region10: #{vaenet_forward.26} parent=0 // pred_check
    _
  $region11: #{vaenet_forward.26} parent=0 // pred_check_branch
    %16 = sbr.rel (0) target = $region13
  $region12: #{vaenet_forward.26} parent=0 // pred_region
    _
  $region13: #{vaenet_forward.26} parent=0 // pred_fallthru
    _
  %p18 = scmp.eq.s32.totalorder 0, 0
  // Predicated region
  $region14: #{vaenet_forward.26} parent=0 // pred_check
    %p19 = pneg %p18
  $region15: #{vaenet_forward.26} parent=0 // pred_check_branch
    %21 = sbr.rel (%p19) target = $region17
  $region16: #{vaenet_forward.26} parent=0 // pred_region
    %vm22 = vcmask 130048
    %23 = vst.msk [vmem:[#allocation2] sm:$0xff] %vm22, 0.0
    %24 = vst.msk [vmem:[#allocation2 + $0x8] sm:$0xff] %vm22, 0.0
    %25 = vst.msk [vmem:[#allocation2 + $0x10] sm:$0xff] %vm22, 0.0
    %26 = vst.msk [vmem:[#allocation2 + $0x18] sm:$0xff] %vm22, 0.0
  $region17: #{vaenet_forward.26} parent=0 // pred_fallthru
    _
  %v27 = vld [vmem:[#allocation2] sm:$0xff]
  %v28 = vld [vmem:[#allocation2 + $0x8] sm:$0xff]
  %v29 = vld [vmem:[#allocation2 + $0x10] sm:$0xff]
  %v30 = vld [vmem:[#allocation2 + $0x18] sm:$0xff]
  %v31 = vld [vmem:[%s0] sm:$0xf]
  %v32 = vld [vmem:[%s0 + $0x4] sm:$0xf]
  %v33 = vld [vmem:[%s0 + $0x8] sm:$0xf]
  %v34 = vld [vmem:[%s0 + $0xc] sm:$0xf]
  %v35 = vld [vmem:[%s1] sm:$0xf]
  %v36 = vld [vmem:[%s1 + $0x4] sm:$0xf]
  %v37 = vld [vmem:[%s1 + $0x8] sm:$0xf]
  %v38 = vld [vmem:[%s1 + $0xc] sm:$0xf]
  %v39 = vld [vmem:[%s1 + $0x10] sm:$0xf]
  %v40 = vld [vmem:[%s1 + $0x14] sm:$0xf]
  %v45 = vunpack.c.l.b16 %v31
  %v46 = vunpack.c.l.b16 %v32
  %v47 = vunpack.c.l.b16 %v33
  %v48 = vunpack.c.l.b16 %v34
  %v49 = vpack.c.b16 %v46, %v45
  %v50 = vpack.c.b16 %v48, %v47
  %v57 = vunpack.c.l.b16 %v35
  %v58 = vunpack.c.l.b16 %v36
  %v59 = vunpack.c.l.b16 %v37
  %v60 = vunpack.c.l.b16 %v38
  %v61 = vunpack.c.l.b16 %v39
  %v62 = vunpack.c.l.b16 %v40
  %v63 = vpack.c.b16 %v58, %v57
  %v64 = vpack.c.b16 %v60, %v59
  %v65 = vpack.c.b16 %v62, %v61
  %vm69 = vcmask 392192
  %v71 = vsel %vm69, %v49, 0
  %v74 = vsel %vm69, %v50, 0
  %76 = vmatprep.subr.bf16.mxu0 0
  %77 = vmatpush1.bf16.msra.mxu0 %v63
  %78 = vmatprep.subr.bf16.mxu0 0
  %79 = vmatpush1.bf16.msra.mxu0 %v64
  %80 = vmatprep.subr.bf16.mxu0 0
  %81 = vmatpush1.bf16.msra.mxu0 %v65
  %82 = vmatprep.subr.bf16.mxu0 0
  %83 = vmatpush1.bf16.msra.mxu0 0
  %84 = vmatprep.subr.bf16.mxu0 0
  %85 = vmatpush1.bf16.msra.mxu0 0
  %86 = vmatprep.subr.bf16.mxu0 0
  %87 = vmatpush1.bf16.msra.mxu0 0
  %88 = vmatprep.subr.bf16.mxu0 0
  %89 = vmatpush1.bf16.msra.mxu0 0
  %90 = vmatprep.subr.bf16.mxu0 0
  %91 = vmatpush1.bf16.msra.mxu0 0
  %92 = vmatprep.subr.bf16.mxu0 0
  %93 = vmatpush1.bf16.msra.mxu0 0
  %94 = vmatprep.subr.bf16.mxu0 0
  %95 = vmatpush1.bf16.msra.mxu0 0
  %96 = vmatprep.subr.bf16.mxu0 0
  %97 = vmatpush1.bf16.msra.mxu0 0
  %98 = vmatprep.subr.bf16.mxu0 0
  %99 = vmatpush1.bf16.msra.mxu0 0
  %100 = vmatprep.subr.bf16.mxu0 0
  %101 = vmatpush1.bf16.msra.mxu0 0
  %102 = vmatprep.subr.bf16.mxu0 0
  %103 = vmatpush1.bf16.msra.mxu0 0
  %104 = vmatprep.subr.bf16.mxu0 0
  %105 = vmatpush1.bf16.msra.mxu0 0
  %106 = vmatprep.subr.bf16.mxu0 0
  %107 = vmatpush1.bf16.msra.mxu0 0
  %108 = vmatprep.mubr.bf16.mxu0 0
  %109 = vmatmul.mubr.bf16.gmra.mrb[0].mxu0 %v71
  %v110 = vpop.f32.mrb[0].mxu0
  %v111 = vadd.f32 0.0, %v110
  %v112 = vpop.f32.mrb[0].mxu0
  %v113 = vpop.f32.mrb[0].mxu0
  %v114 = vadd.f32 0.0, %v113
  %v115 = vpop.f32.mrb[0].mxu0
  %116 = vmatprep.mubr.bf16.mxu0 0
  %117 = vmatmul.mubr.bf16.gmra.mrb[0].mxu0 %v74
  %v118 = vpop.f32.mrb[0].mxu0
  %v119 = vadd.f32 0.0, %v118
  %v120 = vpop.f32.mrb[0].mxu0
  %v121 = vpop.f32.mrb[0].mxu0
  %v122 = vadd.f32 0.0, %v121
  %v123 = vpop.f32.mrb[0].mxu0
  %124 = vdwg.mxu0
  %v125 = vadd.f32 %v27, %v111
  %v126 = vadd.f32 %v28, %v114
  %v127 = vadd.f32 %v29, %v119
  %v128 = vadd.f32 %v30, %v122
  %vm129 = vcmask 130048
  %130 = vst.msk [vmem:[#allocation2] sm:$0xff] %vm129, %v125
  %131 = vst.msk [vmem:[#allocation2 + $0x8] sm:$0xff] %vm129, %v126
  %132 = vst.msk [vmem:[#allocation2 + $0x10] sm:$0xff] %vm129, %v127
  %133 = vst.msk [vmem:[#allocation2 + $0x18] sm:$0xff] %vm129, %v128
  // Predicated region
  $region18: #{vaenet_forward.26} parent=0 // pred_check
    %p134 = pneg %p18
  $region19: #{vaenet_forward.26} parent=0 // pred_check_branch
    %136 = sbr.rel (%p134) target = $region21
  $region20: #{vaenet_forward.26} parent=0 // pred_region
    %v137 = vld [vmem:[#allocation2] sm:$0xff]
    %v138 = vld [vmem:[#allocation2 + $0x8] sm:$0xff]
    %v139 = vld [vmem:[#allocation2 + $0x10] sm:$0xff]
    %v140 = vld [vmem:[#allocation2 + $0x18] sm:$0xff]
    %v141 = vld [vmem:[%s2] sm:$0x1]
    %v143 = vlaneseq
    %v144 = vshrl.u32 %v143, 7
    %v145 = vsub.s32 0, %v144
    %v146 = vrot.slane %v141, %v145
    %v148 = vadd.f32 %v137, %v146
    %v149 = vadd.f32 %v138, %v146
    %v150 = vadd.f32 %v139, %v146
    %v151 = vadd.f32 %v140, %v146
    %v152 = vmax.f32 %v148, 0.0
    %v153 = vmax.f32 %v149, 0.0
    %v154 = vmax.f32 %v150, 0.0
    %v155 = vmax.f32 %v151, 0.0
    %156 = vst.msk [vmem:[%s3] sm:$0xff] %vm129, %v152
    %157 = vst.msk [vmem:[%s3 + $0x8] sm:$0xff] %vm129, %v153
    %158 = vst.msk [vmem:[%s3 + $0x10] sm:$0xff] %vm129, %v154
    %159 = vst.msk [vmem:[%s3 + $0x18] sm:$0xff] %vm129, %v155
    %v160 = vsel %vm129, %v152, 0.0
    %v161 = vsel %vm129, %v153, 0.0
    %v162 = vadd.f32 %v160, %v161
    %v163 = vsel %vm129, %v154, 0.0
    %v164 = vadd.f32 %v162, %v163
    %v165 = vsel %vm129, %v155, 0.0
    %v166 = vadd.f32 %v164, %v165
    %v167 = vrot.slane %v166, 4
    %v168 = vadd.f32 %v166, %v167
    %v169 = vrot.slane %v168, 2
    %v170 = vadd.f32 %v168, %v169
    %v171 = vrot.slane %v170, 1
    %v172 = vadd.f32 %v170, %v171
    %v173 = vmul.f32 %v152, %v152
    %v174 = vmul.f32 %v153, %v153
    %v175 = vmul.f32 %v154, %v154
    %v176 = vmul.f32 %v155, %v155
    %v177 = vsel %vm129, %v173, 0.0
    %v178 = vsel %vm129, %v174, 0.0
    %v179 = vadd.f32 %v177, %v178
    %v180 = vsel %vm129, %v175, 0.0
    %v181 = vadd.f32 %v179, %v180
    %v182 = vsel %vm129, %v176, 0.0
    %v183 = vadd.f32 %v181, %v182
    %v184 = vrot.slane %v183, 4
    %v185 = vadd.f32 %v183, %v184
    %v186 = vrot.slane %v185, 2
    %v187 = vadd.f32 %v185, %v186
    %v188 = vrot.slane %v187, 1
    %v189 = vadd.f32 %v187, %v188
    %p190 = scmp.eq.s32.totalorder 0, 0
    %v191 = vld [vmem:[%s4] sm:$0x1]
    %v192 = vadd.f32 %v191, %v172
    %s193 = scalar_select %p190, 1, 0
    %v194 = vstv %s193
    %vm195 = vcmp.eq.s32.totalorder %v194, 1
    %v196 = vsel %vm195, %v172, %v192
    %vm197 = vcmask 122880
    %198 = vst.msk [vmem:[%s4] sm:$0x1] %vm197, %v196
    %v199 = vld [vmem:[%s5] sm:$0x1]
    %v200 = vadd.f32 %v199, %v189
    %v201 = vsel %vm195, %v189, %v200
    %202 = vst.msk [vmem:[%s5] sm:$0x1] %vm197, %v201
  $region21: #{vaenet_forward.26} parent=0 // pred_fallthru
    _
  // Predicated region
  $region22: #{vaenet_forward.26} parent=0 // pred_check
    _
  $region23: #{vaenet_forward.26} parent=0 // pred_check_branch
    %204 = sbr.rel (0) target = $region25
  $region24: #{vaenet_forward.26} parent=0 // pred_region
    _
  $region25: #{vaenet_forward.26} parent=0 // pred_fallthru
    _
  // Predicated region
  $region26: #{vaenet_forward.26} parent=0 // pred_check
    _
  $region27: #{vaenet_forward.26} parent=0 // pred_check_branch
    %206 = sbr.rel (0) target = $region29
  $region28: #{vaenet_forward.26} parent=0 // pred_region
    _
  $region29: #{vaenet_forward.26} parent=0 // pred_fallthru
    _
  // Predicated region
  $region30: #{vaenet_forward.26} parent=0 // pred_check
    _
  $region31: #{vaenet_forward.26} parent=0 // pred_check_branch
    %208 = sbr.rel (0) target = $region33
  $region32: #{vaenet_forward.26} parent=0 // pred_region
    _
  $region33: #{vaenet_forward.26} parent=0 // pred_fallthru
    _
  // Predicated region
  $region34: #{vaenet_forward.26} parent=0 // pred_check
    _
  $region35: #{vaenet_forward.26} parent=0 // pred_check_branch
    %210 = sbr.rel (0) target = $region37
  $region36: #{vaenet_forward.26} parent=0 // pred_region
    _
  $region37: #{vaenet_forward.26} parent=0 // pred_fallthru
    _
  // Predicated region
  $region38: #{vaenet_forward.26} parent=0 // pred_check
    _
  $region39: #{vaenet_forward.26} parent=0 // pred_check_branch
    %212 = sbr.rel (0) target = $region41
  $region40: #{vaenet_forward.26} parent=0 // pred_region
    _
  $region41: #{vaenet_forward.26} parent=0 // pred_fallthru
    _
  // Predicated region
  $region42: #{vaenet_forward.26} parent=0 // pred_check
    _
  $region43: #{vaenet_forward.26} parent=0 // pred_check_branch
    %214 = sbr.rel (0) target = $region45
  $region44: #{vaenet_forward.26} parent=0 // pred_region
    _
  $region45: #{vaenet_forward.26} parent=0 // pred_fallthru
    _

// kernel: vaenet_forward.28
$region0: #{vaenet_forward.28}
  #allocation0 [shape = 'u32[]', space=smem, size = 0x4, offset = 0x4, fixed_abs, tag = 'smem constant byte address 0x4 - core index']
  #allocation1 [shape = 'u32[144,128]{1,0:T(1,128)}', space=vmem, size = 0x12000, scoped, tag = 'internal scratch']
  #allocation2 [shape = 'f32[16,16]{1,0:T(8,128)}', space=vmem, size = 0x2000, scoped, tag = 'scratch operand']
  %s0 = inlined_call_operand.vmem [shape: bf16[16,64], index: 0, kind: input, shape index: {}]
  %s1 = inlined_call_operand.vmem [shape: bf16[64,16], index: 1, kind: input, shape index: {}]
  %s2 = inlined_call_operand.vmem [shape: f32[1,16], index: 2, kind: input, shape index: {}]
  %s3 = inlined_call_operand.vmem [shape: f32[16,16], index: 3, kind: output, shape index: {}]
  %s4 = sld [smem:[#allocation0]]
  $region30: #{vaenet_forward.28} parent=0
    _
  %s6 = ssub.s32 1, %s4
  %s7 = scalar_select 0, %s6, %s4
  // Predicated region
  $region2: #{vaenet_forward.28} parent=0 // pred_check
    _
  $region3: #{vaenet_forward.28} parent=0 // pred_check_branch
    %9 = sbr.rel (0) target = $region5
  $region4: #{vaenet_forward.28} parent=0 // pred_region
    _
  $region5: #{vaenet_forward.28} parent=0 // pred_fallthru
    _
  // Predicated region
  $region6: #{vaenet_forward.28} parent=0 // pred_check
    _
  $region7: #{vaenet_forward.28} parent=0 // pred_check_branch
    %11 = sbr.rel (0) target = $region9
  $region8: #{vaenet_forward.28} parent=0 // pred_region
    _
  $region9: #{vaenet_forward.28} parent=0 // pred_fallthru
    _
  // Predicated region
  $region10: #{vaenet_forward.28} parent=0 // pred_check
    _
  $region11: #{vaenet_forward.28} parent=0 // pred_check_branch
    %13 = sbr.rel (0) target = $region13
  $region12: #{vaenet_forward.28} parent=0 // pred_region
    _
  $region13: #{vaenet_forward.28} parent=0 // pred_fallthru
    _
  %p15 = scmp.eq.s32.totalorder 0, 0
  // Predicated region
  $region14: #{vaenet_forward.28} parent=0 // pred_check
    %p16 = pneg %p15
  $region15: #{vaenet_forward.28} parent=0 // pred_check_branch
    %18 = sbr.rel (%p16) target = $region17
  $region16: #{vaenet_forward.28} parent=0 // pred_region
    %vm19 = vcmask 130048
    %20 = vst.msk [vmem:[#allocation2] sm:$0xff] %vm19, 0.0
    %21 = vst.msk [vmem:[#allocation2 + $0x8] sm:$0xff] %vm19, 0.0
  $region17: #{vaenet_forward.28} parent=0 // pred_fallthru
    _
  %v22 = vld [vmem:[#allocation2] sm:$0xff]
  %v23 = vld [vmem:[#allocation2 + $0x8] sm:$0xff]
  %v24 = vld [vmem:[%s0] sm:$0xf]
  %v25 = vld [vmem:[%s0 + $0x4] sm:$0xf]
  %v26 = vld [vmem:[%s1] sm:$0xf]
  %v27 = vld [vmem:[%s1 + $0x4] sm:$0xf]
  %v28 = vld [vmem:[%s1 + $0x8] sm:$0xf]
  %v29 = vld [vmem:[%s1 + $0xc] sm:$0xf]
  %v30 = vld [vmem:[%s1 + $0x10] sm:$0xf]
  %v31 = vld [vmem:[%s1 + $0x14] sm:$0xf]
  %v32 = vld [vmem:[%s1 + $0x18] sm:$0xf]
  %v33 = vld [vmem:[%s1 + $0x1c] sm:$0xf]
  %v36 = vunpack.c.l.b16 %v24
  %v37 = vunpack.c.l.b16 %v25
  %v38 = vpack.c.b16 %v37, %v36
  %v47 = vunpack.c.l.b16 %v26
  %v48 = vunpack.c.l.b16 %v27
  %v49 = vunpack.c.l.b16 %v28
  %v50 = vunpack.c.l.b16 %v29
  %v51 = vunpack.c.l.b16 %v30
  %v52 = vunpack.c.l.b16 %v31
  %v53 = vunpack.c.l.b16 %v32
  %v54 = vunpack.c.l.b16 %v33
  %v55 = vpack.c.b16 %v48, %v47
  %v56 = vpack.c.b16 %v50, %v49
  %v57 = vpack.c.b16 %v52, %v51
  %v58 = vpack.c.b16 %v54, %v53
  %vm63 = vcmask 523264
  %v65 = vsel %vm63, %v38, 0
  %67 = vmatprep.subr.bf16.mxu0 0
  %68 = vmatpush1.bf16.msra.mxu0 %v55
  %69 = vmatprep.subr.bf16.mxu0 0
  %70 = vmatpush1.bf16.msra.mxu0 %v56
  %71 = vmatprep.subr.bf16.mxu0 0
  %72 = vmatpush1.bf16.msra.mxu0 %v57
  %73 = vmatprep.subr.bf16.mxu0 0
  %74 = vmatpush1.bf16.msra.mxu0 %v58
  %75 = vmatprep.subr.bf16.mxu0 0
  %76 = vmatpush1.bf16.msra.mxu0 0
  %77 = vmatprep.subr.bf16.mxu0 0
  %78 = vmatpush1.bf16.msra.mxu0 0
  %79 = vmatprep.subr.bf16.mxu0 0
  %80 = vmatpush1.bf16.msra.mxu0 0
  %81 = vmatprep.subr.bf16.mxu0 0
  %82 = vmatpush1.bf16.msra.mxu0 0
  %83 = vmatprep.subr.bf16.mxu0 0
  %84 = vmatpush1.bf16.msra.mxu0 0
  %85 = vmatprep.subr.bf16.mxu0 0
  %86 = vmatpush1.bf16.msra.mxu0 0
  %87 = vmatprep.subr.bf16.mxu0 0
  %88 = vmatpush1.bf16.msra.mxu0 0
  %89 = vmatprep.subr.bf16.mxu0 0
  %90 = vmatpush1.bf16.msra.mxu0 0
  %91 = vmatprep.subr.bf16.mxu0 0
  %92 = vmatpush1.bf16.msra.mxu0 0
  %93 = vmatprep.subr.bf16.mxu0 0
  %94 = vmatpush1.bf16.msra.mxu0 0
  %95 = vmatprep.subr.bf16.mxu0 0
  %96 = vmatpush1.bf16.msra.mxu0 0
  %97 = vmatprep.subr.bf16.mxu0 0
  %98 = vmatpush1.bf16.msra.mxu0 0
  %99 = vmatprep.mubr.bf16.mxu0 0
  %100 = vmatmul.mubr.bf16.gmra.mrb[0].mxu0 %v65
  %v101 = vpop.f32.mrb[0].mxu0
  %v102 = vadd.f32 0.0, %v101
  %v103 = vpop.f32.mrb[0].mxu0
  %v104 = vpop.f32.mrb[0].mxu0
  %v105 = vadd.f32 0.0, %v104
  %v106 = vpop.f32.mrb[0].mxu0
  %107 = vdwg.mxu0
  %v108 = vadd.f32 %v22, %v102
  %v109 = vadd.f32 %v23, %v105
  %vm110 = vcmask 130048
  %111 = vst.msk [vmem:[#allocation2] sm:$0xff] %vm110, %v108
  %112 = vst.msk [vmem:[#allocation2 + $0x8] sm:$0xff] %vm110, %v109
  // Predicated region
  $region18: #{vaenet_forward.28} parent=0 // pred_check
    %p113 = pneg %p15
  $region19: #{vaenet_forward.28} parent=0 // pred_check_branch
    %115 = sbr.rel (%p113) target = $region21
  $region20: #{vaenet_forward.28} parent=0 // pred_region
    %v116 = vld [vmem:[#allocation2] sm:$0xff]
    %v117 = vld [vmem:[#allocation2 + $0x8] sm:$0xff]
    %v118 = vld [vmem:[%s2] sm:$0x1]
    %v120 = vlaneseq
    %v121 = vshrl.u32 %v120, 7
    %v122 = vsub.s32 0, %v121
    %v123 = vrot.slane %v118, %v122
    %v125 = vadd.f32 %v116, %v123
    %v126 = vadd.f32 %v117, %v123
    %127 = vst.msk [vmem:[%s3] sm:$0xff] %vm110, %v125
    %128 = vst.msk [vmem:[%s3 + $0x8] sm:$0xff] %vm110, %v126
  $region21: #{vaenet_forward.28} parent=0 // pred_fallthru
    _
  // Predicated region
  $region22: #{vaenet_forward.28} parent=0 // pred_check
    _
  $region23: #{vaenet_forward.28} parent=0 // pred_check_branch
    %130 = sbr.rel (0) target = $region25
  $region24: #{vaenet_forward.28} parent=0 // pred_region
    _
  $region25: #{vaenet_forward.28} parent=0 // pred_fallthru
    _
  // Predicated region
  $region26: #{vaenet_forward.28} parent=0 // pred_check
    _
  $region27: #{vaenet_forward.28} parent=0 // pred_check_branch
    %132 = sbr.rel (0) target = $region29
  $region28: #{vaenet_forward.28} parent=0 // pred_region
    _
  $region29: #{vaenet_forward.28} parent=0 // pred_fallthru
    _

// kernel: vaenet_forward.29
$region0: #{vaenet_forward.29}
  #allocation0 [shape = 'u32[]', space=smem, size = 0x4, offset = 0x4, fixed_abs, tag = 'smem constant byte address 0x4 - core index']
  #allocation1 [shape = 'u32[144,128]{1,0:T(1,128)}', space=vmem, size = 0x12000, scoped, tag = 'internal scratch']
  #allocation2 [shape = 'f32[16,32]{1,0:T(8,128)}', space=vmem, size = 0x2000, scoped, tag = 'scratch operand']
  %s0 = inlined_call_operand.vmem [shape: bf16[16,48], index: 0, kind: input, shape index: {}]
  %s1 = inlined_call_operand.vmem [shape: bf16[48,32], index: 1, kind: input, shape index: {}]
  %s2 = inlined_call_operand.vmem [shape: f32[1,32], index: 2, kind: input, shape index: {}]
  %s3 = inlined_call_operand.vmem [shape: f32[16,32], index: 3, kind: output, shape index: {0}]
  %s4 = inlined_call_operand.vmem [shape: f32[1,32], index: 4, kind: output, shape index: {1}]
  %s5 = inlined_call_operand.vmem [shape: f32[1,32], index: 5, kind: output, shape index: {2}]
  %6 = xla_tuple %s3, %s4, %s5
  %s7 = sld [smem:[#allocation0]]
  $region46: #{vaenet_forward.29} parent=0
    _
  %s9 = ssub.s32 1, %s7
  %s10 = scalar_select 0, %s9, %s7
  // Predicated region
  $region2: #{vaenet_forward.29} parent=0 // pred_check
    _
  $region3: #{vaenet_forward.29} parent=0 // pred_check_branch
    %12 = sbr.rel (0) target = $region5
  $region4: #{vaenet_forward.29} parent=0 // pred_region
    _
  $region5: #{vaenet_forward.29} parent=0 // pred_fallthru
    _
  // Predicated region
  $region6: #{vaenet_forward.29} parent=0 // pred_check
    _
  $region7: #{vaenet_forward.29} parent=0 // pred_check_branch
    %14 = sbr.rel (0) target = $region9
  $region8: #{vaenet_forward.29} parent=0 // pred_region
    _
  $region9: #{vaenet_forward.29} parent=0 // pred_fallthru
    _
  // Predicated region
  $region10: #{vaenet_forward.29} parent=0 // pred_check
    _
  $region11: #{vaenet_forward.29} parent=0 // pred_check_branch
    %16 = sbr.rel (0) target = $region13
  $region12: #{vaenet_forward.29} parent=0 // pred_region
    _
  $region13: #{vaenet_forward.29} parent=0 // pred_fallthru
    _
  %p18 = scmp.eq.s32.totalorder 0, 0
  // Predicated region
  $region14: #{vaenet_forward.29} parent=0 // pred_check
    %p19 = pneg %p18
  $region15: #{vaenet_forward.29} parent=0 // pred_check_branch
    %21 = sbr.rel (%p19) target = $region17
  $region16: #{vaenet_forward.29} parent=0 // pred_region
    %vm22 = vcmask 261120
    %23 = vst.msk [vmem:[#allocation2] sm:$0xff] %vm22, 0.0
    %24 = vst.msk [vmem:[#allocation2 + $0x8] sm:$0xff] %vm22, 0.0
  $region17: #{vaenet_forward.29} parent=0 // pred_fallthru
    _
  %v25 = vld [vmem:[#allocation2] sm:$0xff]
  %v26 = vld [vmem:[#allocation2 + $0x8] sm:$0xff]
  %v27 = vld [vmem:[%s0] sm:$0xf]
  %v28 = vld [vmem:[%s0 + $0x4] sm:$0xf]
  %v29 = vld [vmem:[%s1] sm:$0xf]
  %v30 = vld [vmem:[%s1 + $0x4] sm:$0xf]
  %v31 = vld [vmem:[%s1 + $0x8] sm:$0xf]
  %v32 = vld [vmem:[%s1 + $0xc] sm:$0xf]
  %v33 = vld [vmem:[%s1 + $0x10] sm:$0xf]
  %v34 = vld [vmem:[%s1 + $0x14] sm:$0xf]
  %v37 = vunpack.c.l.b16 %v27
  %v38 = vunpack.c.l.b16 %v28
  %v39 = vpack.c.b16 %v38, %v37
  %v46 = vunpack.c.l.b16 %v29
  %v47 = vunpack.c.l.b16 %v30
  %v48 = vunpack.c.l.b16 %v31
  %v49 = vunpack.c.l.b16 %v32
  %v50 = vunpack.c.l.b16 %v33
  %v51 = vunpack.c.l.b16 %v34
  %v52 = vpack.c.b16 %v47, %v46
  %v53 = vpack.c.b16 %v49, %v48
  %v54 = vpack.c.b16 %v51, %v50
  %vm58 = vcmask 392192
  %v60 = vsel %vm58, %v39, 0
  %62 = vmatprep.subr.bf16.mxu0 0
  %63 = vmatpush1.bf16.msra.mxu0 %v52
  %64 = vmatprep.subr.bf16.mxu0 0
  %65 = vmatpush1.bf16.msra.mxu0 %v53
  %66 = vmatprep.subr.bf16.mxu0 0
  %67 = vmatpush1.bf16.msra.mxu0 %v54
  %68 = vmatprep.subr.bf16.mxu0 0
  %69 = vmatpush1.bf16.msra.mxu0 0
  %70 = vmatprep.subr.bf16.mxu0 0
  %71 = vmatpush1.bf16.msra.mxu0 0
  %72 = vmatprep.subr.bf16.mxu0 0
  %73 = vmatpush1.bf16.msra.mxu0 0
  %74 = vmatprep.subr.bf16.mxu0 0
  %75 = vmatpush1.bf16.msra.mxu0 0
  %76 = vmatprep.subr.bf16.mxu0 0
  %77 = vmatpush1.bf16.msra.mxu0 0
  %78 = vmatprep.subr.bf16.mxu0 0
  %79 = vmatpush1.bf16.msra.mxu0 0
  %80 = vmatprep.subr.bf16.mxu0 0
  %81 = vmatpush1.bf16.msra.mxu0 0
  %82 = vmatprep.subr.bf16.mxu0 0
  %83 = vmatpush1.bf16.msra.mxu0 0
  %84 = vmatprep.subr.bf16.mxu0 0
  %85 = vmatpush1.bf16.msra.mxu0 0
  %86 = vmatprep.subr.bf16.mxu0 0
  %87 = vmatpush1.bf16.msra.mxu0 0
  %88 = vmatprep.subr.bf16.mxu0 0
  %89 = vmatpush1.bf16.msra.mxu0 0
  %90 = vmatprep.subr.bf16.mxu0 0
  %91 = vmatpush1.bf16.msra.mxu0 0
  %92 = vmatprep.subr.bf16.mxu0 0
  %93 = vmatpush1.bf16.msra.mxu0 0
  %94 = vmatprep.mubr.bf16.mxu0 0
  %95 = vmatmul.mubr.bf16.gmra.mrb[0].mxu0 %v60
  %v96 = vpop.f32.mrb[0].mxu0
  %v97 = vadd.f32 0.0, %v96
  %v98 = vpop.f32.mrb[0].mxu0
  %v99 = vpop.f32.mrb[0].mxu0
  %v100 = vadd.f32 0.0, %v99
  %v101 = vpop.f32.mrb[0].mxu0
  %102 = vdwg.mxu0
  %v103 = vadd.f32 %v25, %v97
  %v104 = vadd.f32 %v26, %v100
  %vm105 = vcmask 261120
  %106 = vst.msk [vmem:[#allocation2] sm:$0xff] %vm105, %v103
  %107 = vst.msk [vmem:[#allocation2 + $0x8] sm:$0xff] %vm105, %v104
  // Predicated region
  $region18: #{vaenet_forward.29} parent=0 // pred_check
    %p108 = pneg %p18
  $region19: #{vaenet_forward.29} parent=0 // pred_check_branch
    %110 = sbr.rel (%p108) target = $region21
  $region20: #{vaenet_forward.29} parent=0 // pred_region
    %v111 = vld [vmem:[#allocation2] sm:$0xff]
    %v112 = vld [vmem:[#allocation2 + $0x8] sm:$0xff]
    %v113 = vld [vmem:[%s2] sm:$0x1]
    %v115 = vlaneseq
    %v116 = vshrl.u32 %v115, 7
    %v117 = vsub.s32 0, %v116
    %v118 = vrot.slane %v113, %v117
    %v120 = vadd.f32 %v111, %v118
    %v121 = vadd.f32 %v112, %v118
    %v122 = vmax.f32 %v120, 0.0
    %v123 = vmax.f32 %v121, 0.0
    %124 = vst.msk [vmem:[%s3] sm:$0xff] %vm105, %v122
    %125 = vst.msk [vmem:[%s3 + $0x8] sm:$0xff] %vm105, %v123
    %v126 = vsel %vm105, %v122, 0.0
    %v127 = vsel %vm105, %v123, 0.0
    %v128 = vadd.f32 %v126, %v127
    %v129 = vrot.slane %v128, 4
    %v130 = vadd.f32 %v128, %v129
    %v131 = vrot.slane %v130, 2
    %v132 = vadd.f32 %v130, %v131
    %v133 = vrot.slane %v132, 1
    %v134 = vadd.f32 %v132, %v133
    %v135 = vmul.f32 %v122, %v122
    %v136 = vmul.f32 %v123, %v123
    %v137 = vsel %vm105, %v135, 0.0
    %v138 = vsel %vm105, %v136, 0.0
    %v139 = vadd.f32 %v137, %v138
    %v140 = vrot.slane %v139, 4
    %v141 = vadd.f32 %v139, %v140
    %v142 = vrot.slane %v141, 2
    %v143 = vadd.f32 %v141, %v142
    %v144 = vrot.slane %v143, 1
    %v145 = vadd.f32 %v143, %v144
    %p146 = scmp.eq.s32.totalorder 0, 0
    %v147 = vld [vmem:[%s4] sm:$0x1]
    %v148 = vadd.f32 %v147, %v134
    %s149 = scalar_select %p146, 1, 0
    %v150 = vstv %s149
    %vm151 = vcmp.eq.s32.totalorder %v150, 1
    %v152 = vsel %vm151, %v134, %v148
    %vm153 = vcmask 253952
    %154 = vst.msk [vmem:[%s4] sm:$0x1] %vm153, %v152
    %v155 = vld [vmem:[%s5] sm:$0x1]
    %v156 = vadd.f32 %v155, %v145
    %v157 = vsel %vm151, %v145, %v156
    %158 = vst.msk [vmem:[%s5] sm:$0x1] %vm153, %v157
  $region21: #{vaenet_forward.29} parent=0 // pred_fallthru
    _
  // Predicated region
  $region22: #{vaenet_forward.29} parent=0 // pred_check
    _
  $region23: #{vaenet_forward.29} parent=0 // pred_check_branch
    %160 = sbr.rel (0) target = $region25
  $region24: #{vaenet_forward.29} parent=0 // pred_region
    _
  $region25: #{vaenet_forward.29} parent=0 // pred_fallthru
    _
  // Predicated region
  $region26: #{vaenet_forward.29} parent=0 // pred_check
    _
  $region27: #{vaenet_forward.29} parent=0 // pred_check_branch
    %162 = sbr.rel (0) target = $region29
  $region28: #{vaenet_forward.29} parent=0 // pred_region
    _
  $region29: #{vaenet_forward.29} parent=0 // pred_fallthru
    _
  // Predicated region
  $region30: #{vaenet_forward.29} parent=0 // pred_check
    _
  $region31: #{vaenet_forward.29} parent=0 // pred_check_branch
    %164 = sbr.rel (0) target = $region33
  $region32: #{vaenet_forward.29} parent=0 // pred_region
    _
  $region33: #{vaenet_forward.29} parent=0 // pred_fallthru
    _
  // Predicated region
  $region34: #{vaenet_forward.29} parent=0 // pred_check
    _
  $region35: #{vaenet_forward.29} parent=0 // pred_check_branch
    %166 = sbr.rel (0) target = $region37
  $region36: #{vaenet_forward.29} parent=0 // pred_region
    _
  $region37: #{vaenet_forward.29} parent=0 // pred_fallthru
    _
  // Predicated region
  $region38: #{vaenet_forward.29} parent=0 // pred_check
    _
  $region39: #{vaenet_forward.29} parent=0 // pred_check_branch
    %168 = sbr.rel (0) target = $region41
  $region40: #{vaenet_forward.29} parent=0 // pred_region
    _
  $region41: #{vaenet_forward.29} parent=0 // pred_fallthru
    _
  // Predicated region
  $region42: #{vaenet_forward.29} parent=0 // pred_check
    _
  $region43: #{vaenet_forward.29} parent=0 // pred_check_branch
    %170 = sbr.rel (0) target = $region45
  $region44: #{vaenet_forward.29} parent=0 // pred_region
    _
  $region45: #{vaenet_forward.29} parent=0 // pred_fallthru
    _

// kernel: vaenet_forward.30
$region0: #{vaenet_forward.30}
  #allocation0 [shape = 'u32[]', space=smem, size = 0x4, offset = 0x4, fixed_abs, tag = 'smem constant byte address 0x4 - core index']
  #allocation1 [shape = 'u32[144,128]{1,0:T(1,128)}', space=vmem, size = 0x12000, scoped, tag = 'internal scratch']
  %s0 = inlined_call_operand.vmem [shape: f32[16,32], index: 0, kind: input, shape index: {}]
  %s1 = inlined_call_operand.vmem [shape: f32[1,32], index: 1, kind: input, shape index: {}]
  %s2 = inlined_call_operand.vmem [shape: f32[1,32], index: 2, kind: input, shape index: {}]
  %s3 = inlined_call_operand.vmem [shape: f32[16,32], index: 3, kind: output, shape index: {}]
  %s4 = sld [smem:[#allocation0]]
  $region22: #{vaenet_forward.30} parent=0
    _
  %s6 = ssub.s32 1, %s4
  %s7 = scalar_select 0, %s6, %s4
  // Predicated region
  $region2: #{vaenet_forward.30} parent=0 // pred_check
    _
  $region3: #{vaenet_forward.30} parent=0 // pred_check_branch
    %9 = sbr.rel (0) target = $region5
  $region4: #{vaenet_forward.30} parent=0 // pred_region
    _
  $region5: #{vaenet_forward.30} parent=0 // pred_fallthru
    _
  // Predicated region
  $region6: #{vaenet_forward.30} parent=0 // pred_check
    _
  $region7: #{vaenet_forward.30} parent=0 // pred_check_branch
    %11 = sbr.rel (0) target = $region9
  $region8: #{vaenet_forward.30} parent=0 // pred_region
    _
  $region9: #{vaenet_forward.30} parent=0 // pred_fallthru
    _
  // Predicated region
  $region10: #{vaenet_forward.30} parent=0 // pred_check
    _
  $region11: #{vaenet_forward.30} parent=0 // pred_check_branch
    %13 = sbr.rel (0) target = $region13
  $region12: #{vaenet_forward.30} parent=0 // pred_region
    _
  $region13: #{vaenet_forward.30} parent=0 // pred_fallthru
    _
  %v14 = vld [vmem:[%s1] sm:$0x1]
  %v15 = vmul.f32 %v14, 0.0625
  %v16 = vld [vmem:[%s2] sm:$0x1]
  %v17 = vmul.f32 %v16, 0.0625
  %v18 = vmul.f32 %v15, %v15
  %v19 = vsub.f32 %v17, %v18
  %v20 = vld [vmem:[%s0] sm:$0xff]
  %v21 = vld [vmem:[%s0 + $0x8] sm:$0xff]
  %v23 = vlaneseq
  %v24 = vshrl.u32 %v23, 7
  %v25 = vsub.s32 0, %v24
  %v26 = vrot.slane %v15, %v25
  %v28 = vsub.f32 %v20, %v26
  %v29 = vsub.f32 %v21, %v26
  %v30 = vadd.f32 %v19, 1e-05
  %v31 = vrsqrt.pop %v30
  %v33 = vlaneseq
  %v34 = vshrl.u32 %v33, 7
  %v35 = vsub.s32 0, %v34
  %v36 = vrot.slane %v31, %v35
  %v38 = vmul.f32 %v28, %v36
  %v39 = vmul.f32 %v29, %v36
  %vm40 = vcmask 261120
  %41 = vst.msk [vmem:[%s3] sm:$0xff] %vm40, %v38
  %42 = vst.msk [vmem:[%s3 + $0x8] sm:$0xff] %vm40, %v39
  // Predicated region
  $region14: #{vaenet_forward.30} parent=0 // pred_check
    _
  $region15: #{vaenet_forward.30} parent=0 // pred_check_branch
    %44 = sbr.rel (0) target = $region17
  $region16: #{vaenet_forward.30} parent=0 // pred_region
    _
  $region17: #{vaenet_forward.30} parent=0 // pred_fallthru
    _
  // Predicated region
  $region18: #{vaenet_forward.30} parent=0 // pred_check
    _
  $region19: #{vaenet_forward.30} parent=0 // pred_check_branch
    %46 = sbr.rel (0) target = $region21
  $region20: #{vaenet_forward.30} parent=0 // pred_region
    _
  $region21: #{vaenet_forward.30} parent=0 // pred_fallthru
    _

// kernel: vaenet_forward.31
$region0: #{vaenet_forward.31}
  #allocation0 [shape = 'u32[]', space=smem, size = 0x4, offset = 0x4, fixed_abs, tag = 'smem constant byte address 0x4 - core index']
  #allocation1 [shape = 'u32[144,128]{1,0:T(1,128)}', space=vmem, size = 0x12000, scoped, tag = 'internal scratch']
  #allocation2 [shape = 'f32[16,32]{1,0:T(8,128)}', space=vmem, size = 0x2000, scoped, tag = 'scratch operand']
  %s0 = inlined_call_operand.vmem [shape: bf16[16,96], index: 0, kind: input, shape index: {}]
  %s1 = inlined_call_operand.vmem [shape: bf16[96,32], index: 1, kind: input, shape index: {}]
  %s2 = inlined_call_operand.vmem [shape: f32[1,32], index: 2, kind: input, shape index: {}]
  %s3 = inlined_call_operand.vmem [shape: f32[16,32], index: 3, kind: output, shape index: {0}]
  %s4 = inlined_call_operand.vmem [shape: f32[1,32], index: 4, kind: output, shape index: {1}]
  %s5 = inlined_call_operand.vmem [shape: f32[1,32], index: 5, kind: output, shape index: {2}]
  %6 = xla_tuple %s3, %s4, %s5
  %s7 = sld [smem:[#allocation0]]
  $region46: #{vaenet_forward.31} parent=0
    _
  %s9 = ssub.s32 1, %s7
  %s10 = scalar_select 0, %s9, %s7
  // Predicated region
  $region2: #{vaenet_forward.31} parent=0 // pred_check
    _
  $region3: #{vaenet_forward.31} parent=0 // pred_check_branch
    %12 = sbr.rel (0) target = $region5
  $region4: #{vaenet_forward.31} parent=0 // pred_region
    _
  $region5: #{vaenet_forward.31} parent=0 // pred_fallthru
    _
  // Predicated region
  $region6: #{vaenet_forward.31} parent=0 // pred_check
    _
  $region7: #{vaenet_forward.31} parent=0 // pred_check_branch
    %14 = sbr.rel (0) target = $region9
  $region8: #{vaenet_forward.31} parent=0 // pred_region
    _
  $region9: #{vaenet_forward.31} parent=0 // pred_fallthru
    _
  // Predicated region
  $region10: #{vaenet_forward.31} parent=0 // pred_check
    _
  $region11: #{vaenet_forward.31} parent=0 // pred_check_branch
    %16 = sbr.rel (0) target = $region13
  $region12: #{vaenet_forward.31} parent=0 // pred_region
    _
  $region13: #{vaenet_forward.31} parent=0 // pred_fallthru
    _
  %p18 = scmp.eq.s32.totalorder 0, 0
  // Predicated region
  $region14: #{vaenet_forward.31} parent=0 // pred_check
    %p19 = pneg %p18
  $region15: #{vaenet_forward.31} parent=0 // pred_check_branch
    %21 = sbr.rel (%p19) target = $region17
  $region16: #{vaenet_forward.31} parent=0 // pred_region
    %vm22 = vcmask 261120
    %23 = vst.msk [vmem:[#allocation2] sm:$0xff] %vm22, 0.0
    %24 = vst.msk [vmem:[#allocation2 + $0x8] sm:$0xff] %vm22, 0.0
  $region17: #{vaenet_forward.31} parent=0 // pred_fallthru
    _
  %v25 = vld [vmem:[#allocation2] sm:$0xff]
  %v26 = vld [vmem:[#allocation2 + $0x8] sm:$0xff]
  %v27 = vld [vmem:[%s0] sm:$0xf]
  %v28 = vld [vmem:[%s0 + $0x4] sm:$0xf]
  %v29 = vld [vmem:[%s1] sm:$0xf]
  %v30 = vld [vmem:[%s1 + $0x4] sm:$0xf]
  %v31 = vld [vmem:[%s1 + $0x8] sm:$0xf]
  %v32 = vld [vmem:[%s1 + $0xc] sm:$0xf]
  %v33 = vld [vmem:[%s1 + $0x10] sm:$0xf]
  %v34 = vld [vmem:[%s1 + $0x14] sm:$0xf]
  %v35 = vld [vmem:[%s1 + $0x18] sm:$0xf]
  %v36 = vld [vmem:[%s1 + $0x1c] sm:$0xf]
  %v37 = vld [vmem:[%s1 + $0x20] sm:$0xf]
  %v38 = vld [vmem:[%s1 + $0x24] sm:$0xf]
  %v39 = vld [vmem:[%s1 + $0x28] sm:$0xf]
  %v40 = vld [vmem:[%s1 + $0x2c] sm:$0xf]
  %v43 = vunpack.c.l.b16 %v27
  %v44 = vunpack.c.l.b16 %v28
  %v45 = vpack.c.b16 %v44, %v43
  %v58 = vunpack.c.l.b16 %v29
  %v59 = vunpack.c.l.b16 %v30
  %v60 = vunpack.c.l.b16 %v31
  %v61 = vunpack.c.l.b16 %v32
  %v62 = vunpack.c.l.b16 %v33
  %v63 = vunpack.c.l.b16 %v34
  %v64 = vunpack.c.l.b16 %v35
  %v65 = vunpack.c.l.b16 %v36
  %v66 = vunpack.c.l.b16 %v37
  %v67 = vunpack.c.l.b16 %v38
  %v68 = vunpack.c.l.b16 %v39
  %v69 = vunpack.c.l.b16 %v40
  %v70 = vpack.c.b16 %v59, %v58
  %v71 = vpack.c.b16 %v61, %v60
  %v72 = vpack.c.b16 %v63, %v62
  %v73 = vpack.c.b16 %v65, %v64
  %v74 = vpack.c.b16 %v67, %v66
  %v75 = vpack.c.b16 %v69, %v68
  %vm82 = vcmask 785408
  %v84 = vsel %vm82, %v45, 0
  %86 = vmatprep.subr.bf16.mxu0 0
  %87 = vmatpush1.bf16.msra.mxu0 %v70
  %88 = vmatprep.subr.bf16.mxu0 0
  %89 = vmatpush1.bf16.msra.mxu0 %v71
  %90 = vmatprep.subr.bf16.mxu0 0
  %91 = vmatpush1.bf16.msra.mxu0 %v72
  %92 = vmatprep.subr.bf16.mxu0 0
  %93 = vmatpush1.bf16.msra.mxu0 %v73
  %94 = vmatprep.subr.bf16.mxu0 0
  %95 = vmatpush1.bf16.msra.mxu0 %v74
  %96 = vmatprep.subr.bf16.mxu0 0
  %97 = vmatpush1.bf16.msra.mxu0 %v75
  %98 = vmatprep.subr.bf16.mxu0 0
  %99 = vmatpush1.bf16.msra.mxu0 0
  %100 = vmatprep.subr.bf16.mxu0 0
  %101 = vmatpush1.bf16.msra.mxu0 0
  %102 = vmatprep.subr.bf16.mxu0 0
  %103 = vmatpush1.bf16.msra.mxu0 0
  %104 = vmatprep.subr.bf16.mxu0 0
  %105 = vmatpush1.bf16.msra.mxu0 0
  %106 = vmatprep.subr.bf16.mxu0 0
  %107 = vmatpush1.bf16.msra.mxu0 0
  %108 = vmatprep.subr.bf16.mxu0 0
  %109 = vmatpush1.bf16.msra.mxu0 0
  %110 = vmatprep.subr.bf16.mxu0 0
  %111 = vmatpush1.bf16.msra.mxu0 0
  %112 = vmatprep.subr.bf16.mxu0 0
  %113 = vmatpush1.bf16.msra.mxu0 0
  %114 = vmatprep.subr.bf16.mxu0 0
  %115 = vmatpush1.bf16.msra.mxu0 0
  %116 = vmatprep.subr.bf16.mxu0 0
  %117 = vmatpush1.bf16.msra.mxu0 0
  %118 = vmatprep.mubr.bf16.mxu0 0
  %119 = vmatmul.mubr.bf16.gmra.mrb[0].mxu0 %v84
  %v120 = vpop.f32.mrb[0].mxu0
  %v121 = vadd.f32 0.0, %v120
  %v122 = vpop.f32.mrb[0].mxu0
  %v123 = vpop.f32.mrb[0].mxu0
  %v124 = vadd.f32 0.0, %v123
  %v125 = vpop.f32.mrb[0].mxu0
  %126 = vdwg.mxu0
  %v127 = vadd.f32 %v25, %v121
  %v128 = vadd.f32 %v26, %v124
  %vm129 = vcmask 261120
  %130 = vst.msk [vmem:[#allocation2] sm:$0xff] %vm129, %v127
  %131 = vst.msk [vmem:[#allocation2 + $0x8] sm:$0xff] %vm129, %v128
  // Predicated region
  $region18: #{vaenet_forward.31} parent=0 // pred_check
    %p132 = pneg %p18
  $region19: #{vaenet_forward.31} parent=0 // pred_check_branch
    %134 = sbr.rel (%p132) target = $region21
  $region20: #{vaenet_forward.31} parent=0 // pred_region
    %v135 = vld [vmem:[#allocation2] sm:$0xff]
    %v136 = vld [vmem:[#allocation2 + $0x8] sm:$0xff]
    %v137 = vld [vmem:[%s2] sm:$0x1]
    %v139 = vlaneseq
    %v140 = vshrl.u32 %v139, 7
    %v141 = vsub.s32 0, %v140
    %v142 = vrot.slane %v137, %v141
    %v144 = vadd.f32 %v135, %v142
    %v145 = vadd.f32 %v136, %v142
    %v146 = vmax.f32 %v144, 0.0
    %v147 = vmax.f32 %v145, 0.0
    %148 = vst.msk [vmem:[%s3] sm:$0xff] %vm129, %v146
    %149 = vst.msk [vmem:[%s3 + $0x8] sm:$0xff] %vm129, %v147
    %v150 = vsel %vm129, %v146, 0.0
    %v151 = vsel %vm129, %v147, 0.0
    %v152 = vadd.f32 %v150, %v151
    %v153 = vrot.slane %v152, 4
    %v154 = vadd.f32 %v152, %v153
    %v155 = vrot.slane %v154, 2
    %v156 = vadd.f32 %v154, %v155
    %v157 = vrot.slane %v156, 1
    %v158 = vadd.f32 %v156, %v157
    %v159 = vmul.f32 %v146, %v146
    %v160 = vmul.f32 %v147, %v147
    %v161 = vsel %vm129, %v159, 0.0
    %v162 = vsel %vm129, %v160, 0.0
    %v163 = vadd.f32 %v161, %v162
    %v164 = vrot.slane %v163, 4
    %v165 = vadd.f32 %v163, %v164
    %v166 = vrot.slane %v165, 2
    %v167 = vadd.f32 %v165, %v166
    %v168 = vrot.slane %v167, 1
    %v169 = vadd.f32 %v167, %v168
    %p170 = scmp.eq.s32.totalorder 0, 0
    %v171 = vld [vmem:[%s4] sm:$0x1]
    %v172 = vadd.f32 %v171, %v158
    %s173 = scalar_select %p170, 1, 0
    %v174 = vstv %s173
    %vm175 = vcmp.eq.s32.totalorder %v174, 1
    %v176 = vsel %vm175, %v158, %v172
    %vm177 = vcmask 253952
    %178 = vst.msk [vmem:[%s4] sm:$0x1] %vm177, %v176
    %v179 = vld [vmem:[%s5] sm:$0x1]
    %v180 = vadd.f32 %v179, %v169
    %v181 = vsel %vm175, %v169, %v180
    %182 = vst.msk [vmem:[%s5] sm:$0x1] %vm177, %v181
  $region21: #{vaenet_forward.31} parent=0 // pred_fallthru
    _
  // Predicated region
  $region22: #{vaenet_forward.31} parent=0 // pred_check
    _
  $region23: #{vaenet_forward.31} parent=0 // pred_check_branch
    %184 = sbr.rel (0) target = $region25
  $region24: #{vaenet_forward.31} parent=0 // pred_region
    _
  $region25: #{vaenet_forward.31} parent=0 // pred_fallthru
    _
  // Predicated region
  $region26: #{vaenet_forward.31} parent=0 // pred_check
    _
  $region27: #{vaenet_forward.31} parent=0 // pred_check_branch
    %186 = sbr.rel (0) target = $region29
  $region28: #{vaenet_forward.31} parent=0 // pred_region
    _
  $region29: #{vaenet_forward.31} parent=0 // pred_fallthru
    _
  // Predicated region
  $region30: #{vaenet_forward.31} parent=0 // pred_check
    _
  $region31: #{vaenet_forward.31} parent=0 // pred_check_branch
    %188 = sbr.rel (0) target = $region33
  $region32: #{vaenet_forward.31} parent=0 // pred_region
    _
  $region33: #{vaenet_forward.31} parent=0 // pred_fallthru
    _
  // Predicated region
  $region34: #{vaenet_forward.31} parent=0 // pred_check
    _
  $region35: #{vaenet_forward.31} parent=0 // pred_check_branch
    %190 = sbr.rel (0) target = $region37
  $region36: #{vaenet_forward.31} parent=0 // pred_region
    _
  $region37: #{vaenet_forward.31} parent=0 // pred_fallthru
    _
  // Predicated region
  $region38: #{vaenet_forward.31} parent=0 // pred_check
    _
  $region39: #{vaenet_forward.31} parent=0 // pred_check_branch
    %192 = sbr.rel (0) target = $region41
  $region40: #{vaenet_forward.31} parent=0 // pred_region
    _
  $region41: #{vaenet_forward.31} parent=0 // pred_fallthru
    _
  // Predicated region
  $region42: #{vaenet_forward.31} parent=0 // pred_check
    _
  $region43: #{vaenet_forward.31} parent=0 // pred_check_branch
    %194 = sbr.rel (0) target = $region45
  $region44: #{vaenet_forward.31} parent=0 // pred_region
    _
  $region45: #{vaenet_forward.31} parent=0 // pred_fallthru
    _

// kernel: vaenet_forward.33
$region0: #{vaenet_forward.33}
  #allocation0 [shape = 'u32[]', space=smem, size = 0x4, offset = 0x4, fixed_abs, tag = 'smem constant byte address 0x4 - core index']
  #allocation1 [shape = 'u32[144,128]{1,0:T(1,128)}', space=vmem, size = 0x12000, scoped, tag = 'internal scratch']
  #allocation2 [shape = 'f32[8,32]{1,0:T(8,128)}', space=vmem, size = 0x1000, scoped, tag = 'scratch operand']
  %s0 = inlined_call_operand.vmem [shape: bf16[8,128], index: 0, kind: input, shape index: {}]
  %s1 = inlined_call_operand.vmem [shape: bf16[128,32], index: 1, kind: input, shape index: {}]
  %s2 = inlined_call_operand.vmem [shape: f32[1,32], index: 2, kind: input, shape index: {}]
  %s3 = inlined_call_operand.vmem [shape: f32[8,32], index: 3, kind: output, shape index: {}]
  %s4 = sld [smem:[#allocation0]]
  $region30: #{vaenet_forward.33} parent=0
    _
  %s6 = ssub.s32 1, %s4
  %s7 = scalar_select 0, %s6, %s4
  // Predicated region
  $region2: #{vaenet_forward.33} parent=0 // pred_check
    _
  $region3: #{vaenet_forward.33} parent=0 // pred_check_branch
    %9 = sbr.rel (0) target = $region5
  $region4: #{vaenet_forward.33} parent=0 // pred_region
    _
  $region5: #{vaenet_forward.33} parent=0 // pred_fallthru
    _
  // Predicated region
  $region6: #{vaenet_forward.33} parent=0 // pred_check
    _
  $region7: #{vaenet_forward.33} parent=0 // pred_check_branch
    %11 = sbr.rel (0) target = $region9
  $region8: #{vaenet_forward.33} parent=0 // pred_region
    _
  $region9: #{vaenet_forward.33} parent=0 // pred_fallthru
    _
  // Predicated region
  $region10: #{vaenet_forward.33} parent=0 // pred_check
    _
  $region11: #{vaenet_forward.33} parent=0 // pred_check_branch
    %13 = sbr.rel (0) target = $region13
  $region12: #{vaenet_forward.33} parent=0 // pred_region
    _
  $region13: #{vaenet_forward.33} parent=0 // pred_fallthru
    _
  %p15 = scmp.eq.s32.totalorder 0, 0
  // Predicated region
  $region14: #{vaenet_forward.33} parent=0 // pred_check
    %p16 = pneg %p15
  $region15: #{vaenet_forward.33} parent=0 // pred_check_branch
    %18 = sbr.rel (%p16) target = $region17
  $region16: #{vaenet_forward.33} parent=0 // pred_region
    %vm19 = vcmask 261120
    %20 = vst.msk [vmem:[#allocation2] sm:$0xff] %vm19, 0.0
  $region17: #{vaenet_forward.33} parent=0 // pred_fallthru
    _
  %v21 = vld [vmem:[#allocation2] sm:$0xff]
  %v22 = vld [vmem:[%s0] sm:$0xf]
  %v23 = vld [vmem:[%s1] sm:$0xf]
  %v24 = vld [vmem:[%s1 + $0x4] sm:$0xf]
  %v25 = vld [vmem:[%s1 + $0x8] sm:$0xf]
  %v26 = vld [vmem:[%s1 + $0xc] sm:$0xf]
  %v27 = vld [vmem:[%s1 + $0x10] sm:$0xf]
  %v28 = vld [vmem:[%s1 + $0x14] sm:$0xf]
  %v29 = vld [vmem:[%s1 + $0x18] sm:$0xf]
  %v30 = vld [vmem:[%s1 + $0x1c] sm:$0xf]
  %v31 = vld [vmem:[%s1 + $0x20] sm:$0xf]
  %v32 = vld [vmem:[%s1 + $0x24] sm:$0xf]
  %v33 = vld [vmem:[%s1 + $0x28] sm:$0xf]
  %v34 = vld [vmem:[%s1 + $0x2c] sm:$0xf]
  %v35 = vld [vmem:[%s1 + $0x30] sm:$0xf]
  %v36 = vld [vmem:[%s1 + $0x34] sm:$0xf]
  %v37 = vld [vmem:[%s1 + $0x38] sm:$0xf]
  %v38 = vld [vmem:[%s1 + $0x3c] sm:$0xf]
  %v55 = vunpack.c.l.b16 %v23
  %v56 = vunpack.c.l.b16 %v24
  %v57 = vunpack.c.l.b16 %v25
  %v58 = vunpack.c.l.b16 %v26
  %v59 = vunpack.c.l.b16 %v27
  %v60 = vunpack.c.l.b16 %v28
  %v61 = vunpack.c.l.b16 %v29
  %v62 = vunpack.c.l.b16 %v30
  %v63 = vunpack.c.l.b16 %v31
  %v64 = vunpack.c.l.b16 %v32
  %v65 = vunpack.c.l.b16 %v33
  %v66 = vunpack.c.l.b16 %v34
  %v67 = vunpack.c.l.b16 %v35
  %v68 = vunpack.c.l.b16 %v36
  %v69 = vunpack.c.l.b16 %v37
  %v70 = vunpack.c.l.b16 %v38
  %v71 = vpack.c.b16 %v56, %v55
  %v72 = vpack.c.b16 %v58, %v57
  %v73 = vpack.c.b16 %v60, %v59
  %v74 = vpack.c.b16 %v62, %v61
  %v75 = vpack.c.b16 %v64, %v63
  %v76 = vpack.c.b16 %v66, %v65
  %v77 = vpack.c.b16 %v68, %v67
  %v78 = vpack.c.b16 %v70, %v69
  %87 = vmatprep.subr.bf16.mxu0 0
  %88 = vmatpush1.bf16.msra.mxu0 %v71
  %89 = vmatprep.subr.bf16.mxu0 0
  %90 = vmatpush1.bf16.msra.mxu0 %v72
  %91 = vmatprep.subr.bf16.mxu0 0
  %92 = vmatpush1.bf16.msra.mxu0 %v73
  %93 = vmatprep.subr.bf16.mxu0 0
  %94 = vmatpush1.bf16.msra.mxu0 %v74
  %95 = vmatprep.subr.bf16.mxu0 0
  %96 = vmatpush1.bf16.msra.mxu0 %v75
  %97 = vmatprep.subr.bf16.mxu0 0
  %98 = vmatpush1.bf16.msra.mxu0 %v76
  %99 = vmatprep.subr.bf16.mxu0 0
  %100 = vmatpush1.bf16.msra.mxu0 %v77
  %101 = vmatprep.subr.bf16.mxu0 0
  %102 = vmatpush1.bf16.msra.mxu0 %v78
  %103 = vmatprep.subr.bf16.mxu0 0
  %104 = vmatpush1.bf16.msra.mxu0 0
  %105 = vmatprep.subr.bf16.mxu0 0
  %106 = vmatpush1.bf16.msra.mxu0 0
  %107 = vmatprep.subr.bf16.mxu0 0
  %108 = vmatpush1.bf16.msra.mxu0 0
  %109 = vmatprep.subr.bf16.mxu0 0
  %110 = vmatpush1.bf16.msra.mxu0 0
  %111 = vmatprep.subr.bf16.mxu0 0
  %112 = vmatpush1.bf16.msra.mxu0 0
  %113 = vmatprep.subr.bf16.mxu0 0
  %114 = vmatpush1.bf16.msra.mxu0 0
  %115 = vmatprep.subr.bf16.mxu0 0
  %116 = vmatpush1.bf16.msra.mxu0 0
  %117 = vmatprep.subr.bf16.mxu0 0
  %118 = vmatpush1.bf16.msra.mxu0 0
  %119 = vmatprep.mubr.bf16.mxu0 0
  %120 = vmatmul.mubr.bf16.gmra.mrb[0].mxu0 %v22
  %v121 = vpop.f32.mrb[0].mxu0
  %v122 = vadd.f32 0.0, %v121
  %v123 = vpop.f32.mrb[0].mxu0
  %v124 = vpop.f32.mrb[0].mxu0
  %v125 = vpop.f32.mrb[0].mxu0
  %126 = vdwg.mxu0
  %v127 = vadd.f32 %v21, %v122
  %vm128 = vcmask 261120
  %129 = vst.msk [vmem:[#allocation2] sm:$0xff] %vm128, %v127
  // Predicated region
  $region18: #{vaenet_forward.33} parent=0 // pred_check
    %p130 = pneg %p15
  $region19: #{vaenet_forward.33} parent=0 // pred_check_branch
    %132 = sbr.rel (%p130) target = $region21
  $region20: #{vaenet_forward.33} parent=0 // pred_region
    %v133 = vld [vmem:[#allocation2] sm:$0xff]
    %v134 = vld [vmem:[%s2] sm:$0x1]
    %v136 = vlaneseq
    %v137 = vshrl.u32 %v136, 7
    %v138 = vsub.s32 0, %v137
    %v139 = vrot.slane %v134, %v138
    %v141 = vadd.f32 %v133, %v139
    %142 = vst.msk [vmem:[%s3] sm:$0xff] %vm128, %v141
  $region21: #{vaenet_forward.33} parent=0 // pred_fallthru
    _
  // Predicated region
  $region22: #{vaenet_forward.33} parent=0 // pred_check
    _
  $region23: #{vaenet_forward.33} parent=0 // pred_check_branch
    %144 = sbr.rel (0) target = $region25
  $region24: #{vaenet_forward.33} parent=0 // pred_region
    _
  $region25: #{vaenet_forward.33} parent=0 // pred_fallthru
    _
  // Predicated region
  $region26: #{vaenet_forward.33} parent=0 // pred_check
    _
  $region27: #{vaenet_forward.33} parent=0 // pred_check_branch
    %146 = sbr.rel (0) target = $region29
  $region28: #{vaenet_forward.33} parent=0 // pred_region
    _
  $region29: #{vaenet_forward.33} parent=0 // pred_fallthru
    _

// kernel: vaenet_forward.34
$region0: #{vaenet_forward.34}
  #allocation0 [shape = 'u32[]', space=smem, size = 0x4, offset = 0x4, fixed_abs, tag = 'smem constant byte address 0x4 - core index']
  #allocation1 [shape = 'u32[144,128]{1,0:T(1,128)}', space=vmem, size = 0x12000, scoped, tag = 'internal scratch']
  %s0 = inlined_call_operand.vmem [shape: f32[2,4,32], index: 0, kind: input, shape index: {}]
  %s1 = inlined_call_operand.vmem [shape: bf16[32,32], index: 1, kind: input, shape index: {}]
  %s2 = inlined_call_operand.vmem [shape: f32[1,32], index: 2, kind: input, shape index: {}]
  %s3 = inlined_call_operand.vmem [shape: bf16[32,32], index: 3, kind: input, shape index: {}]
  %s4 = inlined_call_operand.vmem [shape: f32[1,32], index: 4, kind: input, shape index: {}]
  %s5 = inlined_call_operand.vmem [shape: f32[2,32], index: 5, kind: input, shape index: {}]
  %s6 = inlined_call_operand.hbm [shape: f32[2,32], index: 6, kind: output, shape index: {0}]
  %s7 = inlined_call_operand.hbm [shape: f32[2,32], index: 7, kind: output, shape index: {1}]
  %s8 = inlined_call_operand.vmem [shape: f32[2,32], index: 8, kind: output, shape index: {2}]
  %9 = xla_tuple %s6, %s7, %s8
  %s10 = sld [smem:[#allocation0]]
  $region50: #{vaenet_forward.34} parent=0
    _
  %s12 = ssub.s32 1, %s10
  %s13 = scalar_select 0, %s12, %s10
  $region1: #{vaenet_forward.34} parent=0
    #allocation2 [shape = 'u8[1024]{0}', space=vmem, size = 0x400, scoped, tag = 'output window, operand 0, single buffered']
    #allocation3 [shape = 's32[1]{0}', space=sflag, size = 0x4, scoped, tag = 'scoped memory for vaenet_forward.34']
    #allocation4 [shape = 'u8[1024]{0}', space=vmem, size = 0x400, scoped, tag = 'output window, operand 1, single buffered']
    #allocation5 [shape = 's32[1]{0}', space=sflag, size = 0x4, scoped, tag = 'scoped memory for vaenet_forward.34']
    %14 = vsyncpa [#allocation3], 0
    %15 = vsyncpa [#allocation5], 0
    // Predicated region
    $region2: #{vaenet_forward.34} parent=1 // pred_check
      _
    $region3: #{vaenet_forward.34} parent=1 // pred_check_branch
      %17 = sbr.rel (0) target = $region5
    $region4: #{vaenet_forward.34} parent=1 // pred_region
      _
    $region5: #{vaenet_forward.34} parent=1 // pred_fallthru
      _
    // Predicated region
    $region6: #{vaenet_forward.34} parent=1 // pred_check
      _
    $region7: #{vaenet_forward.34} parent=1 // pred_check_branch
      %19 = sbr.rel (0) target = $region9
    $region8: #{vaenet_forward.34} parent=1 // pred_region
      _
    $region9: #{vaenet_forward.34} parent=1 // pred_fallthru
      _
    // Predicated region
    $region10: #{vaenet_forward.34} parent=1 // pred_check
      _
    $region11: #{vaenet_forward.34} parent=1 // pred_check_branch
      %21 = sbr.rel (0) target = $region13
    $region12: #{vaenet_forward.34} parent=1 // pred_region
      _
    $region13: #{vaenet_forward.34} parent=1 // pred_fallthru
      _
    // Predicated region
    $region14: #{vaenet_forward.34} parent=1 // pred_check
      _
    $region15: #{vaenet_forward.34} parent=1 // pred_check_branch
      %23 = sbr.rel (0) target = $region17
    $region16: #{vaenet_forward.34} parent=1 // pred_region
      _
    $region17: #{vaenet_forward.34} parent=1 // pred_fallthru
      _
    // Predicated region
    $region18: #{vaenet_forward.34} parent=1 // pred_check
      _
    $region19: #{vaenet_forward.34} parent=1 // pred_check_branch
      %25 = sbr.rel (0) target = $region21
    $region20: #{vaenet_forward.34} parent=1 // pred_region
      _
    $region21: #{vaenet_forward.34} parent=1 // pred_fallthru
      _
    // Predicated region
    $region22: #{vaenet_forward.34} parent=1 // pred_check
      _
    $region23: #{vaenet_forward.34} parent=1 // pred_check_branch
      %27 = sbr.rel (0) target = $region25
    $region24: #{vaenet_forward.34} parent=1 // pred_region
      _
    $region25: #{vaenet_forward.34} parent=1 // pred_fallthru
      _
    %v29 = vld [vmem:[%s0] sm:$0xf]
    %v30 = vld [vmem:[%s0 + $0x4] sm:$0xf]
    %vm31 = vcmask 257024
    %v32 = vsel %vm31, %v29, 0.0
    %v33 = vrot.slane %v32, 4
    %v34 = vadd.f32 %v32, %v33
    %v35 = vrot.slane %v34, 2
    %v36 = vadd.f32 %v34, %v35
    %v37 = vrot.slane %v36, 1
    %v38 = vadd.f32 %v36, %v37
    %v39 = vsel %vm31, %v30, 0.0
    %v40 = vrot.slane %v39, 4
    %v41 = vadd.f32 %v39, %v40
    %v42 = vrot.slane %v41, 2
    %v43 = vadd.f32 %v41, %v42
    %v44 = vrot.slane %v43, 1
    %v45 = vadd.f32 %v43, %v44
    %v46 = vrcp.pop 4.0
    %v47 = vmul.f32 %v38, %v46
    %v48 = vmul.f32 %v45, %v46
    %v49 = vpack.c.bf16 %v47, %v47
    %v50 = vpack.c.bf16 %v48, %v48
    %v51 = vld [vmem:[%s1] sm:$0xf]
    %v52 = vld [vmem:[%s1 + $0x4] sm:$0xf]
    %v53 = vld [vmem:[%s1 + $0x8] sm:$0xf]
    %v54 = vld [vmem:[%s1 + $0xc] sm:$0xf]
    %v55 = vld [vmem:[%s2] sm:$0x1]
    %v57 = vlaneseq
    %v58 = vshrl.u32 %v57, 7
    %v59 = vsub.s32 0, %v58
    %v60 = vrot.slane %v55, %v59
    %v64 = vunpack.c.l.b16 %v49
    %v65 = vunpack.c.l.b16 %v50
    %vm66 = vcmask 1041409
    %v67 = vsel %vm66, %v65, %v64
    %v68 = vpack.c.b16 %v67, %v67
    %v73 = vunpack.c.l.b16 %v51
    %v74 = vunpack.c.l.b16 %v52
    %v75 = vunpack.c.l.b16 %v53
    %v76 = vunpack.c.l.b16 %v54
    %v77 = vpack.c.b16 %v74, %v73
    %v78 = vpack.c.b16 %v76, %v75
    %vm81 = vcmask 261120
    %v83 = vsel %vm81, %v68, 0
    %85 = vmatprep.subr.bf16.mxu0 0
    %86 = vmatpush1.bf16.msra.mxu0 %v77
    %87 = vmatprep.subr.bf16.mxu0 0
    %88 = vmatpush1.bf16.msra.mxu0 %v78
    %89 = vmatprep.subr.bf16.mxu0 0
    %90 = vmatpush1.bf16.msra.mxu0 0
    %91 = vmatprep.subr.bf16.mxu0 0
    %92 = vmatpush1.bf16.msra.mxu0 0
    %93 = vmatprep.subr.bf16.mxu0 0
    %94 = vmatpush1.bf16.msra.mxu0 0
    %95 = vmatprep.subr.bf16.mxu0 0
    %96 = vmatpush1.bf16.msra.mxu0 0
    %97 = vmatprep.subr.bf16.mxu0 0
    %98 = vmatpush1.bf16.msra.mxu0 0
    %99 = vmatprep.subr.bf16.mxu0 0
    %100 = vmatpush1.bf16.msra.mxu0 0
    %101 = vmatprep.subr.bf16.mxu0 0
    %102 = vmatpush1.bf16.msra.mxu0 0
    %103 = vmatprep.subr.bf16.mxu0 0
    %104 = vmatpush1.bf16.msra.mxu0 0
    %105 = vmatprep.subr.bf16.mxu0 0
    %106 = vmatpush1.bf16.msra.mxu0 0
    %107 = vmatprep.subr.bf16.mxu0 0
    %108 = vmatpush1.bf16.msra.mxu0 0
    %109 = vmatprep.subr.bf16.mxu0 0
    %110 = vmatpush1.bf16.msra.mxu0 0
    %111 = vmatprep.subr.bf16.mxu0 0
    %112 = vmatpush1.bf16.msra.mxu0 0
    %113 = vmatprep.subr.bf16.mxu0 0
    %114 = vmatpush1.bf16.msra.mxu0 0
    %115 = vmatprep.subr.bf16.mxu0 0
    %116 = vmatpush1.bf16.msra.mxu0 0
    %117 = vmatprep.mubr.bf16.mxu0 0
    %118 = vmatmul.mubr.bf16.gmra.mrb[0].mxu0 %v83
    %v119 = vpop.f32.mrb[0].mxu0
    %v120 = vadd.f32 %v60, %v119
    %v121 = vpop.f32.mrb[0].mxu0
    %v122 = vpop.f32.mrb[0].mxu0
    %v123 = vpop.f32.mrb[0].mxu0
    %124 = vdwg.mxu0
    %v125 = vld [vmem:[%s3] sm:$0xf]
    %v126 = vld [vmem:[%s3 + $0x4] sm:$0xf]
    %v127 = vld [vmem:[%s3 + $0x8] sm:$0xf]
    %v128 = vld [vmem:[%s3 + $0xc] sm:$0xf]
    %v129 = vld [vmem:[%s4] sm:$0x1]
    %v131 = vlaneseq
    %v132 = vshrl.u32 %v131, 7
    %v133 = vsub.s32 0, %v132
    %v134 = vrot.slane %v129, %v133
    %v140 = vunpack.c.l.b16 %v125
    %v141 = vunpack.c.l.b16 %v126
    %v142 = vunpack.c.l.b16 %v127
    %v143 = vunpack.c.l.b16 %v128
    %v144 = vpack.c.b16 %v141, %v140
    %v145 = vpack.c.b16 %v143, %v142
    %148 = vmatprep.subr.bf16.mxu0 0
    %149 = vmatpush1.bf16.msra.mxu0 %v144
    %150 = vmatprep.subr.bf16.mxu0 0
    %151 = vmatpush1.bf16.msra.mxu0 %v145
    %152 = vmatprep.subr.bf16.mxu0 0
    %153 = vmatpush1.bf16.msra.mxu0 0
    %154 = vmatprep.subr.bf16.mxu0 0
    %155 = vmatpush1.bf16.msra.mxu0 0
    %156 = vmatprep.subr.bf16.mxu0 0
    %157 = vmatpush1.bf16.msra.mxu0 0
    %158 = vmatprep.subr.bf16.mxu0 0
    %159 = vmatpush1.bf16.msra.mxu0 0
    %160 = vmatprep.subr.bf16.mxu0 0
    %161 = vmatpush1.bf16.msra.mxu0 0
    %162 = vmatprep.subr.bf16.mxu0 0
    %163 = vmatpush1.bf16.msra.mxu0 0
    %164 = vmatprep.subr.bf16.mxu0 0
    %165 = vmatpush1.bf16.msra.mxu0 0
    %166 = vmatprep.subr.bf16.mxu0 0
    %167 = vmatpush1.bf16.msra.mxu0 0
    %168 = vmatprep.subr.bf16.mxu0 0
    %169 = vmatpush1.bf16.msra.mxu0 0
    %170 = vmatprep.subr.bf16.mxu0 0
    %171 = vmatpush1.bf16.msra.mxu0 0
    %172 = vmatprep.subr.bf16.mxu0 0
    %173 = vmatpush1.bf16.msra.mxu0 0
    %174 = vmatprep.subr.bf16.mxu0 0
    %175 = vmatpush1.bf16.msra.mxu0 0
    %176 = vmatprep.subr.bf16.mxu0 0
    %177 = vmatpush1.bf16.msra.mxu0 0
    %178 = vmatprep.subr.bf16.mxu0 0
    %179 = vmatpush1.bf16.msra.mxu0 0
    %180 = vmatprep.mubr.bf16.mxu0 0
    %181 = vmatmul.mubr.bf16.gmra.mrb[0].mxu0 %v83
    %v182 = vpop.f32.mrb[0].mxu0
    %v183 = vadd.f32 %v134, %v182
    %v184 = vpop.f32.mrb[0].mxu0
    %v185 = vpop.f32.mrb[0].mxu0
    %v186 = vpop.f32.mrb[0].mxu0
    %187 = vdwg.mxu0
    %vm188 = vcmask 254976
    %189 = vst.msk [vmem:[#allocation2] sm:$0x3] %vm188, %v120
    %190 = vst.msk [vmem:[#allocation4] sm:$0x3] %vm188, %v183
    %v191 = vld [vmem:[%s5] sm:$0x3]
    %v192 = vmul.f32 %v183, 0.5
    %v193 = vmul.f32 %v192, 1.442695
    %v194 = vpow.pop %v193
    %v195 = vmul.f32 %v191, %v194
    %v196 = vadd.f32 %v195, %v120
    %197 = vst.msk [vmem:[%s8] sm:$0x3] %vm188, %v196
    // Predicated region
    $region26: #{vaenet_forward.34} parent=1 // pred_check
      _
    $region27: #{vaenet_forward.34} parent=1 // pred_check_branch
      %199 = sbr.rel (0) target = $region29
    $region28: #{vaenet_forward.34} parent=1 // pred_region
      %s201 = ssub.s32 32, 32
      %202 = vsyncadd [#allocation3], %s201
      %s204 = sshll.u32 [#allocation2], 4
      %s205 = int_to_ptr.vmem [resolvable:$true] %s204
      %207 = dma.vmem_to_hbm [thread:$0]  %s205, 32, %s6, [#allocation3]
    $region29: #{vaenet_forward.34} parent=1 // pred_fallthru
      _
    // Predicated region
    $region30: #{vaenet_forward.34} parent=1 // pred_check
      _
    $region31: #{vaenet_forward.34} parent=1 // pred_check_branch
      %209 = sbr.rel (0) target = $region33
    $region32: #{vaenet_forward.34} parent=1 // pred_region
      %s211 = ssub.s32 32, 32
      %212 = vsyncadd [#allocation5], %s211
      %s214 = sshll.u32 [#allocation4], 4
      %s215 = int_to_ptr.vmem [resolvable:$true] %s214
      %217 = dma.vmem_to_hbm [thread:$0]  %s215, 32, %s7, [#allocation5]
    $region33: #{vaenet_forward.34} parent=1 // pred_fallthru
      _
    // Predicated region
    $region34: #{vaenet_forward.34} parent=1 // pred_check
      _
    $region35: #{vaenet_forward.34} parent=1 // pred_check_branch
      %219 = sbr.rel (0) target = $region37
    $region36: #{vaenet_forward.34} parent=1 // pred_region
      _
    $region37: #{vaenet_forward.34} parent=1 // pred_fallthru
      _
    // Predicated region
    $region38: #{vaenet_forward.34} parent=1 // pred_check
      _
    $region39: #{vaenet_forward.34} parent=1 // pred_check_branch
      %221 = sbr.rel (0) target = $region41
    $region40: #{vaenet_forward.34} parent=1 // pred_region
      %222 = dma.done [#allocation3], 32
    $region41: #{vaenet_forward.34} parent=1 // pred_fallthru
      _
    // Predicated region
    $region42: #{vaenet_forward.34} parent=1 // pred_check
      _
    $region43: #{vaenet_forward.34} parent=1 // pred_check_branch
      %224 = sbr.rel (0) target = $region45
    $region44: #{vaenet_forward.34} parent=1 // pred_region
      %225 = dma.done [#allocation5], 32
    $region45: #{vaenet_forward.34} parent=1 // pred_fallthru
      _
    // Predicated region
    $region46: #{vaenet_forward.34} parent=1 // pred_check
      _
    $region47: #{vaenet_forward.34} parent=1 // pred_check_branch
      %227 = sbr.rel (0) target = $region49
    $region48: #{vaenet_forward.34} parent=1 // pred_region
      _
    $region49: #{vaenet_forward.34} parent=1 // pred_fallthru
      _
    %228 = vsyncpa [#allocation3], 1
    %229 = vsyncpa [#allocation5], 1

// kernel: vaenet_forward.36
$region0: #{vaenet_forward.36}
  #allocation0 [shape = 'u32[]', space=smem, size = 0x4, offset = 0x4, fixed_abs, tag = 'smem constant byte address 0x4 - core index']
  #allocation1 [shape = 'u32[144,128]{1,0:T(1,128)}', space=vmem, size = 0x12000, scoped, tag = 'internal scratch']
  %s0 = inlined_call_operand.vmem [shape: f32[8,16], index: 0, kind: input, shape index: {}]
  %s1 = inlined_call_operand.vmem [shape: f32[1,16], index: 1, kind: input, shape index: {}]
  %s2 = inlined_call_operand.vmem [shape: f32[1,16], index: 2, kind: input, shape index: {}]
  %s3 = inlined_call_operand.vmem [shape: f32[8,16], index: 3, kind: output, shape index: {}]
  %s4 = sld [smem:[#allocation0]]
  $region22: #{vaenet_forward.36} parent=0
    _
  %s6 = ssub.s32 1, %s4
  %s7 = scalar_select 0, %s6, %s4
  // Predicated region
  $region2: #{vaenet_forward.36} parent=0 // pred_check
    _
  $region3: #{vaenet_forward.36} parent=0 // pred_check_branch
    %9 = sbr.rel (0) target = $region5
  $region4: #{vaenet_forward.36} parent=0 // pred_region
    _
  $region5: #{vaenet_forward.36} parent=0 // pred_fallthru
    _
  // Predicated region
  $region6: #{vaenet_forward.36} parent=0 // pred_check
    _
  $region7: #{vaenet_forward.36} parent=0 // pred_check_branch
    %11 = sbr.rel (0) target = $region9
  $region8: #{vaenet_forward.36} parent=0 // pred_region
    _
  $region9: #{vaenet_forward.36} parent=0 // pred_fallthru
    _
  // Predicated region
  $region10: #{vaenet_forward.36} parent=0 // pred_check
    _
  $region11: #{vaenet_forward.36} parent=0 // pred_check_branch
    %13 = sbr.rel (0) target = $region13
  $region12: #{vaenet_forward.36} parent=0 // pred_region
    _
  $region13: #{vaenet_forward.36} parent=0 // pred_fallthru
    _
  %v14 = vld [vmem:[%s1] sm:$0x1]
  %v15 = vmul.f32 %v14, 0.125
  %v16 = vld [vmem:[%s2] sm:$0x1]
  %v17 = vmul.f32 %v16, 0.125
  %v18 = vmul.f32 %v15, %v15
  %v19 = vsub.f32 %v17, %v18
  %v20 = vld [vmem:[%s0] sm:$0xff]
  %v22 = vlaneseq
  %v23 = vshrl.u32 %v22, 7
  %v24 = vsub.s32 0, %v23
  %v25 = vrot.slane %v15, %v24
  %v27 = vsub.f32 %v20, %v25
  %v28 = vadd.f32 %v19, 1e-05
  %v29 = vrsqrt.pop %v28
  %v31 = vlaneseq
  %v32 = vshrl.u32 %v31, 7
  %v33 = vsub.s32 0, %v32
  %v34 = vrot.slane %v29, %v33
  %v36 = vmul.f32 %v27, %v34
  %vm37 = vcmask 130048
  %38 = vst.msk [vmem:[%s3] sm:$0xff] %vm37, %v36
  // Predicated region
  $region14: #{vaenet_forward.36} parent=0 // pred_check
    _
  $region15: #{vaenet_forward.36} parent=0 // pred_check_branch
    %40 = sbr.rel (0) target = $region17
  $region16: #{vaenet_forward.36} parent=0 // pred_region
    _
  $region17: #{vaenet_forward.36} parent=0 // pred_fallthru
    _
  // Predicated region
  $region18: #{vaenet_forward.36} parent=0 // pred_check
    _
  $region19: #{vaenet_forward.36} parent=0 // pred_check_branch
    %42 = sbr.rel (0) target = $region21
  $region20: #{vaenet_forward.36} parent=0 // pred_region
    _
  $region21: #{vaenet_forward.36} parent=0 // pred_fallthru
    _

// kernel: vaenet_forward.35
$region0: #{vaenet_forward.35}
  #allocation0 [shape = 'u32[]', space=smem, size = 0x4, offset = 0x4, fixed_abs, tag = 'smem constant byte address 0x4 - core index']
  #allocation1 [shape = 'u32[144,128]{1,0:T(1,128)}', space=vmem, size = 0x12000, scoped, tag = 'internal scratch']
  #allocation2 [shape = 'f32[8,16]{1,0:T(8,128)}', space=vmem, size = 0x1000, scoped, tag = 'scratch operand']
  %s0 = inlined_call_operand.vmem [shape: bf16[8,96], index: 0, kind: input, shape index: {}]
  %s1 = inlined_call_operand.vmem [shape: bf16[96,16], index: 1, kind: input, shape index: {}]
  %s2 = inlined_call_operand.vmem [shape: f32[1,16], index: 2, kind: input, shape index: {}]
  %s3 = inlined_call_operand.vmem [shape: f32[8,16], index: 3, kind: output, shape index: {0}]
  %s4 = inlined_call_operand.vmem [shape: f32[1,16], index: 4, kind: output, shape index: {1}]
  %s5 = inlined_call_operand.vmem [shape: f32[1,16], index: 5, kind: output, shape index: {2}]
  %6 = xla_tuple %s3, %s4, %s5
  %s7 = sld [smem:[#allocation0]]
  $region46: #{vaenet_forward.35} parent=0
    _
  %s9 = ssub.s32 1, %s7
  %s10 = scalar_select 0, %s9, %s7
  // Predicated region
  $region2: #{vaenet_forward.35} parent=0 // pred_check
    _
  $region3: #{vaenet_forward.35} parent=0 // pred_check_branch
    %12 = sbr.rel (0) target = $region5
  $region4: #{vaenet_forward.35} parent=0 // pred_region
    _
  $region5: #{vaenet_forward.35} parent=0 // pred_fallthru
    _
  // Predicated region
  $region6: #{vaenet_forward.35} parent=0 // pred_check
    _
  $region7: #{vaenet_forward.35} parent=0 // pred_check_branch
    %14 = sbr.rel (0) target = $region9
  $region8: #{vaenet_forward.35} parent=0 // pred_region
    _
  $region9: #{vaenet_forward.35} parent=0 // pred_fallthru
    _
  // Predicated region
  $region10: #{vaenet_forward.35} parent=0 // pred_check
    _
  $region11: #{vaenet_forward.35} parent=0 // pred_check_branch
    %16 = sbr.rel (0) target = $region13
  $region12: #{vaenet_forward.35} parent=0 // pred_region
    _
  $region13: #{vaenet_forward.35} parent=0 // pred_fallthru
    _
  %p18 = scmp.eq.s32.totalorder 0, 0
  // Predicated region
  $region14: #{vaenet_forward.35} parent=0 // pred_check
    %p19 = pneg %p18
  $region15: #{vaenet_forward.35} parent=0 // pred_check_branch
    %21 = sbr.rel (%p19) target = $region17
  $region16: #{vaenet_forward.35} parent=0 // pred_region
    %vm22 = vcmask 130048
    %23 = vst.msk [vmem:[#allocation2] sm:$0xff] %vm22, 0.0
  $region17: #{vaenet_forward.35} parent=0 // pred_fallthru
    _
  %v24 = vld [vmem:[#allocation2] sm:$0xff]
  %v25 = vld [vmem:[%s0] sm:$0xf]
  %v26 = vld [vmem:[%s1] sm:$0xf]
  %v27 = vld [vmem:[%s1 + $0x4] sm:$0xf]
  %v28 = vld [vmem:[%s1 + $0x8] sm:$0xf]
  %v29 = vld [vmem:[%s1 + $0xc] sm:$0xf]
  %v30 = vld [vmem:[%s1 + $0x10] sm:$0xf]
  %v31 = vld [vmem:[%s1 + $0x14] sm:$0xf]
  %v32 = vld [vmem:[%s1 + $0x18] sm:$0xf]
  %v33 = vld [vmem:[%s1 + $0x1c] sm:$0xf]
  %v34 = vld [vmem:[%s1 + $0x20] sm:$0xf]
  %v35 = vld [vmem:[%s1 + $0x24] sm:$0xf]
  %v36 = vld [vmem:[%s1 + $0x28] sm:$0xf]
  %v37 = vld [vmem:[%s1 + $0x2c] sm:$0xf]
  %v50 = vunpack.c.l.b16 %v26
  %v51 = vunpack.c.l.b16 %v27
  %v52 = vunpack.c.l.b16 %v28
  %v53 = vunpack.c.l.b16 %v29
  %v54 = vunpack.c.l.b16 %v30
  %v55 = vunpack.c.l.b16 %v31
  %v56 = vunpack.c.l.b16 %v32
  %v57 = vunpack.c.l.b16 %v33
  %v58 = vunpack.c.l.b16 %v34
  %v59 = vunpack.c.l.b16 %v35
  %v60 = vunpack.c.l.b16 %v36
  %v61 = vunpack.c.l.b16 %v37
  %v62 = vpack.c.b16 %v51, %v50
  %v63 = vpack.c.b16 %v53, %v52
  %v64 = vpack.c.b16 %v55, %v54
  %v65 = vpack.c.b16 %v57, %v56
  %v66 = vpack.c.b16 %v59, %v58
  %v67 = vpack.c.b16 %v61, %v60
  %vm74 = vcmask 785408
  %v76 = vsel %vm74, %v25, 0
  %78 = vmatprep.subr.bf16.mxu0 0
  %79 = vmatpush1.bf16.msra.mxu0 %v62
  %80 = vmatprep.subr.bf16.mxu0 0
  %81 = vmatpush1.bf16.msra.mxu0 %v63
  %82 = vmatprep.subr.bf16.mxu0 0
  %83 = vmatpush1.bf16.msra.mxu0 %v64
  %84 = vmatprep.subr.bf16.mxu0 0
  %85 = vmatpush1.bf16.msra.mxu0 %v65
  %86 = vmatprep.subr.bf16.mxu0 0
  %87 = vmatpush1.bf16.msra.mxu0 %v66
  %88 = vmatprep.subr.bf16.mxu0 0
  %89 = vmatpush1.bf16.msra.mxu0 %v67
  %90 = vmatprep.subr.bf16.mxu0 0
  %91 = vmatpush1.bf16.msra.mxu0 0
  %92 = vmatprep.subr.bf16.mxu0 0
  %93 = vmatpush1.bf16.msra.mxu0 0
  %94 = vmatprep.subr.bf16.mxu0 0
  %95 = vmatpush1.bf16.msra.mxu0 0
  %96 = vmatprep.subr.bf16.mxu0 0
  %97 = vmatpush1.bf16.msra.mxu0 0
  %98 = vmatprep.subr.bf16.mxu0 0
  %99 = vmatpush1.bf16.msra.mxu0 0
  %100 = vmatprep.subr.bf16.mxu0 0
  %101 = vmatpush1.bf16.msra.mxu0 0
  %102 = vmatprep.subr.bf16.mxu0 0
  %103 = vmatpush1.bf16.msra.mxu0 0
  %104 = vmatprep.subr.bf16.mxu0 0
  %105 = vmatpush1.bf16.msra.mxu0 0
  %106 = vmatprep.subr.bf16.mxu0 0
  %107 = vmatpush1.bf16.msra.mxu0 0
  %108 = vmatprep.subr.bf16.mxu0 0
  %109 = vmatpush1.bf16.msra.mxu0 0
  %110 = vmatprep.mubr.bf16.mxu0 0
  %111 = vmatmul.mubr.bf16.gmra.mrb[0].mxu0 %v76
  %v112 = vpop.f32.mrb[0].mxu0
  %v113 = vadd.f32 0.0, %v112
  %v114 = vpop.f32.mrb[0].mxu0
  %v115 = vpop.f32.mrb[0].mxu0
  %v116 = vpop.f32.mrb[0].mxu0
  %117 = vdwg.mxu0
  %v118 = vadd.f32 %v24, %v113
  %vm119 = vcmask 130048
  %120 = vst.msk [vmem:[#allocation2] sm:$0xff] %vm119, %v118
  // Predicated region
  $region18: #{vaenet_forward.35} parent=0 // pred_check
    %p121 = pneg %p18
  $region19: #{vaenet_forward.35} parent=0 // pred_check_branch
    %123 = sbr.rel (%p121) target = $region21
  $region20: #{vaenet_forward.35} parent=0 // pred_region
    %v124 = vld [vmem:[#allocation2] sm:$0xff]
    %v125 = vld [vmem:[%s2] sm:$0x1]
    %v127 = vlaneseq
    %v128 = vshrl.u32 %v127, 7
    %v129 = vsub.s32 0, %v128
    %v130 = vrot.slane %v125, %v129
    %v132 = vadd.f32 %v124, %v130
    %v133 = vmax.f32 %v132, 0.0
    %134 = vst.msk [vmem:[%s3] sm:$0xff] %vm119, %v133
    %v135 = vsel %vm119, %v133, 0.0
    %v136 = vrot.slane %v135, 4
    %v137 = vadd.f32 %v135, %v136
    %v138 = vrot.slane %v137, 2
    %v139 = vadd.f32 %v137, %v138
    %v140 = vrot.slane %v139, 1
    %v141 = vadd.f32 %v139, %v140
    %v142 = vmul.f32 %v133, %v133
    %v143 = vsel %vm119, %v142, 0.0
    %v144 = vrot.slane %v143, 4
    %v145 = vadd.f32 %v143, %v144
    %v146 = vrot.slane %v145, 2
    %v147 = vadd.f32 %v145, %v146
    %v148 = vrot.slane %v147, 1
    %v149 = vadd.f32 %v147, %v148
    %p150 = scmp.eq.s32.totalorder 0, 0
    %v151 = vld [vmem:[%s4] sm:$0x1]
    %v152 = vadd.f32 %v151, %v141
    %s153 = scalar_select %p150, 1, 0
    %v154 = vstv %s153
    %vm155 = vcmp.eq.s32.totalorder %v154, 1
    %v156 = vsel %vm155, %v141, %v152
    %vm157 = vcmask 122880
    %158 = vst.msk [vmem:[%s4] sm:$0x1] %vm157, %v156
    %v159 = vld [vmem:[%s5] sm:$0x1]
    %v160 = vadd.f32 %v159, %v149
    %v161 = vsel %vm155, %v149, %v160
    %162 = vst.msk [vmem:[%s5] sm:$0x1] %vm157, %v161
  $region21: #{vaenet_forward.35} parent=0 // pred_fallthru
    _
  // Predicated region
  $region22: #{vaenet_forward.35} parent=0 // pred_check
    _
  $region23: #{vaenet_forward.35} parent=0 // pred_check_branch
    %164 = sbr.rel (0) target = $region25
  $region24: #{vaenet_forward.35} parent=0 // pred_region
    _
  $region25: #{vaenet_forward.35} parent=0 // pred_fallthru
    _
  // Predicated region
  $region26: #{vaenet_forward.35} parent=0 // pred_check
    _
  $region27: #{vaenet_forward.35} parent=0 // pred_check_branch
    %166 = sbr.rel (0) target = $region29
  $region28: #{vaenet_forward.35} parent=0 // pred_region
    _
  $region29: #{vaenet_forward.35} parent=0 // pred_fallthru
    _
  // Predicated region
  $region30: #{vaenet_forward.35} parent=0 // pred_check
    _
  $region31: #{vaenet_forward.35} parent=0 // pred_check_branch
    %168 = sbr.rel (0) target = $region33
  $region32: #{vaenet_forward.35} parent=0 // pred_region
    _
  $region33: #{vaenet_forward.35} parent=0 // pred_fallthru
    _
  // Predicated region
  $region34: #{vaenet_forward.35} parent=0 // pred_check
    _
  $region35: #{vaenet_forward.35} parent=0 // pred_check_branch
    %170 = sbr.rel (0) target = $region37
  $region36: #{vaenet_forward.35} parent=0 // pred_region
    _
  $region37: #{vaenet_forward.35} parent=0 // pred_fallthru
    _
  // Predicated region
  $region38: #{vaenet_forward.35} parent=0 // pred_check
    _
  $region39: #{vaenet_forward.35} parent=0 // pred_check_branch
    %172 = sbr.rel (0) target = $region41
  $region40: #{vaenet_forward.35} parent=0 // pred_region
    _
  $region41: #{vaenet_forward.35} parent=0 // pred_fallthru
    _
  // Predicated region
  $region42: #{vaenet_forward.35} parent=0 // pred_check
    _
  $region43: #{vaenet_forward.35} parent=0 // pred_check_branch
    %174 = sbr.rel (0) target = $region45
  $region44: #{vaenet_forward.35} parent=0 // pred_region
    _
  $region45: #{vaenet_forward.35} parent=0 // pred_fallthru
    _

// kernel: vaenet_forward.37
$region0: #{vaenet_forward.37}
  #allocation0 [shape = 'u32[]', space=smem, size = 0x4, offset = 0x4, fixed_abs, tag = 'smem constant byte address 0x4 - core index']
  #allocation1 [shape = 'u32[144,128]{1,0:T(1,128)}', space=vmem, size = 0x12000, scoped, tag = 'internal scratch']
  #allocation2 [shape = 'f32[8,16]{1,0:T(8,128)}', space=vmem, size = 0x1000, scoped, tag = 'scratch operand']
  %s0 = inlined_call_operand.vmem [shape: bf16[8,48], index: 0, kind: input, shape index: {}]
  %s1 = inlined_call_operand.vmem [shape: bf16[48,16], index: 1, kind: input, shape index: {}]
  %s2 = inlined_call_operand.vmem [shape: f32[1,16], index: 2, kind: input, shape index: {}]
  %s3 = inlined_call_operand.vmem [shape: f32[8,16], index: 3, kind: output, shape index: {0}]
  %s4 = inlined_call_operand.vmem [shape: f32[1,16], index: 4, kind: output, shape index: {1}]
  %s5 = inlined_call_operand.vmem [shape: f32[1,16], index: 5, kind: output, shape index: {2}]
  %6 = xla_tuple %s3, %s4, %s5
  %s7 = sld [smem:[#allocation0]]
  $region46: #{vaenet_forward.37} parent=0
    _
  %s9 = ssub.s32 1, %s7
  %s10 = scalar_select 0, %s9, %s7
  // Predicated region
  $region2: #{vaenet_forward.37} parent=0 // pred_check
    _
  $region3: #{vaenet_forward.37} parent=0 // pred_check_branch
    %12 = sbr.rel (0) target = $region5
  $region4: #{vaenet_forward.37} parent=0 // pred_region
    _
  $region5: #{vaenet_forward.37} parent=0 // pred_fallthru
    _
  // Predicated region
  $region6: #{vaenet_forward.37} parent=0 // pred_check
    _
  $region7: #{vaenet_forward.37} parent=0 // pred_check_branch
    %14 = sbr.rel (0) target = $region9
  $region8: #{vaenet_forward.37} parent=0 // pred_region
    _
  $region9: #{vaenet_forward.37} parent=0 // pred_fallthru
    _
  // Predicated region
  $region10: #{vaenet_forward.37} parent=0 // pred_check
    _
  $region11: #{vaenet_forward.37} parent=0 // pred_check_branch
    %16 = sbr.rel (0) target = $region13
  $region12: #{vaenet_forward.37} parent=0 // pred_region
    _
  $region13: #{vaenet_forward.37} parent=0 // pred_fallthru
    _
  %p18 = scmp.eq.s32.totalorder 0, 0
  // Predicated region
  $region14: #{vaenet_forward.37} parent=0 // pred_check
    %p19 = pneg %p18
  $region15: #{vaenet_forward.37} parent=0 // pred_check_branch
    %21 = sbr.rel (%p19) target = $region17
  $region16: #{vaenet_forward.37} parent=0 // pred_region
    %vm22 = vcmask 130048
    %23 = vst.msk [vmem:[#allocation2] sm:$0xff] %vm22, 0.0
  $region17: #{vaenet_forward.37} parent=0 // pred_fallthru
    _
  %v24 = vld [vmem:[#allocation2] sm:$0xff]
  %v25 = vld [vmem:[%s0] sm:$0xf]
  %v26 = vld [vmem:[%s1] sm:$0xf]
  %v27 = vld [vmem:[%s1 + $0x4] sm:$0xf]
  %v28 = vld [vmem:[%s1 + $0x8] sm:$0xf]
  %v29 = vld [vmem:[%s1 + $0xc] sm:$0xf]
  %v30 = vld [vmem:[%s1 + $0x10] sm:$0xf]
  %v31 = vld [vmem:[%s1 + $0x14] sm:$0xf]
  %v38 = vunpack.c.l.b16 %v26
  %v39 = vunpack.c.l.b16 %v27
  %v40 = vunpack.c.l.b16 %v28
  %v41 = vunpack.c.l.b16 %v29
  %v42 = vunpack.c.l.b16 %v30
  %v43 = vunpack.c.l.b16 %v31
  %v44 = vpack.c.b16 %v39, %v38
  %v45 = vpack.c.b16 %v41, %v40
  %v46 = vpack.c.b16 %v43, %v42
  %vm50 = vcmask 392192
  %v52 = vsel %vm50, %v25, 0
  %54 = vmatprep.subr.bf16.mxu0 0
  %55 = vmatpush1.bf16.msra.mxu0 %v44
  %56 = vmatprep.subr.bf16.mxu0 0
  %57 = vmatpush1.bf16.msra.mxu0 %v45
  %58 = vmatprep.subr.bf16.mxu0 0
  %59 = vmatpush1.bf16.msra.mxu0 %v46
  %60 = vmatprep.subr.bf16.mxu0 0
  %61 = vmatpush1.bf16.msra.mxu0 0
  %62 = vmatprep.subr.bf16.mxu0 0
  %63 = vmatpush1.bf16.msra.mxu0 0
  %64 = vmatprep.subr.bf16.mxu0 0
  %65 = vmatpush1.bf16.msra.mxu0 0
  %66 = vmatprep.subr.bf16.mxu0 0
  %67 = vmatpush1.bf16.msra.mxu0 0
  %68 = vmatprep.subr.bf16.mxu0 0
  %69 = vmatpush1.bf16.msra.mxu0 0
  %70 = vmatprep.subr.bf16.mxu0 0
  %71 = vmatpush1.bf16.msra.mxu0 0
  %72 = vmatprep.subr.bf16.mxu0 0
  %73 = vmatpush1.bf16.msra.mxu0 0
  %74 = vmatprep.subr.bf16.mxu0 0
  %75 = vmatpush1.bf16.msra.mxu0 0
  %76 = vmatprep.subr.bf16.mxu0 0
  %77 = vmatpush1.bf16.msra.mxu0 0
  %78 = vmatprep.subr.bf16.mxu0 0
  %79 = vmatpush1.bf16.msra.mxu0 0
  %80 = vmatprep.subr.bf16.mxu0 0
  %81 = vmatpush1.bf16.msra.mxu0 0
  %82 = vmatprep.subr.bf16.mxu0 0
  %83 = vmatpush1.bf16.msra.mxu0 0
  %84 = vmatprep.subr.bf16.mxu0 0
  %85 = vmatpush1.bf16.msra.mxu0 0
  %86 = vmatprep.mubr.bf16.mxu0 0
  %87 = vmatmul.mubr.bf16.gmra.mrb[0].mxu0 %v52
  %v88 = vpop.f32.mrb[0].mxu0
  %v89 = vadd.f32 0.0, %v88
  %v90 = vpop.f32.mrb[0].mxu0
  %v91 = vpop.f32.mrb[0].mxu0
  %v92 = vpop.f32.mrb[0].mxu0
  %93 = vdwg.mxu0
  %v94 = vadd.f32 %v24, %v89
  %vm95 = vcmask 130048
  %96 = vst.msk [vmem:[#allocation2] sm:$0xff] %vm95, %v94
  // Predicated region
  $region18: #{vaenet_forward.37} parent=0 // pred_check
    %p97 = pneg %p18
  $region19: #{vaenet_forward.37} parent=0 // pred_check_branch
    %99 = sbr.rel (%p97) target = $region21
  $region20: #{vaenet_forward.37} parent=0 // pred_region
    %v100 = vld [vmem:[#allocation2] sm:$0xff]
    %v101 = vld [vmem:[%s2] sm:$0x1]
    %v103 = vlaneseq
    %v104 = vshrl.u32 %v103, 7
    %v105 = vsub.s32 0, %v104
    %v106 = vrot.slane %v101, %v105
    %v108 = vadd.f32 %v100, %v106
    %v109 = vmax.f32 %v108, 0.0
    %110 = vst.msk [vmem:[%s3] sm:$0xff] %vm95, %v109
    %v111 = vsel %vm95, %v109, 0.0
    %v112 = vrot.slane %v111, 4
    %v113 = vadd.f32 %v111, %v112
    %v114 = vrot.slane %v113, 2
    %v115 = vadd.f32 %v113, %v114
    %v116 = vrot.slane %v115, 1
    %v117 = vadd.f32 %v115, %v116
    %v118 = vmul.f32 %v109, %v109
    %v119 = vsel %vm95, %v118, 0.0
    %v120 = vrot.slane %v119, 4
    %v121 = vadd.f32 %v119, %v120
    %v122 = vrot.slane %v121, 2
    %v123 = vadd.f32 %v121, %v122
    %v124 = vrot.slane %v123, 1
    %v125 = vadd.f32 %v123, %v124
    %p126 = scmp.eq.s32.totalorder 0, 0
    %v127 = vld [vmem:[%s4] sm:$0x1]
    %v128 = vadd.f32 %v127, %v117
    %s129 = scalar_select %p126, 1, 0
    %v130 = vstv %s129
    %vm131 = vcmp.eq.s32.totalorder %v130, 1
    %v132 = vsel %vm131, %v117, %v128
    %vm133 = vcmask 122880
    %134 = vst.msk [vmem:[%s4] sm:$0x1] %vm133, %v132
    %v135 = vld [vmem:[%s5] sm:$0x1]
    %v136 = vadd.f32 %v135, %v125
    %v137 = vsel %vm131, %v125, %v136
    %138 = vst.msk [vmem:[%s5] sm:$0x1] %vm133, %v137
  $region21: #{vaenet_forward.37} parent=0 // pred_fallthru
    _
  // Predicated region
  $region22: #{vaenet_forward.37} parent=0 // pred_check
    _
  $region23: #{vaenet_forward.37} parent=0 // pred_check_branch
    %140 = sbr.rel (0) target = $region25
  $region24: #{vaenet_forward.37} parent=0 // pred_region
    _
  $region25: #{vaenet_forward.37} parent=0 // pred_fallthru
    _
  // Predicated region
  $region26: #{vaenet_forward.37} parent=0 // pred_check
    _
  $region27: #{vaenet_forward.37} parent=0 // pred_check_branch
    %142 = sbr.rel (0) target = $region29
  $region28: #{vaenet_forward.37} parent=0 // pred_region
    _
  $region29: #{vaenet_forward.37} parent=0 // pred_fallthru
    _
  // Predicated region
  $region30: #{vaenet_forward.37} parent=0 // pred_check
    _
  $region31: #{vaenet_forward.37} parent=0 // pred_check_branch
    %144 = sbr.rel (0) target = $region33
  $region32: #{vaenet_forward.37} parent=0 // pred_region
    _
  $region33: #{vaenet_forward.37} parent=0 // pred_fallthru
    _
  // Predicated region
  $region34: #{vaenet_forward.37} parent=0 // pred_check
    _
  $region35: #{vaenet_forward.37} parent=0 // pred_check_branch
    %146 = sbr.rel (0) target = $region37
  $region36: #{vaenet_forward.37} parent=0 // pred_region
    _
  $region37: #{vaenet_forward.37} parent=0 // pred_fallthru
    _
  // Predicated region
  $region38: #{vaenet_forward.37} parent=0 // pred_check
    _
  $region39: #{vaenet_forward.37} parent=0 // pred_check_branch
    %148 = sbr.rel (0) target = $region41
  $region40: #{vaenet_forward.37} parent=0 // pred_region
    _
  $region41: #{vaenet_forward.37} parent=0 // pred_fallthru
    _
  // Predicated region
  $region42: #{vaenet_forward.37} parent=0 // pred_check
    _
  $region43: #{vaenet_forward.37} parent=0 // pred_check_branch
    %150 = sbr.rel (0) target = $region45
  $region44: #{vaenet_forward.37} parent=0 // pred_region
    _
  $region45: #{vaenet_forward.37} parent=0 // pred_fallthru
    _

// kernel: vaenet_forward.39
$region0: #{vaenet_forward.39}
  #allocation0 [shape = 'u32[]', space=smem, size = 0x4, offset = 0x4, fixed_abs, tag = 'smem constant byte address 0x4 - core index']
  #allocation1 [shape = 'u32[144,128]{1,0:T(1,128)}', space=vmem, size = 0x12000, scoped, tag = 'internal scratch']
  #allocation2 [shape = 'f32[10,32]{1,0:T(8,128)}', space=vmem, size = 0x2000, scoped, tag = 'scratch operand']
  %s0 = inlined_call_operand.vmem [shape: bf16[10,32], index: 0, kind: input, shape index: {}]
  %s1 = inlined_call_operand.vmem [shape: bf16[32,32], index: 1, kind: input, shape index: {}]
  %s2 = inlined_call_operand.vmem [shape: f32[1,32], index: 2, kind: input, shape index: {}]
  %s3 = inlined_call_operand.vmem [shape: f32[10,32], index: 3, kind: output, shape index: {}]
  %s4 = sld [smem:[#allocation0]]
  $region30: #{vaenet_forward.39} parent=0
    _
  %s6 = ssub.s32 1, %s4
  %s7 = scalar_select 0, %s6, %s4
  // Predicated region
  $region2: #{vaenet_forward.39} parent=0 // pred_check
    _
  $region3: #{vaenet_forward.39} parent=0 // pred_check_branch
    %9 = sbr.rel (0) target = $region5
  $region4: #{vaenet_forward.39} parent=0 // pred_region
    _
  $region5: #{vaenet_forward.39} parent=0 // pred_fallthru
    _
  // Predicated region
  $region6: #{vaenet_forward.39} parent=0 // pred_check
    _
  $region7: #{vaenet_forward.39} parent=0 // pred_check_branch
    %11 = sbr.rel (0) target = $region9
  $region8: #{vaenet_forward.39} parent=0 // pred_region
    _
  $region9: #{vaenet_forward.39} parent=0 // pred_fallthru
    _
  // Predicated region
  $region10: #{vaenet_forward.39} parent=0 // pred_check
    _
  $region11: #{vaenet_forward.39} parent=0 // pred_check_branch
    %13 = sbr.rel (0) target = $region13
  $region12: #{vaenet_forward.39} parent=0 // pred_region
    _
  $region13: #{vaenet_forward.39} parent=0 // pred_fallthru
    _
  %p15 = scmp.eq.s32.totalorder 0, 0
  // Predicated region
  $region14: #{vaenet_forward.39} parent=0 // pred_check
    %p16 = pneg %p15
  $region15: #{vaenet_forward.39} parent=0 // pred_check_branch
    %18 = sbr.rel (%p16) target = $region17
  $region16: #{vaenet_forward.39} parent=0 // pred_region
    %vm19 = vcmask 261120
    %20 = vst.msk [vmem:[#allocation2] sm:$0xff] %vm19, 0.0
    %vm21 = vcmask 254976
    %22 = vst.msk [vmem:[#allocation2 + $0x8] sm:$0x3] %vm21, 0.0
  $region17: #{vaenet_forward.39} parent=0 // pred_fallthru
    _
  %v23 = vld [vmem:[#allocation2] sm:$0xff]
  %v24 = vld [vmem:[#allocation2 + $0x8] sm:$0x3]
  %v25 = vld [vmem:[%s0] sm:$0xf]
  %v26 = vld [vmem:[%s0 + $0x4] sm:$0x1]
  %v27 = vld [vmem:[%s1] sm:$0xf]
  %v28 = vld [vmem:[%s1 + $0x4] sm:$0xf]
  %v29 = vld [vmem:[%s1 + $0x8] sm:$0xf]
  %v30 = vld [vmem:[%s1 + $0xc] sm:$0xf]
  %v33 = vunpack.c.l.b16 %v25
  %v34 = vunpack.c.l.b16 %v26
  %v35 = vpack.c.b16 %v34, %v33
  %v40 = vunpack.c.l.b16 %v27
  %v41 = vunpack.c.l.b16 %v28
  %v42 = vunpack.c.l.b16 %v29
  %v43 = vunpack.c.l.b16 %v30
  %v44 = vpack.c.b16 %v41, %v40
  %v45 = vpack.c.b16 %v43, %v42
  %vm48 = vcmask 261120
  %v50 = vsel %vm48, %v35, 0
  %52 = vmatprep.subr.bf16.mxu0 0
  %53 = vmatpush1.bf16.msra.mxu0 %v44
  %54 = vmatprep.subr.bf16.mxu0 0
  %55 = vmatpush1.bf16.msra.mxu0 %v45
  %56 = vmatprep.subr.bf16.mxu0 0
  %57 = vmatpush1.bf16.msra.mxu0 0
  %58 = vmatprep.subr.bf16.mxu0 0
  %59 = vmatpush1.bf16.msra.mxu0 0
  %60 = vmatprep.subr.bf16.mxu0 0
  %61 = vmatpush1.bf16.msra.mxu0 0
  %62 = vmatprep.subr.bf16.mxu0 0
  %63 = vmatpush1.bf16.msra.mxu0 0
  %64 = vmatprep.subr.bf16.mxu0 0
  %65 = vmatpush1.bf16.msra.mxu0 0
  %66 = vmatprep.subr.bf16.mxu0 0
  %67 = vmatpush1.bf16.msra.mxu0 0
  %68 = vmatprep.subr.bf16.mxu0 0
  %69 = vmatpush1.bf16.msra.mxu0 0
  %70 = vmatprep.subr.bf16.mxu0 0
  %71 = vmatpush1.bf16.msra.mxu0 0
  %72 = vmatprep.subr.bf16.mxu0 0
  %73 = vmatpush1.bf16.msra.mxu0 0
  %74 = vmatprep.subr.bf16.mxu0 0
  %75 = vmatpush1.bf16.msra.mxu0 0
  %76 = vmatprep.subr.bf16.mxu0 0
  %77 = vmatpush1.bf16.msra.mxu0 0
  %78 = vmatprep.subr.bf16.mxu0 0
  %79 = vmatpush1.bf16.msra.mxu0 0
  %80 = vmatprep.subr.bf16.mxu0 0
  %81 = vmatpush1.bf16.msra.mxu0 0
  %82 = vmatprep.subr.bf16.mxu0 0
  %83 = vmatpush1.bf16.msra.mxu0 0
  %84 = vmatprep.mubr.bf16.mxu0 0
  %85 = vmatmul.mubr.bf16.gmra.mrb[0].mxu0 %v50
  %v86 = vpop.f32.mrb[0].mxu0
  %v87 = vadd.f32 0.0, %v86
  %v88 = vpop.f32.mrb[0].mxu0
  %v89 = vpop.f32.mrb[0].mxu0
  %v90 = vadd.f32 0.0, %v89
  %v91 = vpop.f32.mrb[0].mxu0
  %92 = vdwg.mxu0
  %v93 = vadd.f32 %v23, %v87
  %v94 = vadd.f32 %v24, %v90
  %95 = vst.msk [vmem:[#allocation2] sm:$0xff] %vm48, %v93
  %vm96 = vcmask 254976
  %97 = vst.msk [vmem:[#allocation2 + $0x8] sm:$0x3] %vm96, %v94
  // Predicated region
  $region18: #{vaenet_forward.39} parent=0 // pred_check
    %p98 = pneg %p15
  $region19: #{vaenet_forward.39} parent=0 // pred_check_branch
    %100 = sbr.rel (%p98) target = $region21
  $region20: #{vaenet_forward.39} parent=0 // pred_region
    %v101 = vld [vmem:[#allocation2] sm:$0xff]
    %v102 = vld [vmem:[#allocation2 + $0x8] sm:$0x3]
    %v103 = vld [vmem:[%s2] sm:$0x1]
    %v105 = vlaneseq
    %v106 = vshrl.u32 %v105, 7
    %v107 = vsub.s32 0, %v106
    %v108 = vrot.slane %v103, %v107
    %v110 = vadd.f32 %v101, %v108
    %v111 = vadd.f32 %v102, %v108
    %112 = vst.msk [vmem:[%s3] sm:$0xff] %vm48, %v110
    %113 = vst.msk [vmem:[%s3 + $0x8] sm:$0x3] %vm96, %v111
  $region21: #{vaenet_forward.39} parent=0 // pred_fallthru
    _
  // Predicated region
  $region22: #{vaenet_forward.39} parent=0 // pred_check
    _
  $region23: #{vaenet_forward.39} parent=0 // pred_check_branch
    %115 = sbr.rel (0) target = $region25
  $region24: #{vaenet_forward.39} parent=0 // pred_region
    _
  $region25: #{vaenet_forward.39} parent=0 // pred_fallthru
    _
  // Predicated region
  $region26: #{vaenet_forward.39} parent=0 // pred_check
    _
  $region27: #{vaenet_forward.39} parent=0 // pred_check_branch
    %117 = sbr.rel (0) target = $region29
  $region28: #{vaenet_forward.39} parent=0 // pred_region
    _
  $region29: #{vaenet_forward.39} parent=0 // pred_fallthru
    _

// kernel: vaenet_forward.41
$region0: #{vaenet_forward.41}
  #allocation0 [shape = 'u32[]', space=smem, size = 0x4, offset = 0x4, fixed_abs, tag = 'smem constant byte address 0x4 - core index']
  #allocation1 [shape = 'u32[144,128]{1,0:T(1,128)}', space=vmem, size = 0x12000, scoped, tag = 'internal scratch']
  %s0 = inlined_call_operand.vmem [shape: f32[16,8], index: 0, kind: input, shape index: {}]
  %s1 = inlined_call_operand.vmem [shape: f32[1,8], index: 1, kind: input, shape index: {}]
  %s2 = inlined_call_operand.vmem [shape: f32[1,8], index: 2, kind: input, shape index: {}]
  %s3 = inlined_call_operand.vmem [shape: f32[16,8], index: 3, kind: output, shape index: {}]
  %s4 = sld [smem:[#allocation0]]
  $region22: #{vaenet_forward.41} parent=0
    _
  %s6 = ssub.s32 1, %s4
  %s7 = scalar_select 0, %s6, %s4
  // Predicated region
  $region2: #{vaenet_forward.41} parent=0 // pred_check
    _
  $region3: #{vaenet_forward.41} parent=0 // pred_check_branch
    %9 = sbr.rel (0) target = $region5
  $region4: #{vaenet_forward.41} parent=0 // pred_region
    _
  $region5: #{vaenet_forward.41} parent=0 // pred_fallthru
    _
  // Predicated region
  $region6: #{vaenet_forward.41} parent=0 // pred_check
    _
  $region7: #{vaenet_forward.41} parent=0 // pred_check_branch
    %11 = sbr.rel (0) target = $region9
  $region8: #{vaenet_forward.41} parent=0 // pred_region
    _
  $region9: #{vaenet_forward.41} parent=0 // pred_fallthru
    _
  // Predicated region
  $region10: #{vaenet_forward.41} parent=0 // pred_check
    _
  $region11: #{vaenet_forward.41} parent=0 // pred_check_branch
    %13 = sbr.rel (0) target = $region13
  $region12: #{vaenet_forward.41} parent=0 // pred_region
    _
  $region13: #{vaenet_forward.41} parent=0 // pred_fallthru
    _
  %v14 = vld [vmem:[%s1] sm:$0x1]
  %v15 = vmul.f32 %v14, 0.0625
  %v16 = vld [vmem:[%s2] sm:$0x1]
  %v17 = vmul.f32 %v16, 0.0625
  %v18 = vmul.f32 %v15, %v15
  %v19 = vsub.f32 %v17, %v18
  %v20 = vld [vmem:[%s0] sm:$0xff]
  %v21 = vld [vmem:[%s0 + $0x8] sm:$0xff]
  %v23 = vlaneseq
  %v24 = vshrl.u32 %v23, 7
  %v25 = vsub.s32 0, %v24
  %v26 = vrot.slane %v15, %v25
  %v28 = vsub.f32 %v20, %v26
  %v29 = vsub.f32 %v21, %v26
  %v30 = vadd.f32 %v19, 1e-05
  %v31 = vrsqrt.pop %v30
  %v33 = vlaneseq
  %v34 = vshrl.u32 %v33, 7
  %v35 = vsub.s32 0, %v34
  %v36 = vrot.slane %v31, %v35
  %v38 = vmul.f32 %v28, %v36
  %v39 = vmul.f32 %v29, %v36
  %vm40 = vcmask 64512
  %41 = vst.msk [vmem:[%s3] sm:$0xff] %vm40, %v38
  %42 = vst.msk [vmem:[%s3 + $0x8] sm:$0xff] %vm40, %v39
  // Predicated region
  $region14: #{vaenet_forward.41} parent=0 // pred_check
    _
  $region15: #{vaenet_forward.41} parent=0 // pred_check_branch
    %44 = sbr.rel (0) target = $region17
  $region16: #{vaenet_forward.41} parent=0 // pred_region
    _
  $region17: #{vaenet_forward.41} parent=0 // pred_fallthru
    _
  // Predicated region
  $region18: #{vaenet_forward.41} parent=0 // pred_check
    _
  $region19: #{vaenet_forward.41} parent=0 // pred_check_branch
    %46 = sbr.rel (0) target = $region21
  $region20: #{vaenet_forward.41} parent=0 // pred_region
    _
  $region21: #{vaenet_forward.41} parent=0 // pred_fallthru
    _

// kernel: vaenet_forward.40
$region0: #{vaenet_forward.40}
  #allocation0 [shape = 'u32[]', space=smem, size = 0x4, offset = 0x4, fixed_abs, tag = 'smem constant byte address 0x4 - core index']
  #allocation1 [shape = 'u32[144,128]{1,0:T(1,128)}', space=vmem, size = 0x12000, scoped, tag = 'internal scratch']
  #allocation2 [shape = 'f32[16,8]{1,0:T(8,128)}', space=vmem, size = 0x2000, scoped, tag = 'scratch operand']
  %s0 = inlined_call_operand.vmem [shape: bf16[16,48], index: 0, kind: input, shape index: {}]
  %s1 = inlined_call_operand.vmem [shape: bf16[48,8], index: 1, kind: input, shape index: {}]
  %s2 = inlined_call_operand.vmem [shape: f32[1,8], index: 2, kind: input, shape index: {}]
  %s3 = inlined_call_operand.vmem [shape: f32[16,8], index: 3, kind: output, shape index: {0}]
  %s4 = inlined_call_operand.vmem [shape: f32[1,8], index: 4, kind: output, shape index: {1}]
  %s5 = inlined_call_operand.vmem [shape: f32[1,8], index: 5, kind: output, shape index: {2}]
  %6 = xla_tuple %s3, %s4, %s5
  %s7 = sld [smem:[#allocation0]]
  $region46: #{vaenet_forward.40} parent=0
    _
  %s9 = ssub.s32 1, %s7
  %s10 = scalar_select 0, %s9, %s7
  // Predicated region
  $region2: #{vaenet_forward.40} parent=0 // pred_check
    _
  $region3: #{vaenet_forward.40} parent=0 // pred_check_branch
    %12 = sbr.rel (0) target = $region5
  $region4: #{vaenet_forward.40} parent=0 // pred_region
    _
  $region5: #{vaenet_forward.40} parent=0 // pred_fallthru
    _
  // Predicated region
  $region6: #{vaenet_forward.40} parent=0 // pred_check
    _
  $region7: #{vaenet_forward.40} parent=0 // pred_check_branch
    %14 = sbr.rel (0) target = $region9
  $region8: #{vaenet_forward.40} parent=0 // pred_region
    _
  $region9: #{vaenet_forward.40} parent=0 // pred_fallthru
    _
  // Predicated region
  $region10: #{vaenet_forward.40} parent=0 // pred_check
    _
  $region11: #{vaenet_forward.40} parent=0 // pred_check_branch
    %16 = sbr.rel (0) target = $region13
  $region12: #{vaenet_forward.40} parent=0 // pred_region
    _
  $region13: #{vaenet_forward.40} parent=0 // pred_fallthru
    _
  %p18 = scmp.eq.s32.totalorder 0, 0
  // Predicated region
  $region14: #{vaenet_forward.40} parent=0 // pred_check
    %p19 = pneg %p18
  $region15: #{vaenet_forward.40} parent=0 // pred_check_branch
    %21 = sbr.rel (%p19) target = $region17
  $region16: #{vaenet_forward.40} parent=0 // pred_region
    %vm22 = vcmask 64512
    %23 = vst.msk [vmem:[#allocation2] sm:$0xff] %vm22, 0.0
    %24 = vst.msk [vmem:[#allocation2 + $0x8] sm:$0xff] %vm22, 0.0
  $region17: #{vaenet_forward.40} parent=0 // pred_fallthru
    _
  %v25 = vld [vmem:[#allocation2] sm:$0xff]
  %v26 = vld [vmem:[#allocation2 + $0x8] sm:$0xff]
  %v27 = vld [vmem:[%s0] sm:$0xf]
  %v28 = vld [vmem:[%s0 + $0x4] sm:$0xf]
  %v29 = vld [vmem:[%s1] sm:$0xf]
  %v30 = vld [vmem:[%s1 + $0x4] sm:$0xf]
  %v31 = vld [vmem:[%s1 + $0x8] sm:$0xf]
  %v32 = vld [vmem:[%s1 + $0xc] sm:$0xf]
  %v33 = vld [vmem:[%s1 + $0x10] sm:$0xf]
  %v34 = vld [vmem:[%s1 + $0x14] sm:$0xf]
  %v37 = vunpack.c.l.b16 %v27
  %v38 = vunpack.c.l.b16 %v28
  %v39 = vpack.c.b16 %v38, %v37
  %v46 = vunpack.c.l.b16 %v29
  %v47 = vunpack.c.l.b16 %v30
  %v48 = vunpack.c.l.b16 %v31
  %v49 = vunpack.c.l.b16 %v32
  %v50 = vunpack.c.l.b16 %v33
  %v51 = vunpack.c.l.b16 %v34
  %v52 = vpack.c.b16 %v47, %v46
  %v53 = vpack.c.b16 %v49, %v48
  %v54 = vpack.c.b16 %v51, %v50
  %vm58 = vcmask 392192
  %v60 = vsel %vm58, %v39, 0
  %62 = vmatprep.subr.bf16.mxu0 0
  %63 = vmatpush1.bf16.msra.mxu0 %v52
  %64 = vmatprep.subr.bf16.mxu0 0
  %65 = vmatpush1.bf16.msra.mxu0 %v53
  %66 = vmatprep.subr.bf16.mxu0 0
  %67 = vmatpush1.bf16.msra.mxu0 %v54
  %68 = vmatprep.subr.bf16.mxu0 0
  %69 = vmatpush1.bf16.msra.mxu0 0
  %70 = vmatprep.subr.bf16.mxu0 0
  %71 = vmatpush1.bf16.msra.mxu0 0
  %72 = vmatprep.subr.bf16.mxu0 0
  %73 = vmatpush1.bf16.msra.mxu0 0
  %74 = vmatprep.subr.bf16.mxu0 0
  %75 = vmatpush1.bf16.msra.mxu0 0
  %76 = vmatprep.subr.bf16.mxu0 0
  %77 = vmatpush1.bf16.msra.mxu0 0
  %78 = vmatprep.subr.bf16.mxu0 0
  %79 = vmatpush1.bf16.msra.mxu0 0
  %80 = vmatprep.subr.bf16.mxu0 0
  %81 = vmatpush1.bf16.msra.mxu0 0
  %82 = vmatprep.subr.bf16.mxu0 0
  %83 = vmatpush1.bf16.msra.mxu0 0
  %84 = vmatprep.subr.bf16.mxu0 0
  %85 = vmatpush1.bf16.msra.mxu0 0
  %86 = vmatprep.subr.bf16.mxu0 0
  %87 = vmatpush1.bf16.msra.mxu0 0
  %88 = vmatprep.subr.bf16.mxu0 0
  %89 = vmatpush1.bf16.msra.mxu0 0
  %90 = vmatprep.subr.bf16.mxu0 0
  %91 = vmatpush1.bf16.msra.mxu0 0
  %92 = vmatprep.subr.bf16.mxu0 0
  %93 = vmatpush1.bf16.msra.mxu0 0
  %94 = vmatprep.mubr.bf16.mxu0 0
  %95 = vmatmul.mubr.bf16.gmra.mrb[0].mxu0 %v60
  %v96 = vpop.f32.mrb[0].mxu0
  %v97 = vadd.f32 0.0, %v96
  %v98 = vpop.f32.mrb[0].mxu0
  %v99 = vpop.f32.mrb[0].mxu0
  %v100 = vadd.f32 0.0, %v99
  %v101 = vpop.f32.mrb[0].mxu0
  %102 = vdwg.mxu0
  %v103 = vadd.f32 %v25, %v97
  %v104 = vadd.f32 %v26, %v100
  %vm105 = vcmask 64512
  %106 = vst.msk [vmem:[#allocation2] sm:$0xff] %vm105, %v103
  %107 = vst.msk [vmem:[#allocation2 + $0x8] sm:$0xff] %vm105, %v104
  // Predicated region
  $region18: #{vaenet_forward.40} parent=0 // pred_check
    %p108 = pneg %p18
  $region19: #{vaenet_forward.40} parent=0 // pred_check_branch
    %110 = sbr.rel (%p108) target = $region21
  $region20: #{vaenet_forward.40} parent=0 // pred_region
    %v111 = vld [vmem:[#allocation2] sm:$0xff]
    %v112 = vld [vmem:[#allocation2 + $0x8] sm:$0xff]
    %v113 = vld [vmem:[%s2] sm:$0x1]
    %v115 = vlaneseq
    %v116 = vshrl.u32 %v115, 7
    %v117 = vsub.s32 0, %v116
    %v118 = vrot.slane %v113, %v117
    %v120 = vadd.f32 %v111, %v118
    %v121 = vadd.f32 %v112, %v118
    %v122 = vmax.f32 %v120, 0.0
    %v123 = vmax.f32 %v121, 0.0
    %124 = vst.msk [vmem:[%s3] sm:$0xff] %vm105, %v122
    %125 = vst.msk [vmem:[%s3 + $0x8] sm:$0xff] %vm105, %v123
    %v126 = vsel %vm105, %v122, 0.0
    %v127 = vsel %vm105, %v123, 0.0
    %v128 = vadd.f32 %v126, %v127
    %v129 = vrot.slane %v128, 4
    %v130 = vadd.f32 %v128, %v129
    %v131 = vrot.slane %v130, 2
    %v132 = vadd.f32 %v130, %v131
    %v133 = vrot.slane %v132, 1
    %v134 = vadd.f32 %v132, %v133
    %v135 = vmul.f32 %v122, %v122
    %v136 = vmul.f32 %v123, %v123
    %v137 = vsel %vm105, %v135, 0.0
    %v138 = vsel %vm105, %v136, 0.0
    %v139 = vadd.f32 %v137, %v138
    %v140 = vrot.slane %v139, 4
    %v141 = vadd.f32 %v139, %v140
    %v142 = vrot.slane %v141, 2
    %v143 = vadd.f32 %v141, %v142
    %v144 = vrot.slane %v143, 1
    %v145 = vadd.f32 %v143, %v144
    %p146 = scmp.eq.s32.totalorder 0, 0
    %v147 = vld [vmem:[%s4] sm:$0x1]
    %v148 = vadd.f32 %v147, %v134
    %s149 = scalar_select %p146, 1, 0
    %v150 = vstv %s149
    %vm151 = vcmp.eq.s32.totalorder %v150, 1
    %v152 = vsel %vm151, %v134, %v148
    %vm153 = vcmask 57344
    %154 = vst.msk [vmem:[%s4] sm:$0x1] %vm153, %v152
    %v155 = vld [vmem:[%s5] sm:$0x1]
    %v156 = vadd.f32 %v155, %v145
    %v157 = vsel %vm151, %v145, %v156
    %158 = vst.msk [vmem:[%s5] sm:$0x1] %vm153, %v157
  $region21: #{vaenet_forward.40} parent=0 // pred_fallthru
    _
  // Predicated region
  $region22: #{vaenet_forward.40} parent=0 // pred_check
    _
  $region23: #{vaenet_forward.40} parent=0 // pred_check_branch
    %160 = sbr.rel (0) target = $region25
  $region24: #{vaenet_forward.40} parent=0 // pred_region
    _
  $region25: #{vaenet_forward.40} parent=0 // pred_fallthru
    _
  // Predicated region
  $region26: #{vaenet_forward.40} parent=0 // pred_check
    _
  $region27: #{vaenet_forward.40} parent=0 // pred_check_branch
    %162 = sbr.rel (0) target = $region29
  $region28: #{vaenet_forward.40} parent=0 // pred_region
    _
  $region29: #{vaenet_forward.40} parent=0 // pred_fallthru
    _
  // Predicated region
  $region30: #{vaenet_forward.40} parent=0 // pred_check
    _
  $region31: #{vaenet_forward.40} parent=0 // pred_check_branch
    %164 = sbr.rel (0) target = $region33
  $region32: #{vaenet_forward.40} parent=0 // pred_region
    _
  $region33: #{vaenet_forward.40} parent=0 // pred_fallthru
    _
  // Predicated region
  $region34: #{vaenet_forward.40} parent=0 // pred_check
    _
  $region35: #{vaenet_forward.40} parent=0 // pred_check_branch
    %166 = sbr.rel (0) target = $region37
  $region36: #{vaenet_forward.40} parent=0 // pred_region
    _
  $region37: #{vaenet_forward.40} parent=0 // pred_fallthru
    _
  // Predicated region
  $region38: #{vaenet_forward.40} parent=0 // pred_check
    _
  $region39: #{vaenet_forward.40} parent=0 // pred_check_branch
    %168 = sbr.rel (0) target = $region41
  $region40: #{vaenet_forward.40} parent=0 // pred_region
    _
  $region41: #{vaenet_forward.40} parent=0 // pred_fallthru
    _
  // Predicated region
  $region42: #{vaenet_forward.40} parent=0 // pred_check
    _
  $region43: #{vaenet_forward.40} parent=0 // pred_check_branch
    %170 = sbr.rel (0) target = $region45
  $region44: #{vaenet_forward.40} parent=0 // pred_region
    _
  $region45: #{vaenet_forward.40} parent=0 // pred_fallthru
    _

// kernel: vaenet_forward.42
$region0: #{vaenet_forward.42}
  #allocation0 [shape = 'u32[]', space=smem, size = 0x4, offset = 0x4, fixed_abs, tag = 'smem constant byte address 0x4 - core index']
  #allocation1 [shape = 'u32[144,128]{1,0:T(1,128)}', space=vmem, size = 0x12000, scoped, tag = 'internal scratch']
  #allocation2 [shape = 'f32[16,8]{1,0:T(8,128)}', space=vmem, size = 0x2000, scoped, tag = 'scratch operand']
  %s0 = inlined_call_operand.vmem [shape: bf16[16,24], index: 0, kind: input, shape index: {}]
  %s1 = inlined_call_operand.vmem [shape: bf16[24,8], index: 1, kind: input, shape index: {}]
  %s2 = inlined_call_operand.vmem [shape: f32[1,8], index: 2, kind: input, shape index: {}]
  %s3 = inlined_call_operand.vmem [shape: f32[16,8], index: 3, kind: output, shape index: {0}]
  %s4 = inlined_call_operand.vmem [shape: f32[1,8], index: 4, kind: output, shape index: {1}]
  %s5 = inlined_call_operand.vmem [shape: f32[1,8], index: 5, kind: output, shape index: {2}]
  %6 = xla_tuple %s3, %s4, %s5
  %s7 = sld [smem:[#allocation0]]
  $region46: #{vaenet_forward.42} parent=0
    _
  %s9 = ssub.s32 1, %s7
  %s10 = scalar_select 0, %s9, %s7
  // Predicated region
  $region2: #{vaenet_forward.42} parent=0 // pred_check
    _
  $region3: #{vaenet_forward.42} parent=0 // pred_check_branch
    %12 = sbr.rel (0) target = $region5
  $region4: #{vaenet_forward.42} parent=0 // pred_region
    _
  $region5: #{vaenet_forward.42} parent=0 // pred_fallthru
    _
  // Predicated region
  $region6: #{vaenet_forward.42} parent=0 // pred_check
    _
  $region7: #{vaenet_forward.42} parent=0 // pred_check_branch
    %14 = sbr.rel (0) target = $region9
  $region8: #{vaenet_forward.42} parent=0 // pred_region
    _
  $region9: #{vaenet_forward.42} parent=0 // pred_fallthru
    _
  // Predicated region
  $region10: #{vaenet_forward.42} parent=0 // pred_check
    _
  $region11: #{vaenet_forward.42} parent=0 // pred_check_branch
    %16 = sbr.rel (0) target = $region13
  $region12: #{vaenet_forward.42} parent=0 // pred_region
    _
  $region13: #{vaenet_forward.42} parent=0 // pred_fallthru
    _
  %p18 = scmp.eq.s32.totalorder 0, 0
  // Predicated region
  $region14: #{vaenet_forward.42} parent=0 // pred_check
    %p19 = pneg %p18
  $region15: #{vaenet_forward.42} parent=0 // pred_check_branch
    %21 = sbr.rel (%p19) target = $region17
  $region16: #{vaenet_forward.42} parent=0 // pred_region
    %vm22 = vcmask 64512
    %23 = vst.msk [vmem:[#allocation2] sm:$0xff] %vm22, 0.0
    %24 = vst.msk [vmem:[#allocation2 + $0x8] sm:$0xff] %vm22, 0.0
  $region17: #{vaenet_forward.42} parent=0 // pred_fallthru
    _
  %v25 = vld [vmem:[#allocation2] sm:$0xff]
  %v26 = vld [vmem:[#allocation2 + $0x8] sm:$0xff]
  %v27 = vld [vmem:[%s0] sm:$0xf]
  %v28 = vld [vmem:[%s0 + $0x4] sm:$0xf]
  %v29 = vld [vmem:[%s1] sm:$0xf]
  %v30 = vld [vmem:[%s1 + $0x4] sm:$0xf]
  %v31 = vld [vmem:[%s1 + $0x8] sm:$0xf]
  %v34 = vunpack.c.l.b16 %v27
  %v35 = vunpack.c.l.b16 %v28
  %v36 = vpack.c.b16 %v35, %v34
  %v40 = vunpack.c.l.b16 %v29
  %v41 = vunpack.c.l.b16 %v30
  %v42 = vunpack.c.l.b16 %v31
  %v43 = vpack.c.b16 %v41, %v40
  %v44 = vpack.c.b16 %v42, %v42
  %vm46 = vcmask 195584
  %v48 = vsel %vm46, %v36, 0
  %vm50 = vcmask 1043456
  %v52 = vsel %vm50, %v44, 0
  %54 = vmatprep.subr.bf16.mxu0 0
  %55 = vmatpush1.bf16.msra.mxu0 %v43
  %56 = vmatprep.subr.bf16.mxu0 0
  %57 = vmatpush1.bf16.msra.mxu0 %v52
  %58 = vmatprep.subr.bf16.mxu0 0
  %59 = vmatpush1.bf16.msra.mxu0 0
  %60 = vmatprep.subr.bf16.mxu0 0
  %61 = vmatpush1.bf16.msra.mxu0 0
  %62 = vmatprep.subr.bf16.mxu0 0
  %63 = vmatpush1.bf16.msra.mxu0 0
  %64 = vmatprep.subr.bf16.mxu0 0
  %65 = vmatpush1.bf16.msra.mxu0 0
  %66 = vmatprep.subr.bf16.mxu0 0
  %67 = vmatpush1.bf16.msra.mxu0 0
  %68 = vmatprep.subr.bf16.mxu0 0
  %69 = vmatpush1.bf16.msra.mxu0 0
  %70 = vmatprep.subr.bf16.mxu0 0
  %71 = vmatpush1.bf16.msra.mxu0 0
  %72 = vmatprep.subr.bf16.mxu0 0
  %73 = vmatpush1.bf16.msra.mxu0 0
  %74 = vmatprep.subr.bf16.mxu0 0
  %75 = vmatpush1.bf16.msra.mxu0 0
  %76 = vmatprep.subr.bf16.mxu0 0
  %77 = vmatpush1.bf16.msra.mxu0 0
  %78 = vmatprep.subr.bf16.mxu0 0
  %79 = vmatpush1.bf16.msra.mxu0 0
  %80 = vmatprep.subr.bf16.mxu0 0
  %81 = vmatpush1.bf16.msra.mxu0 0
  %82 = vmatprep.subr.bf16.mxu0 0
  %83 = vmatpush1.bf16.msra.mxu0 0
  %84 = vmatprep.subr.bf16.mxu0 0
  %85 = vmatpush1.bf16.msra.mxu0 0
  %86 = vmatprep.mubr.bf16.mxu0 0
  %87 = vmatmul.mubr.bf16.gmra.mrb[0].mxu0 %v48
  %v88 = vpop.f32.mrb[0].mxu0
  %v89 = vadd.f32 0.0, %v88
  %v90 = vpop.f32.mrb[0].mxu0
  %v91 = vpop.f32.mrb[0].mxu0
  %v92 = vadd.f32 0.0, %v91
  %v93 = vpop.f32.mrb[0].mxu0
  %94 = vdwg.mxu0
  %v95 = vadd.f32 %v25, %v89
  %v96 = vadd.f32 %v26, %v92
  %vm97 = vcmask 64512
  %98 = vst.msk [vmem:[#allocation2] sm:$0xff] %vm97, %v95
  %99 = vst.msk [vmem:[#allocation2 + $0x8] sm:$0xff] %vm97, %v96
  // Predicated region
  $region18: #{vaenet_forward.42} parent=0 // pred_check
    %p100 = pneg %p18
  $region19: #{vaenet_forward.42} parent=0 // pred_check_branch
    %102 = sbr.rel (%p100) target = $region21
  $region20: #{vaenet_forward.42} parent=0 // pred_region
    %v103 = vld [vmem:[#allocation2] sm:$0xff]
    %v104 = vld [vmem:[#allocation2 + $0x8] sm:$0xff]
    %v105 = vld [vmem:[%s2] sm:$0x1]
    %v107 = vlaneseq
    %v108 = vshrl.u32 %v107, 7
    %v109 = vsub.s32 0, %v108
    %v110 = vrot.slane %v105, %v109
    %v112 = vadd.f32 %v103, %v110
    %v113 = vadd.f32 %v104, %v110
    %v114 = vmax.f32 %v112, 0.0
    %v115 = vmax.f32 %v113, 0.0
    %116 = vst.msk [vmem:[%s3] sm:$0xff] %vm97, %v114
    %117 = vst.msk [vmem:[%s3 + $0x8] sm:$0xff] %vm97, %v115
    %v118 = vsel %vm97, %v114, 0.0
    %v119 = vsel %vm97, %v115, 0.0
    %v120 = vadd.f32 %v118, %v119
    %v121 = vrot.slane %v120, 4
    %v122 = vadd.f32 %v120, %v121
    %v123 = vrot.slane %v122, 2
    %v124 = vadd.f32 %v122, %v123
    %v125 = vrot.slane %v124, 1
    %v126 = vadd.f32 %v124, %v125
    %v127 = vmul.f32 %v114, %v114
    %v128 = vmul.f32 %v115, %v115
    %v129 = vsel %vm97, %v127, 0.0
    %v130 = vsel %vm97, %v128, 0.0
    %v131 = vadd.f32 %v129, %v130
    %v132 = vrot.slane %v131, 4
    %v133 = vadd.f32 %v131, %v132
    %v134 = vrot.slane %v133, 2
    %v135 = vadd.f32 %v133, %v134
    %v136 = vrot.slane %v135, 1
    %v137 = vadd.f32 %v135, %v136
    %p138 = scmp.eq.s32.totalorder 0, 0
    %v139 = vld [vmem:[%s4] sm:$0x1]
    %v140 = vadd.f32 %v139, %v126
    %s141 = scalar_select %p138, 1, 0
    %v142 = vstv %s141
    %vm143 = vcmp.eq.s32.totalorder %v142, 1
    %v144 = vsel %vm143, %v126, %v140
    %vm145 = vcmask 57344
    %146 = vst.msk [vmem:[%s4] sm:$0x1] %vm145, %v144
    %v147 = vld [vmem:[%s5] sm:$0x1]
    %v148 = vadd.f32 %v147, %v137
    %v149 = vsel %vm143, %v137, %v148
    %150 = vst.msk [vmem:[%s5] sm:$0x1] %vm145, %v149
  $region21: #{vaenet_forward.42} parent=0 // pred_fallthru
    _
  // Predicated region
  $region22: #{vaenet_forward.42} parent=0 // pred_check
    _
  $region23: #{vaenet_forward.42} parent=0 // pred_check_branch
    %152 = sbr.rel (0) target = $region25
  $region24: #{vaenet_forward.42} parent=0 // pred_region
    _
  $region25: #{vaenet_forward.42} parent=0 // pred_fallthru
    _
  // Predicated region
  $region26: #{vaenet_forward.42} parent=0 // pred_check
    _
  $region27: #{vaenet_forward.42} parent=0 // pred_check_branch
    %154 = sbr.rel (0) target = $region29
  $region28: #{vaenet_forward.42} parent=0 // pred_region
    _
  $region29: #{vaenet_forward.42} parent=0 // pred_fallthru
    _
  // Predicated region
  $region30: #{vaenet_forward.42} parent=0 // pred_check
    _
  $region31: #{vaenet_forward.42} parent=0 // pred_check_branch
    %156 = sbr.rel (0) target = $region33
  $region32: #{vaenet_forward.42} parent=0 // pred_region
    _
  $region33: #{vaenet_forward.42} parent=0 // pred_fallthru
    _
  // Predicated region
  $region34: #{vaenet_forward.42} parent=0 // pred_check
    _
  $region35: #{vaenet_forward.42} parent=0 // pred_check_branch
    %158 = sbr.rel (0) target = $region37
  $region36: #{vaenet_forward.42} parent=0 // pred_region
    _
  $region37: #{vaenet_forward.42} parent=0 // pred_fallthru
    _
  // Predicated region
  $region38: #{vaenet_forward.42} parent=0 // pred_check
    _
  $region39: #{vaenet_forward.42} parent=0 // pred_check_branch
    %160 = sbr.rel (0) target = $region41
  $region40: #{vaenet_forward.42} parent=0 // pred_region
    _
  $region41: #{vaenet_forward.42} parent=0 // pred_fallthru
    _
  // Predicated region
  $region42: #{vaenet_forward.42} parent=0 // pred_check
    _
  $region43: #{vaenet_forward.42} parent=0 // pred_check_branch
    %162 = sbr.rel (0) target = $region45
  $region44: #{vaenet_forward.42} parent=0 // pred_region
    _
  $region45: #{vaenet_forward.42} parent=0 // pred_fallthru
    _

// kernel: vaenet_forward.44
$region0: #{vaenet_forward.44}
  #allocation0 [shape = 'u32[]', space=smem, size = 0x4, offset = 0x4, fixed_abs, tag = 'smem constant byte address 0x4 - core index']
  #allocation1 [shape = 'u32[144,128]{1,0:T(1,128)}', space=vmem, size = 0x12000, scoped, tag = 'internal scratch']
  #allocation2 [shape = 'f32[18,16]{1,0:T(8,128)}', space=vmem, size = 0x3000, scoped, tag = 'scratch operand']
  %s0 = inlined_call_operand.vmem [shape: bf16[18,16], index: 0, kind: input, shape index: {}]
  %s1 = inlined_call_operand.vmem [shape: bf16[16,16], index: 1, kind: input, shape index: {}]
  %s2 = inlined_call_operand.vmem [shape: f32[1,16], index: 2, kind: input, shape index: {}]
  %s3 = inlined_call_operand.vmem [shape: f32[18,16], index: 3, kind: output, shape index: {}]
  %s4 = sld [smem:[#allocation0]]
  $region30: #{vaenet_forward.44} parent=0
    _
  %s6 = ssub.s32 1, %s4
  %s7 = scalar_select 0, %s6, %s4
  // Predicated region
  $region2: #{vaenet_forward.44} parent=0 // pred_check
    _
  $region3: #{vaenet_forward.44} parent=0 // pred_check_branch
    %9 = sbr.rel (0) target = $region5
  $region4: #{vaenet_forward.44} parent=0 // pred_region
    _
  $region5: #{vaenet_forward.44} parent=0 // pred_fallthru
    _
  // Predicated region
  $region6: #{vaenet_forward.44} parent=0 // pred_check
    _
  $region7: #{vaenet_forward.44} parent=0 // pred_check_branch
    %11 = sbr.rel (0) target = $region9
  $region8: #{vaenet_forward.44} parent=0 // pred_region
    _
  $region9: #{vaenet_forward.44} parent=0 // pred_fallthru
    _
  // Predicated region
  $region10: #{vaenet_forward.44} parent=0 // pred_check
    _
  $region11: #{vaenet_forward.44} parent=0 // pred_check_branch
    %13 = sbr.rel (0) target = $region13
  $region12: #{vaenet_forward.44} parent=0 // pred_region
    _
  $region13: #{vaenet_forward.44} parent=0 // pred_fallthru
    _
  %p15 = scmp.eq.s32.totalorder 0, 0
  // Predicated region
  $region14: #{vaenet_forward.44} parent=0 // pred_check
    %p16 = pneg %p15
  $region15: #{vaenet_forward.44} parent=0 // pred_check_branch
    %18 = sbr.rel (%p16) target = $region17
  $region16: #{vaenet_forward.44} parent=0 // pred_region
    %vm19 = vcmask 130048
    %20 = vst.msk [vmem:[#allocation2] sm:$0xff] %vm19, 0.0
    %21 = vst.msk [vmem:[#allocation2 + $0x8] sm:$0xff] %vm19, 0.0
    %vm22 = vcmask 123904
    %23 = vst.msk [vmem:[#allocation2 + $0x10] sm:$0x3] %vm22, 0.0
  $region17: #{vaenet_forward.44} parent=0 // pred_fallthru
    _
  %v24 = vld [vmem:[#allocation2] sm:$0xff]
  %v25 = vld [vmem:[#allocation2 + $0x8] sm:$0xff]
  %v26 = vld [vmem:[#allocation2 + $0x10] sm:$0x3]
  %v27 = vld [vmem:[%s0] sm:$0xf]
  %v28 = vld [vmem:[%s0 + $0x4] sm:$0xf]
  %v29 = vld [vmem:[%s0 + $0x8] sm:$0x1]
  %v30 = vld [vmem:[%s1] sm:$0xf]
  %v31 = vld [vmem:[%s1 + $0x4] sm:$0xf]
  %v35 = vunpack.c.l.b16 %v27
  %v36 = vunpack.c.l.b16 %v28
  %v37 = vunpack.c.l.b16 %v29
  %v38 = vpack.c.b16 %v36, %v35
  %v39 = vpack.c.b16 %v37, %v37
  %v42 = vunpack.c.l.b16 %v30
  %v43 = vunpack.c.l.b16 %v31
  %v44 = vpack.c.b16 %v43, %v42
  %vm46 = vcmask 130048
  %v48 = vsel %vm46, %v38, 0
  %v51 = vsel %vm46, %v39, 0
  %53 = vmatprep.subr.bf16.mxu0 0
  %54 = vmatpush1.bf16.msra.mxu0 %v44
  %55 = vmatprep.subr.bf16.mxu0 0
  %56 = vmatpush1.bf16.msra.mxu0 0
  %57 = vmatprep.subr.bf16.mxu0 0
  %58 = vmatpush1.bf16.msra.mxu0 0
  %59 = vmatprep.subr.bf16.mxu0 0
  %60 = vmatpush1.bf16.msra.mxu0 0
  %61 = vmatprep.subr.bf16.mxu0 0
  %62 = vmatpush1.bf16.msra.mxu0 0
  %63 = vmatprep.subr.bf16.mxu0 0
  %64 = vmatpush1.bf16.msra.mxu0 0
  %65 = vmatprep.subr.bf16.mxu0 0
  %66 = vmatpush1.bf16.msra.mxu0 0
  %67 = vmatprep.subr.bf16.mxu0 0
  %68 = vmatpush1.bf16.msra.mxu0 0
  %69 = vmatprep.subr.bf16.mxu0 0
  %70 = vmatpush1.bf16.msra.mxu0 0
  %71 = vmatprep.subr.bf16.mxu0 0
  %72 = vmatpush1.bf16.msra.mxu0 0
  %73 = vmatprep.subr.bf16.mxu0 0
  %74 = vmatpush1.bf16.msra.mxu0 0
  %75 = vmatprep.subr.bf16.mxu0 0
  %76 = vmatpush1.bf16.msra.mxu0 0
  %77 = vmatprep.subr.bf16.mxu0 0
  %78 = vmatpush1.bf16.msra.mxu0 0
  %79 = vmatprep.subr.bf16.mxu0 0
  %80 = vmatpush1.bf16.msra.mxu0 0
  %81 = vmatprep.subr.bf16.mxu0 0
  %82 = vmatpush1.bf16.msra.mxu0 0
  %83 = vmatprep.subr.bf16.mxu0 0
  %84 = vmatpush1.bf16.msra.mxu0 0
  %85 = vmatprep.mubr.bf16.mxu0 0
  %86 = vmatmul.mubr.bf16.gmra.mrb[0].mxu0 %v48
  %v87 = vpop.f32.mrb[0].mxu0
  %v88 = vadd.f32 0.0, %v87
  %v89 = vpop.f32.mrb[0].mxu0
  %v90 = vpop.f32.mrb[0].mxu0
  %v91 = vadd.f32 0.0, %v90
  %v92 = vpop.f32.mrb[0].mxu0
  %93 = vmatprep.mubr.bf16.mxu0 0
  %94 = vmatmul.mubr.bf16.gmra.mrb[0].mxu0 %v51
  %v95 = vpop.f32.mrb[0].mxu0
  %v96 = vadd.f32 0.0, %v95
  %v97 = vpop.f32.mrb[0].mxu0
  %v98 = vpop.f32.mrb[0].mxu0
  %v99 = vpop.f32.mrb[0].mxu0
  %100 = vdwg.mxu0
  %v101 = vadd.f32 %v24, %v88
  %v102 = vadd.f32 %v25, %v91
  %v103 = vadd.f32 %v26, %v96
  %104 = vst.msk [vmem:[#allocation2] sm:$0xff] %vm46, %v101
  %105 = vst.msk [vmem:[#allocation2 + $0x8] sm:$0xff] %vm46, %v102
  %vm106 = vcmask 123904
  %107 = vst.msk [vmem:[#allocation2 + $0x10] sm:$0x3] %vm106, %v103
  // Predicated region
  $region18: #{vaenet_forward.44} parent=0 // pred_check
    %p108 = pneg %p15
  $region19: #{vaenet_forward.44} parent=0 // pred_check_branch
    %110 = sbr.rel (%p108) target = $region21
  $region20: #{vaenet_forward.44} parent=0 // pred_region
    %v111 = vld [vmem:[#allocation2] sm:$0xff]
    %v112 = vld [vmem:[#allocation2 + $0x8] sm:$0xff]
    %v113 = vld [vmem:[#allocation2 + $0x10] sm:$0x3]
    %v114 = vld [vmem:[%s2] sm:$0x1]
    %v116 = vlaneseq
    %v117 = vshrl.u32 %v116, 7
    %v118 = vsub.s32 0, %v117
    %v119 = vrot.slane %v114, %v118
    %v121 = vadd.f32 %v111, %v119
    %v122 = vadd.f32 %v112, %v119
    %v123 = vadd.f32 %v113, %v119
    %124 = vst.msk [vmem:[%s3] sm:$0xff] %vm46, %v121
    %125 = vst.msk [vmem:[%s3 + $0x8] sm:$0xff] %vm46, %v122
    %126 = vst.msk [vmem:[%s3 + $0x10] sm:$0x3] %vm106, %v123
  $region21: #{vaenet_forward.44} parent=0 // pred_fallthru
    _
  // Predicated region
  $region22: #{vaenet_forward.44} parent=0 // pred_check
    _
  $region23: #{vaenet_forward.44} parent=0 // pred_check_branch
    %128 = sbr.rel (0) target = $region25
  $region24: #{vaenet_forward.44} parent=0 // pred_region
    _
  $region25: #{vaenet_forward.44} parent=0 // pred_fallthru
    _
  // Predicated region
  $region26: #{vaenet_forward.44} parent=0 // pred_check
    _
  $region27: #{vaenet_forward.44} parent=0 // pred_check_branch
    %130 = sbr.rel (0) target = $region29
  $region28: #{vaenet_forward.44} parent=0 // pred_region
    _
  $region29: #{vaenet_forward.44} parent=0 // pred_fallthru
    _

// kernel: vaenet_forward.45
$region0: #{vaenet_forward.45}
  #allocation0 [shape = 'u32[]', space=smem, size = 0x4, offset = 0x4, fixed_abs, tag = 'smem constant byte address 0x4 - core index']
  #allocation1 [shape = 'u32[144,128]{1,0:T(1,128)}', space=vmem, size = 0x12000, scoped, tag = 'internal scratch']
  #allocation2 [shape = 'f32[32,128]{1,0:T(8,128)}', space=vmem, size = 0x4000, scoped, tag = 'scratch operand']
  %s0 = inlined_call_operand.vmem [shape: bf16[32,8], index: 0, kind: input, shape index: {}]
  %s1 = inlined_call_operand.vmem [shape: bf16[8,128], index: 1, kind: input, shape index: {}]
  %s2 = inlined_call_operand.vmem [shape: f32[1,128], index: 2, kind: input, shape index: {}]
  %s3 = inlined_call_operand.vmem [shape: f32[32,128], index: 3, kind: output, shape index: {}]
  %s4 = sld [smem:[#allocation0]]
  $region30: #{vaenet_forward.45} parent=0
    _
  %s6 = ssub.s32 1, %s4
  %s7 = scalar_select 0, %s6, %s4
  // Predicated region
  $region2: #{vaenet_forward.45} parent=0 // pred_check
    _
  $region3: #{vaenet_forward.45} parent=0 // pred_check_branch
    %9 = sbr.rel (0) target = $region5
  $region4: #{vaenet_forward.45} parent=0 // pred_region
    _
  $region5: #{vaenet_forward.45} parent=0 // pred_fallthru
    _
  // Predicated region
  $region6: #{vaenet_forward.45} parent=0 // pred_check
    _
  $region7: #{vaenet_forward.45} parent=0 // pred_check_branch
    %11 = sbr.rel (0) target = $region9
  $region8: #{vaenet_forward.45} parent=0 // pred_region
    _
  $region9: #{vaenet_forward.45} parent=0 // pred_fallthru
    _
  // Predicated region
  $region10: #{vaenet_forward.45} parent=0 // pred_check
    _
  $region11: #{vaenet_forward.45} parent=0 // pred_check_branch
    %13 = sbr.rel (0) target = $region13
  $region12: #{vaenet_forward.45} parent=0 // pred_region
    _
  $region13: #{vaenet_forward.45} parent=0 // pred_fallthru
    _
  %p15 = scmp.eq.s32.totalorder 0, 0
  // Predicated region
  $region14: #{vaenet_forward.45} parent=0 // pred_check
    %p16 = pneg %p15
  $region15: #{vaenet_forward.45} parent=0 // pred_check_branch
    %18 = sbr.rel (%p16) target = $region17
  $region16: #{vaenet_forward.45} parent=0 // pred_region
    %19 = vst [vmem:[#allocation2] sm:$0xff] 0.0
    %20 = vst [vmem:[#allocation2 + $0x8] sm:$0xff] 0.0
    %21 = vst [vmem:[#allocation2 + $0x10] sm:$0xff] 0.0
    %22 = vst [vmem:[#allocation2 + $0x18] sm:$0xff] 0.0
  $region17: #{vaenet_forward.45} parent=0 // pred_fallthru
    _
  %v23 = vld [vmem:[#allocation2] sm:$0xff]
  %v24 = vld [vmem:[#allocation2 + $0x8] sm:$0xff]
  %v25 = vld [vmem:[#allocation2 + $0x10] sm:$0xff]
  %v26 = vld [vmem:[#allocation2 + $0x18] sm:$0xff]
  %v27 = vld [vmem:[%s0] sm:$0xf]
  %v28 = vld [vmem:[%s0 + $0x4] sm:$0xf]
  %v29 = vld [vmem:[%s0 + $0x8] sm:$0xf]
  %v30 = vld [vmem:[%s0 + $0xc] sm:$0xf]
  %v31 = vld [vmem:[%s1] sm:$0xf]
  %v36 = vunpack.c.l.b16 %v27
  %v37 = vunpack.c.l.b16 %v28
  %v38 = vunpack.c.l.b16 %v29
  %v39 = vunpack.c.l.b16 %v30
  %v40 = vpack.c.b16 %v37, %v36
  %v41 = vpack.c.b16 %v39, %v38
  %vm42 = vcmask 64512
  %v44 = vsel %vm42, %v40, 0
  %v47 = vsel %vm42, %v41, 0
  %vm49 = vcmask 1043456
  %v51 = vsel %vm49, %v31, 0
  %53 = vmatprep.subr.bf16.mxu0 0
  %54 = vmatpush1.bf16.msra.mxu0 %v51
  %55 = vmatprep.subr.bf16.mxu0 0
  %56 = vmatpush1.bf16.msra.mxu0 0
  %57 = vmatprep.subr.bf16.mxu0 0
  %58 = vmatpush1.bf16.msra.mxu0 0
  %59 = vmatprep.subr.bf16.mxu0 0
  %60 = vmatpush1.bf16.msra.mxu0 0
  %61 = vmatprep.subr.bf16.mxu0 0
  %62 = vmatpush1.bf16.msra.mxu0 0
  %63 = vmatprep.subr.bf16.mxu0 0
  %64 = vmatpush1.bf16.msra.mxu0 0
  %65 = vmatprep.subr.bf16.mxu0 0
  %66 = vmatpush1.bf16.msra.mxu0 0
  %67 = vmatprep.subr.bf16.mxu0 0
  %68 = vmatpush1.bf16.msra.mxu0 0
  %69 = vmatprep.subr.bf16.mxu0 0
  %70 = vmatpush1.bf16.msra.mxu0 0
  %71 = vmatprep.subr.bf16.mxu0 0
  %72 = vmatpush1.bf16.msra.mxu0 0
  %73 = vmatprep.subr.bf16.mxu0 0
  %74 = vmatpush1.bf16.msra.mxu0 0
  %75 = vmatprep.subr.bf16.mxu0 0
  %76 = vmatpush1.bf16.msra.mxu0 0
  %77 = vmatprep.subr.bf16.mxu0 0
  %78 = vmatpush1.bf16.msra.mxu0 0
  %79 = vmatprep.subr.bf16.mxu0 0
  %80 = vmatpush1.bf16.msra.mxu0 0
  %81 = vmatprep.subr.bf16.mxu0 0
  %82 = vmatpush1.bf16.msra.mxu0 0
  %83 = vmatprep.subr.bf16.mxu0 0
  %84 = vmatpush1.bf16.msra.mxu0 0
  %85 = vmatprep.mubr.bf16.mxu0 0
  %86 = vmatmul.mubr.bf16.gmra.mrb[0].mxu0 %v44
  %v87 = vpop.f32.mrb[0].mxu0
  %v88 = vadd.f32 0.0, %v87
  %v89 = vpop.f32.mrb[0].mxu0
  %v90 = vpop.f32.mrb[0].mxu0
  %v91 = vadd.f32 0.0, %v90
  %v92 = vpop.f32.mrb[0].mxu0
  %93 = vmatprep.mubr.bf16.mxu0 0
  %94 = vmatmul.mubr.bf16.gmra.mrb[0].mxu0 %v47
  %v95 = vpop.f32.mrb[0].mxu0
  %v96 = vadd.f32 0.0, %v95
  %v97 = vpop.f32.mrb[0].mxu0
  %v98 = vpop.f32.mrb[0].mxu0
  %v99 = vadd.f32 0.0, %v98
  %v100 = vpop.f32.mrb[0].mxu0
  %101 = vdwg.mxu0
  %v102 = vadd.f32 %v23, %v88
  %v103 = vadd.f32 %v24, %v91
  %v104 = vadd.f32 %v25, %v96
  %v105 = vadd.f32 %v26, %v99
  %106 = vst [vmem:[#allocation2] sm:$0xff] %v102
  %107 = vst [vmem:[#allocation2 + $0x8] sm:$0xff] %v103
  %108 = vst [vmem:[#allocation2 + $0x10] sm:$0xff] %v104
  %109 = vst [vmem:[#allocation2 + $0x18] sm:$0xff] %v105
  // Predicated region
  $region18: #{vaenet_forward.45} parent=0 // pred_check
    %p110 = pneg %p15
  $region19: #{vaenet_forward.45} parent=0 // pred_check_branch
    %112 = sbr.rel (%p110) target = $region21
  $region20: #{vaenet_forward.45} parent=0 // pred_region
    %v113 = vld [vmem:[#allocation2] sm:$0xff]
    %v114 = vld [vmem:[#allocation2 + $0x8] sm:$0xff]
    %v115 = vld [vmem:[#allocation2 + $0x10] sm:$0xff]
    %v116 = vld [vmem:[#allocation2 + $0x18] sm:$0xff]
    %v117 = vld [vmem:[%s2] sm:$0x1]
    %v119 = vlaneseq
    %v120 = vshrl.u32 %v119, 7
    %v121 = vsub.s32 0, %v120
    %v122 = vrot.slane %v117, %v121
    %v124 = vadd.f32 %v113, %v122
    %v125 = vadd.f32 %v114, %v122
    %v126 = vadd.f32 %v115, %v122
    %v127 = vadd.f32 %v116, %v122
    %128 = vst [vmem:[%s3] sm:$0xff] %v124
    %129 = vst [vmem:[%s3 + $0x8] sm:$0xff] %v125
    %130 = vst [vmem:[%s3 + $0x10] sm:$0xff] %v126
    %131 = vst [vmem:[%s3 + $0x18] sm:$0xff] %v127
  $region21: #{vaenet_forward.45} parent=0 // pred_fallthru
    _
  // Predicated region
  $region22: #{vaenet_forward.45} parent=0 // pred_check
    _
  $region23: #{vaenet_forward.45} parent=0 // pred_check_branch
    %133 = sbr.rel (0) target = $region25
  $region24: #{vaenet_forward.45} parent=0 // pred_region
    _
  $region25: #{vaenet_forward.45} parent=0 // pred_fallthru
    _
  // Predicated region
  $region26: #{vaenet_forward.45} parent=0 // pred_check
    _
  $region27: #{vaenet_forward.45} parent=0 // pred_check_branch
    %135 = sbr.rel (0) target = $region29
  $region28: #{vaenet_forward.45} parent=0 // pred_region
    _
  $region29: #{vaenet_forward.45} parent=0 // pred_fallthru
    _

</llo_original>
